<compile_context>
chip_gen: v7x
topology: tpu7x:2x2x1
jax: 0.10.0
libtpu: 0.0.40
codegen_flags: <defaults>
</compile_context>

<pallas_src>
import jax
import jax.numpy as jnp
from jax.experimental import pallas as pl
from jax.experimental.pallas import tpu as pltpu


LAYER_NAMES = ("1", "2", "3", "_", "4")


def _make_kernel(bias_offsets):
    """Builds the kernel with static bias offsets baked in (all 128-aligned)."""
    (o1, n1), (o2, n2), (o3, n3), (om, nm), (o4, n4) = bias_offsets

    def kernel(x_ref, w1_ref, w2_ref, w3_ref, wm_ref, w4_ref, b_ref, o_ref):
        def layer(h_bf16, w_ref, b, relu):
            # bf16 x bf16 operands, f32 accumulation on the MXU, f32 bias add.
            acc = jnp.dot(h_bf16, w_ref[...],
                          preferred_element_type=jnp.float32) + b
            if relu:
                return jnp.maximum(acc, 0.0).astype(jnp.bfloat16)
            return acc

        # Static ref slices of the packed bias buffer (views, no runtime cost).
        h = layer(x_ref[...].astype(jnp.bfloat16), w1_ref,
                  b_ref[:, o1:o1 + n1], relu=True)            # fc1 + relu
        h = layer(h, w2_ref, b_ref[:, o2:o2 + n2], relu=True)  # fc2 + relu
        h = layer(h, w3_ref, b_ref[:, o3:o3 + n3], relu=True)  # fc3 + relu
        h = layer(h, wm_ref, b_ref[:, om:om + nm], relu=True)  # fc_ + relu
        logits = layer(h, w4_ref, b_ref[:, o4:o4 + n4], relu=False)  # fc4

        # softmax over dim=0 (batch axis), matching F.softmax(..., dim=0).
        m = jnp.max(logits, axis=0, keepdims=True)
        e = jnp.exp(logits - m)
        o_ref[...] = e / jnp.sum(e, axis=0, keepdims=True)

    return kernel


def prepare_params(params):
    """One-time, outside the serving hot path: cast weights to bf16 and pack
    the five f32 biases into a single buffer. Returns the dict consumed by
    classifier_forward (no per-call convert/concat ops remain)."""
    weights = tuple(params[f"w{n}"].astype(jnp.bfloat16) for n in LAYER_NAMES)
    biases = [params[f"b{n}"] for n in LAYER_NAMES]
    offsets, start = [], 0
    for b in biases:
        n = int(b.shape[1])
        offsets.append((start, n))
        start += n
    bias_packed = jnp.concatenate(biases, axis=1)  # (1, sum(out_dims)) f32
    return {"weights": weights,
            "bias_packed": bias_packed,
            "bias_offsets": tuple(offsets)}


def classifier_forward(x, prepped):
    """x: [B, input_size] float32. prepped: output of prepare_params."""
    weights = prepped["weights"]
    bias_packed = prepped["bias_packed"]
    bias_offsets = prepped["bias_offsets"]

    B, _ = x.shape
    out_size = int(weights[-1].shape[1])

    kernel = _make_kernel(bias_offsets)
    vmem_spec = pl.BlockSpec(memory_space=pltpu.MemorySpace.VMEM)
    args = (x, *weights, bias_packed)

    # Roofline hint derived from the actual shapes.
    flops = 2 * B * sum(int(w.shape[0]) * int(w.shape[1]) for w in weights)
    weight_bytes = sum(int(w.size) * w.dtype.itemsize for w in weights)
    bias_bytes = int(bias_packed.size) * bias_packed.dtype.itemsize
    io_bytes = int(x.size) * x.dtype.itemsize + B * out_size * 4
    cost = pl.CostEstimate(
        flops=flops,
        transcendentals=B * out_size,                 # exp in softmax
        bytes_accessed=weight_bytes + bias_bytes + io_bytes,
    )

    return pl.pallas_call(
        kernel,
        out_shape=jax.ShapeDtypeStruct((B, out_size), jnp.float32),
        in_specs=[vmem_spec] * len(args),
        out_specs=vmem_spec,
        compiler_params=pltpu.CompilerParams(vmem_limit_bytes=16 << 20),
        cost_estimate=cost,
    )(*args)


def init_params(key, input_size, output_size):
    """Deterministic init mimicking PyTorch Linear default (U[-1/sqrt(fan_in), +])."""
    dims = [(input_size, 256), (256, 1024), (1024, 1024), (1024, 256),
            (256, output_size)]
    params = {}
    keys = jax.random.split(key, 2 * len(dims))
    for i, ((fan_in, fan_out), name) in enumerate(zip(dims, LAYER_NAMES)):
        bound = 1.0 / (fan_in ** 0.5)
        params[f"w{name}"] = jax.random.uniform(
            keys[2 * i], (fan_in, fan_out), jnp.float32, -bound, bound)
        params[f"b{name}"] = jax.random.uniform(
            keys[2 * i + 1], (1, fan_out), jnp.float32, -bound, bound)
    return params


def reference_forward(x, params):
    """Same math as the kernel (bf16 operands, f32 accumulate) in plain JAX."""
    h = x.astype(jnp.bfloat16)
    for name in ("1", "2", "3", "_"):
        h = jnp.dot(h, params[f"w{name}"].astype(jnp.bfloat16),
                    preferred_element_type=jnp.float32) + params[f"b{name}"]
        h = jnp.maximum(h, 0.0).astype(jnp.bfloat16)
    logits = jnp.dot(h, params["w4"].astype(jnp.bfloat16),
                     preferred_element_type=jnp.float32) + params["b4"]
    return jax.nn.softmax(logits, axis=0)


if __name__ == "__main__":
    key = jax.random.PRNGKey(0)
    k_x, k_p = jax.random.split(key)

    batch = 8
    input_size = 32
    output_size = 8

    x = jax.random.normal(k_x, (batch, input_size), jnp.float32)
    params = init_params(k_p, input_size, output_size)

    # One-time parameter preparation (bf16 weights, packed biases) — this is
    # the hot-path cast/concat that previously happened on every call.
    prepped = prepare_params(params)

    out = classifier_forward(x, prepped)
    out = jax.block_until_ready(out)

    ref = reference_forward(x, params)

    assert out.shape == (batch, output_size)
    assert jnp.allclose(out, ref, atol=2e-3, rtol=2e-3)
    # dim=0 softmax columns sum to 1 (exact division now, tight tolerance).
    assert jnp.allclose(jnp.sum(out, axis=0), jnp.ones((output_size,)),
                        atol=1e-5)

    print("KERNEL_OK")
</pallas_src>

<mosaic_0001>
module attributes {stable_mosaic.version = 11 : i64} {
  func.func @kernel(%arg0: memref<8x32xf32, #tpu.memory_space<vmem>>, %arg1: memref<32x256xbf16, #tpu.memory_space<vmem>>, %arg2: memref<256x1024xbf16, #tpu.memory_space<vmem>>, %arg3: memref<1024x1024xbf16, #tpu.memory_space<vmem>>, %arg4: memref<1024x256xbf16, #tpu.memory_space<vmem>>, %arg5: memref<256x8xbf16, #tpu.memory_space<vmem>>, %arg6: memref<1x2568xf32, #tpu.memory_space<vmem>>, %arg7: memref<8x8xf32, #tpu.memory_space<vmem>>) attributes {dimension_semantics = [], scalar_prefetch = 0 : i64, scratch_operands = 0 : i64, tpu.core_type = #tpu.core_type<tc>} {
    %c0 = arith.constant 0 : index
    %c0_0 = arith.constant 0 : index
    %0 = vector.load %arg0[%c0, %c0_0] : memref<8x32xf32, #tpu.memory_space<vmem>>, vector<8x32xf32>
    %1 = arith.truncf %0 : vector<8x32xf32> to vector<8x32xbf16>
    %c0_1 = arith.constant 0 : index
    %c0_2 = arith.constant 0 : index
    %2 = vector.load %arg6[%c0_1, %c0_2] : memref<1x2568xf32, #tpu.memory_space<vmem>>, vector<1x256xf32>
    %c0_3 = arith.constant 0 : index
    %c0_4 = arith.constant 0 : index
    %3 = vector.load %arg1[%c0_3, %c0_4] : memref<32x256xbf16, #tpu.memory_space<vmem>>, vector<32x256xbf16>
    %cst = arith.constant dense<0.000000e+00> : vector<8x256xf32>
    %4 = tpu.matmul %1, %3, %cst {dimension_numbers = #tpu.dot_dimension_numbers<[1], [0], [0], [1], [0, 0, 1, 1], [], []>} : vector<8x32xbf16>, vector<32x256xbf16>, vector<8x256xf32> -> vector<8x256xf32>
    %5 = vector.broadcast %2 : vector<1x256xf32> to vector<8x256xf32>
    %6 = arith.addf %4, %5 : vector<8x256xf32>
    %cst_5 = arith.constant 0.000000e+00 : f32
    %7 = vector.broadcast %cst_5 : f32 to vector<8x256xf32>
    %8 = arith.maximumf %6, %7 : vector<8x256xf32>
    %9 = arith.truncf %8 : vector<8x256xf32> to vector<8x256xbf16>
    %c0_6 = arith.constant 0 : index
    %c256 = arith.constant 256 : index
    %10 = vector.load %arg6[%c0_6, %c256] : memref<1x2568xf32, #tpu.memory_space<vmem>>, vector<1x1024xf32>
    %c0_7 = arith.constant 0 : index
    %c0_8 = arith.constant 0 : index
    %11 = vector.load %arg2[%c0_7, %c0_8] : memref<256x1024xbf16, #tpu.memory_space<vmem>>, vector<256x1024xbf16>
    %cst_9 = arith.constant dense<0.000000e+00> : vector<8x1024xf32>
    %12 = tpu.matmul %9, %11, %cst_9 {dimension_numbers = #tpu.dot_dimension_numbers<[1], [0], [0], [1], [0, 0, 1, 1], [], []>} : vector<8x256xbf16>, vector<256x1024xbf16>, vector<8x1024xf32> -> vector<8x1024xf32>
    %13 = vector.broadcast %10 : vector<1x1024xf32> to vector<8x1024xf32>
    %14 = arith.addf %12, %13 : vector<8x1024xf32>
    %cst_10 = arith.constant 0.000000e+00 : f32
    %15 = vector.broadcast %cst_10 : f32 to vector<8x1024xf32>
    %16 = arith.maximumf %14, %15 : vector<8x1024xf32>
    %17 = arith.truncf %16 : vector<8x1024xf32> to vector<8x1024xbf16>
    %c0_11 = arith.constant 0 : index
    %c1280 = arith.constant 1280 : index
    %18 = vector.load %arg6[%c0_11, %c1280] : memref<1x2568xf32, #tpu.memory_space<vmem>>, vector<1x1024xf32>
    %c0_12 = arith.constant 0 : index
    %c0_13 = arith.constant 0 : index
    %19 = vector.load %arg3[%c0_12, %c0_13] : memref<1024x1024xbf16, #tpu.memory_space<vmem>>, vector<1024x1024xbf16>
    %cst_14 = arith.constant dense<0.000000e+00> : vector<8x1024xf32>
    %20 = tpu.matmul %17, %19, %cst_14 {dimension_numbers = #tpu.dot_dimension_numbers<[1], [0], [0], [1], [0, 0, 1, 1], [], []>} : vector<8x1024xbf16>, vector<1024x1024xbf16>, vector<8x1024xf32> -> vector<8x1024xf32>
    %21 = vector.broadcast %18 : vector<1x1024xf32> to vector<8x1024xf32>
    %22 = arith.addf %20, %21 : vector<8x1024xf32>
    %cst_15 = arith.constant 0.000000e+00 : f32
    %23 = vector.broadcast %cst_15 : f32 to vector<8x1024xf32>
    %24 = arith.maximumf %22, %23 : vector<8x1024xf32>
    %25 = arith.truncf %24 : vector<8x1024xf32> to vector<8x1024xbf16>
    %c0_16 = arith.constant 0 : index
    %c2304 = arith.constant 2304 : index
    %26 = vector.load %arg6[%c0_16, %c2304] : memref<1x2568xf32, #tpu.memory_space<vmem>>, vector<1x256xf32>
    %c0_17 = arith.constant 0 : index
    %c0_18 = arith.constant 0 : index
    %27 = vector.load %arg4[%c0_17, %c0_18] : memref<1024x256xbf16, #tpu.memory_space<vmem>>, vector<1024x256xbf16>
    %cst_19 = arith.constant dense<0.000000e+00> : vector<8x256xf32>
    %28 = tpu.matmul %25, %27, %cst_19 {dimension_numbers = #tpu.dot_dimension_numbers<[1], [0], [0], [1], [0, 0, 1, 1], [], []>} : vector<8x1024xbf16>, vector<1024x256xbf16>, vector<8x256xf32> -> vector<8x256xf32>
    %29 = vector.broadcast %26 : vector<1x256xf32> to vector<8x256xf32>
    %30 = arith.addf %28, %29 : vector<8x256xf32>
    %cst_20 = arith.constant 0.000000e+00 : f32
    %31 = vector.broadcast %cst_20 : f32 to vector<8x256xf32>
    %32 = arith.maximumf %30, %31 : vector<8x256xf32>
    %33 = arith.truncf %32 : vector<8x256xf32> to vector<8x256xbf16>
    %c0_21 = arith.constant 0 : index
    %c2560 = arith.constant 2560 : index
    %34 = vector.load %arg6[%c0_21, %c2560] : memref<1x2568xf32, #tpu.memory_space<vmem>>, vector<1x8xf32>
    %c0_22 = arith.constant 0 : index
    %c0_23 = arith.constant 0 : index
    %35 = vector.load %arg5[%c0_22, %c0_23] : memref<256x8xbf16, #tpu.memory_space<vmem>>, vector<256x8xbf16>
    %cst_24 = arith.constant dense<0.000000e+00> : vector<8x8xf32>
    %36 = tpu.matmul %33, %35, %cst_24 {dimension_numbers = #tpu.dot_dimension_numbers<[1], [0], [0], [1], [0, 0, 1, 1], [], []>} : vector<8x256xbf16>, vector<256x8xbf16>, vector<8x8xf32> -> vector<8x8xf32>
    %37 = vector.broadcast %34 : vector<1x8xf32> to vector<8x8xf32>
    %38 = arith.addf %36, %37 : vector<8x8xf32>
    %cst_25 = arith.constant dense<0xFF800000> : vector<8xf32>
    %39 = vector.multi_reduction <maximumf>, %38, %cst_25 [0] : vector<8x8xf32> to vector<8xf32>
    %40 = vector.shape_cast %39 : vector<8xf32> to vector<1x8xf32>
    %41 = vector.broadcast %40 : vector<1x8xf32> to vector<8x8xf32>
    %42 = arith.subf %38, %41 : vector<8x8xf32>
    %43 = math.exp %42 : vector<8x8xf32>
    %cst_26 = arith.constant dense<0.000000e+00> : vector<8xf32>
    %44 = vector.multi_reduction <add>, %43, %cst_26 [0] : vector<8x8xf32> to vector<8xf32>
    %45 = vector.shape_cast %44 : vector<8xf32> to vector<1x8xf32>
    %46 = vector.broadcast %45 : vector<1x8xf32> to vector<8x8xf32>
    %47 = arith.divf %43, %46 : vector<8x8xf32>
    %c0_27 = arith.constant 0 : index
    %c0_28 = arith.constant 0 : index
    %48 = vector.load %arg7[%c0_27, %c0_28] : memref<8x8xf32, #tpu.memory_space<vmem>>, vector<8x8xf32>
    tpu.vector_store %arg7[%c0_27, %c0_28], %47 {strides = array<i32>} : memref<8x8xf32, #tpu.memory_space<vmem>>, vector<8x8xf32>,
    return
  }
}

</mosaic_0001>

<llo_original>
// kernel: tpu_custom_call.1
$region0: #{tpu_custom_call.1}
  #allocation0 [shape = 'u32[]', space=smem, size = 0x4, offset = 0x4, fixed_abs, tag = 'smem constant byte address 0x4 - core index']
  #allocation1 [shape = 'u32[144,128]{1,0:T(1,128)}', space=vmem, size = 0x12000, scoped, tag = 'internal scratch']
  %s0 = inlined_call_operand.hbm [shape: f32[8,32], index: 0, kind: input, shape index: {}]
  %s1 = inlined_call_operand.hbm [shape: bf16[32,256], index: 1, kind: input, shape index: {}]
  %s2 = inlined_call_operand.hbm [shape: bf16[256,1024], index: 2, kind: input, shape index: {}]
  %s3 = inlined_call_operand.hbm [shape: bf16[1024,1024], index: 3, kind: input, shape index: {}]
  %s4 = inlined_call_operand.hbm [shape: bf16[1024,256], index: 4, kind: input, shape index: {}]
  %s5 = inlined_call_operand.vmem [shape: bf16[256,8], index: 5, kind: input, shape index: {}]
  %s6 = inlined_call_operand.hbm [shape: f32[1,2568], index: 6, kind: input, shape index: {}]
  %s7 = inlined_call_operand.hbm [shape: f32[8,8], index: 7, kind: output, shape index: {}]
  %s8 = sld [smem:[#allocation0]]
  $region62: #{tpu_custom_call.1} parent=0
    _
  %s10 = ssub.s32 1, %s8
  %s11 = scalar_select 0, %s10, %s8
  $region1: #{tpu_custom_call.1} parent=0
    #allocation2 [shape = 'u8[4096]{0}', space=vmem, size = 0x1000, scoped, tag = 'input window, operand 0, single buffered']
    #allocation3 [shape = 's32[1]{0}', space=sflag, size = 0x4, scoped, tag = 'scoped memory for tpu_custom_call.1']
    #allocation4 [shape = 's32[1]{0}', space=sflag, size = 0x4, scoped, tag = 'scoped memory for tpu_custom_call.1']
    #allocation5 [shape = 'u8[16384]{0}', space=vmem, size = 0x4000, scoped, tag = 'input window, operand 1, single buffered']
    #allocation6 [shape = 's32[1]{0}', space=sflag, size = 0x4, scoped, tag = 'scoped memory for tpu_custom_call.1']
    #allocation7 [shape = 'u8[524288]{0}', space=vmem, size = 0x80000, scoped, tag = 'input window, operand 2, single buffered']
    #allocation8 [shape = 'u8[2097152]{0}', space=vmem, size = 0x200000, scoped, tag = 'input window, operand 3, single buffered']
    #allocation9 [shape = 's32[1]{0}', space=sflag, size = 0x4, scoped, tag = 'scoped memory for tpu_custom_call.1']
    #allocation10 [shape = 'u8[524288]{0}', space=vmem, size = 0x80000, scoped, tag = 'input window, operand 4, single buffered']
    #allocation11 [shape = 'u8[10752]{0}', space=vmem, size = 0x2c00, scoped, tag = 'input window, operand 6, single buffered']
    #allocation12 [shape = 's32[1]{0}', space=sflag, size = 0x4, scoped, tag = 'scoped memory for tpu_custom_call.1']
    #allocation13 [shape = 'u8[4096]{0}', space=vmem, size = 0x1000, scoped, tag = 'output window, operand 0, single buffered']
    %12 = vsyncpa [#allocation3], 0
    %13 = vsyncpa [#allocation6], 0
    %14 = vsyncpa [#allocation9], 0
    %15 = vsyncpa [#allocation12], 0
    %16 = vsyncpa [#allocation4], 0
    // Predicated region
    $region2: #{tpu_custom_call.1} parent=1 // pred_check
      _
    $region3: #{tpu_custom_call.1} parent=1 // pred_check_branch
      %18 = sbr.rel (0) target = $region5
    $region4: #{tpu_custom_call.1} parent=1 // pred_region
      %s20 = ssub.s32 128, 128
      %21 = vsyncadd [#allocation3], %s20
      %s23 = sshll.u32 [#allocation2], 4
      %s24 = int_to_ptr.vmem [resolvable:$true] %s23
      %26 = dma.hbm_to_vmem [thread:$0]  %s0, 128, %s24, [#allocation3]
    $region5: #{tpu_custom_call.1} parent=1 // pred_fallthru
      _
    // Predicated region
    $region6: #{tpu_custom_call.1} parent=1 // pred_check
      _
    $region7: #{tpu_custom_call.1} parent=1 // pred_check_branch
      %28 = sbr.rel (0) target = $region9
    $region8: #{tpu_custom_call.1} parent=1 // pred_region
      %s30 = ssub.s32 512, 512
      %31 = vsyncadd [#allocation6], %s30
      %s32 = sshll.u32 [#allocation5], 4
      %s33 = int_to_ptr.vmem [resolvable:$true] %s32
      %38 = dma.hbm_to_vmem [thread:$0]  %s1, 512, %s33, [#allocation6], 128, 128, 8
    $region9: #{tpu_custom_call.1} parent=1 // pred_fallthru
      _
    // Predicated region
    $region10: #{tpu_custom_call.1} parent=1 // pred_check
      _
    $region11: #{tpu_custom_call.1} parent=1 // pred_check_branch
      %40 = sbr.rel (0) target = $region13
    $region12: #{tpu_custom_call.1} parent=1 // pred_region
      %s42 = ssub.s32 16384, 16384
      %43 = vsyncadd [#allocation6], %s42
      %s44 = sshll.u32 [#allocation7], 4
      %s45 = int_to_ptr.vmem [resolvable:$true] %s44
      %50 = dma.hbm_to_vmem [thread:$0]  %s2, 16384, %s45, [#allocation6], 512, 512, 32
    $region13: #{tpu_custom_call.1} parent=1 // pred_fallthru
      _
    // Predicated region
    $region14: #{tpu_custom_call.1} parent=1 // pred_check
      _
    $region15: #{tpu_custom_call.1} parent=1 // pred_check_branch
      %52 = sbr.rel (0) target = $region17
    $region16: #{tpu_custom_call.1} parent=1 // pred_region
      %s54 = ssub.s32 65536, 65536
      %55 = vsyncadd [#allocation9], %s54
      %s56 = sshll.u32 [#allocation8], 4
      %s57 = int_to_ptr.vmem [resolvable:$true] %s56
      %62 = dma.hbm_to_vmem [thread:$0]  %s3, 65536, %s57, [#allocation9], 512, 512, 32
    $region17: #{tpu_custom_call.1} parent=1 // pred_fallthru
      _
    // Predicated region
    $region18: #{tpu_custom_call.1} parent=1 // pred_check
      _
    $region19: #{tpu_custom_call.1} parent=1 // pred_check_branch
      %64 = sbr.rel (0) target = $region21
    $region20: #{tpu_custom_call.1} parent=1 // pred_region
      %s66 = ssub.s32 16384, 16384
      %67 = vsyncadd [#allocation9], %s66
      %s68 = sshll.u32 [#allocation10], 4
      %s69 = int_to_ptr.vmem [resolvable:$true] %s68
      %74 = dma.hbm_to_vmem [thread:$0]  %s4, 16384, %s69, [#allocation9], 128, 128, 8
    $region21: #{tpu_custom_call.1} parent=1 // pred_fallthru
      _
    // Predicated region
    $region22: #{tpu_custom_call.1} parent=1 // pred_check
      _
    $region23: #{tpu_custom_call.1} parent=1 // pred_check_branch
      %76 = sbr.rel (0) target = $region25
    $region24: #{tpu_custom_call.1} parent=1 // pred_region
      _
    $region25: #{tpu_custom_call.1} parent=1 // pred_fallthru
      _
    // Predicated region
    $region26: #{tpu_custom_call.1} parent=1 // pred_check
      _
    $region27: #{tpu_custom_call.1} parent=1 // pred_check_branch
      %78 = sbr.rel (0) target = $region29
    $region28: #{tpu_custom_call.1} parent=1 // pred_region
      %s80 = ssub.s32 336, 336
      %81 = vsyncadd [#allocation12], %s80
      %s83 = sshll.u32 [#allocation11], 4
      %s84 = int_to_ptr.vmem [resolvable:$true] %s83
      %86 = dma.hbm_to_vmem [thread:$0]  %s6, 336, %s84, [#allocation12]
    $region29: #{tpu_custom_call.1} parent=1 // pred_fallthru
      _
    // Predicated region
    $region30: #{tpu_custom_call.1} parent=1 // pred_check
      _
    $region31: #{tpu_custom_call.1} parent=1 // pred_check_branch
      %88 = sbr.rel (0) target = $region33
    $region32: #{tpu_custom_call.1} parent=1 // pred_region
      %89 = dma.done [#allocation3], 128
    $region33: #{tpu_custom_call.1} parent=1 // pred_fallthru
      _
    // Predicated region
    $region34: #{tpu_custom_call.1} parent=1 // pred_check
      _
    $region35: #{tpu_custom_call.1} parent=1 // pred_check_branch
      %91 = sbr.rel (0) target = $region37
    $region36: #{tpu_custom_call.1} parent=1 // pred_region
      %92 = dma.done [#allocation6], 512
    $region37: #{tpu_custom_call.1} parent=1 // pred_fallthru
      _
    // Predicated region
    $region38: #{tpu_custom_call.1} parent=1 // pred_check
      _
    $region39: #{tpu_custom_call.1} parent=1 // pred_check_branch
      %94 = sbr.rel (0) target = $region41
    $region40: #{tpu_custom_call.1} parent=1 // pred_region
      %95 = dma.done [#allocation6], 16384
    $region41: #{tpu_custom_call.1} parent=1 // pred_fallthru
      _
    // Predicated region
    $region42: #{tpu_custom_call.1} parent=1 // pred_check
      _
    $region43: #{tpu_custom_call.1} parent=1 // pred_check_branch
      %97 = sbr.rel (0) target = $region45
    $region44: #{tpu_custom_call.1} parent=1 // pred_region
      %98 = dma.done [#allocation9], 65536
    $region45: #{tpu_custom_call.1} parent=1 // pred_fallthru
      _
    // Predicated region
    $region46: #{tpu_custom_call.1} parent=1 // pred_check
      _
    $region47: #{tpu_custom_call.1} parent=1 // pred_check_branch
      %100 = sbr.rel (0) target = $region49
    $region48: #{tpu_custom_call.1} parent=1 // pred_region
      %101 = dma.done [#allocation9], 16384
    $region49: #{tpu_custom_call.1} parent=1 // pred_fallthru
      _
    // Predicated region
    $region50: #{tpu_custom_call.1} parent=1 // pred_check
      _
    $region51: #{tpu_custom_call.1} parent=1 // pred_check_branch
      %103 = sbr.rel (0) target = $region53
    $region52: #{tpu_custom_call.1} parent=1 // pred_region
      %104 = dma.done [#allocation12], 336
    $region53: #{tpu_custom_call.1} parent=1 // pred_fallthru
      _
    %v106 = vld [vmem:[#allocation2] sm:$0xff]
    %v107 = vpack.c.bf16 %v106, %v106
    %v108 = vld [vmem:[#allocation11] sm:$0x3]
    %v109 = vld [vmem:[#allocation5] sm:$0xff]
    %v110 = vld [vmem:[#allocation5 + $0x8] sm:$0xff]
    %v111 = vld [vmem:[#allocation5 + $0x10] sm:$0xff]
    %v112 = vld [vmem:[#allocation5 + $0x18] sm:$0xff]
    %v114 = vlaneseq
    %v115 = vshrl.u32 %v114, 7
    %v116 = vsub.s32 0, %v115
    %v117 = vrot.slane %v108, %v116
    %v118 = vlaneseq
    %v119 = vshrl.u32 %v118, 7
    %v120 = vsub.s32 1, %v119
    %v121 = vrot.slane %v108, %v120
    %v128 = vunpack.c.l.b16 %v109
    %v129 = vunpack.c.h.b16 %v109
    %v130 = vunpack.c.l.b16 %v110
    %v131 = vunpack.c.h.b16 %v110
    %v132 = vunpack.c.l.b16 %v111
    %v133 = vunpack.c.h.b16 %v111
    %v134 = vunpack.c.l.b16 %v112
    %v135 = vunpack.c.h.b16 %v112
    %v136 = vpack.c.b16 %v130, %v128
    %v137 = vpack.c.b16 %v131, %v129
    %v138 = vpack.c.b16 %v134, %v132
    %v139 = vpack.c.b16 %v135, %v133
    %vm144 = vcmask 261120
    %v146 = vsel %vm144, %v107, 0
    %148 = vmatprep.subr.bf16.mxu0 %v137
    %149 = vmatpush1.bf16.msra.mxu0 %v136
    %150 = vmatprep.subr.bf16.mxu0 %v139
    %151 = vmatpush1.bf16.msra.mxu0 %v138
    %152 = vmatprep.subr.bf16.mxu0 0
    %153 = vmatpush1.bf16.msra.mxu0 0
    %154 = vmatprep.subr.bf16.mxu0 0
    %155 = vmatpush1.bf16.msra.mxu0 0
    %156 = vmatprep.subr.bf16.mxu0 0
    %157 = vmatpush1.bf16.msra.mxu0 0
    %158 = vmatprep.subr.bf16.mxu0 0
    %159 = vmatpush1.bf16.msra.mxu0 0
    %160 = vmatprep.subr.bf16.mxu0 0
    %161 = vmatpush1.bf16.msra.mxu0 0
    %162 = vmatprep.subr.bf16.mxu0 0
    %163 = vmatpush1.bf16.msra.mxu0 0
    %164 = vmatprep.subr.bf16.mxu0 0
    %165 = vmatpush1.bf16.msra.mxu0 0
    %166 = vmatprep.subr.bf16.mxu0 0
    %167 = vmatpush1.bf16.msra.mxu0 0
    %168 = vmatprep.subr.bf16.mxu0 0
    %169 = vmatpush1.bf16.msra.mxu0 0
    %170 = vmatprep.subr.bf16.mxu0 0
    %171 = vmatpush1.bf16.msra.mxu0 0
    %172 = vmatprep.subr.bf16.mxu0 0
    %173 = vmatpush1.bf16.msra.mxu0 0
    %174 = vmatprep.subr.bf16.mxu0 0
    %175 = vmatpush1.bf16.msra.mxu0 0
    %176 = vmatprep.subr.bf16.mxu0 0
    %177 = vmatpush1.bf16.msra.mxu0 0
    %178 = vmatprep.subr.bf16.mxu0 0
    %179 = vmatpush1.bf16.msra.mxu0 0
    %180 = vmatprep.mubr.bf16.mxu0 0
    %181 = vmatmul.mubr.bf16.gmra.mrb[0].mxu0 %v146
    %v182 = vpop.f32.mrb[0].mxu0
    %v183 = vadd.f32 %v117, %v182
    %v184 = vpop.f32.mrb[0].mxu0
    %v185 = vadd.f32 %v121, %v184
    %v186 = vpop.f32.mrb[0].mxu0
    %v187 = vpop.f32.mrb[0].mxu0
    %188 = vdwg.mxu0
    %v189 = vmax.f32 %v183, 0.0
    %v190 = vmax.f32 %v185, 0.0
    %v191 = vpack.c.bf16 %v189, %v189
    %v192 = vpack.c.bf16 %v190, %v190
    %v193 = vld [vmem:[#allocation11 + $0x2] sm:$0xff]
    %v194 = vld [vmem:[#allocation7] sm:$0xff]
    %v195 = vld [vmem:[#allocation7 + $0x8] sm:$0xff]
    %v196 = vld [vmem:[#allocation7 + $0x10] sm:$0xff]
    %v197 = vld [vmem:[#allocation7 + $0x18] sm:$0xff]
    %v198 = vld [vmem:[#allocation7 + $0x20] sm:$0xff]
    %v199 = vld [vmem:[#allocation7 + $0x28] sm:$0xff]
    %v200 = vld [vmem:[#allocation7 + $0x30] sm:$0xff]
    %v201 = vld [vmem:[#allocation7 + $0x38] sm:$0xff]
    %v202 = vld [vmem:[#allocation7 + $0x40] sm:$0xff]
    %v203 = vld [vmem:[#allocation7 + $0x48] sm:$0xff]
    %v204 = vld [vmem:[#allocation7 + $0x50] sm:$0xff]
    %v205 = vld [vmem:[#allocation7 + $0x58] sm:$0xff]
    %v206 = vld [vmem:[#allocation7 + $0x60] sm:$0xff]
    %v207 = vld [vmem:[#allocation7 + $0x68] sm:$0xff]
    %v208 = vld [vmem:[#allocation7 + $0x70] sm:$0xff]
    %v209 = vld [vmem:[#allocation7 + $0x78] sm:$0xff]
    %v210 = vld [vmem:[#allocation7 + $0x80] sm:$0xff]
    %v211 = vld [vmem:[#allocation7 + $0x88] sm:$0xff]
    %v212 = vld [vmem:[#allocation7 + $0x90] sm:$0xff]
    %v213 = vld [vmem:[#allocation7 + $0x98] sm:$0xff]
    %v214 = vld [vmem:[#allocation7 + $0xa0] sm:$0xff]
    %v215 = vld [vmem:[#allocation7 + $0xa8] sm:$0xff]
    %v216 = vld [vmem:[#allocation7 + $0xb0] sm:$0xff]
    %v217 = vld [vmem:[#allocation7 + $0xb8] sm:$0xff]
    %v218 = vld [vmem:[#allocation7 + $0xc0] sm:$0xff]
    %v219 = vld [vmem:[#allocation7 + $0xc8] sm:$0xff]
    %v220 = vld [vmem:[#allocation7 + $0xd0] sm:$0xff]
    %v221 = vld [vmem:[#allocation7 + $0xd8] sm:$0xff]
    %v222 = vld [vmem:[#allocation7 + $0xe0] sm:$0xff]
    %v223 = vld [vmem:[#allocation7 + $0xe8] sm:$0xff]
    %v224 = vld [vmem:[#allocation7 + $0xf0] sm:$0xff]
    %v225 = vld [vmem:[#allocation7 + $0xf8] sm:$0xff]
    %v226 = vld [vmem:[#allocation7 + $0x100] sm:$0xff]
    %v227 = vld [vmem:[#allocation7 + $0x108] sm:$0xff]
    %v228 = vld [vmem:[#allocation7 + $0x110] sm:$0xff]
    %v229 = vld [vmem:[#allocation7 + $0x118] sm:$0xff]
    %v230 = vld [vmem:[#allocation7 + $0x120] sm:$0xff]
    %v231 = vld [vmem:[#allocation7 + $0x128] sm:$0xff]
    %v232 = vld [vmem:[#allocation7 + $0x130] sm:$0xff]
    %v233 = vld [vmem:[#allocation7 + $0x138] sm:$0xff]
    %v234 = vld [vmem:[#allocation7 + $0x140] sm:$0xff]
    %v235 = vld [vmem:[#allocation7 + $0x148] sm:$0xff]
    %v236 = vld [vmem:[#allocation7 + $0x150] sm:$0xff]
    %v237 = vld [vmem:[#allocation7 + $0x158] sm:$0xff]
    %v238 = vld [vmem:[#allocation7 + $0x160] sm:$0xff]
    %v239 = vld [vmem:[#allocation7 + $0x168] sm:$0xff]
    %v240 = vld [vmem:[#allocation7 + $0x170] sm:$0xff]
    %v241 = vld [vmem:[#allocation7 + $0x178] sm:$0xff]
    %v242 = vld [vmem:[#allocation7 + $0x180] sm:$0xff]
    %v243 = vld [vmem:[#allocation7 + $0x188] sm:$0xff]
    %v244 = vld [vmem:[#allocation7 + $0x190] sm:$0xff]
    %v245 = vld [vmem:[#allocation7 + $0x198] sm:$0xff]
    %v246 = vld [vmem:[#allocation7 + $0x1a0] sm:$0xff]
    %v247 = vld [vmem:[#allocation7 + $0x1a8] sm:$0xff]
    %v248 = vld [vmem:[#allocation7 + $0x1b0] sm:$0xff]
    %v249 = vld [vmem:[#allocation7 + $0x1b8] sm:$0xff]
    %v250 = vld [vmem:[#allocation7 + $0x1c0] sm:$0xff]
    %v251 = vld [vmem:[#allocation7 + $0x1c8] sm:$0xff]
    %v252 = vld [vmem:[#allocation7 + $0x1d0] sm:$0xff]
    %v253 = vld [vmem:[#allocation7 + $0x1d8] sm:$0xff]
    %v254 = vld [vmem:[#allocation7 + $0x1e0] sm:$0xff]
    %v255 = vld [vmem:[#allocation7 + $0x1e8] sm:$0xff]
    %v256 = vld [vmem:[#allocation7 + $0x1f0] sm:$0xff]
    %v257 = vld [vmem:[#allocation7 + $0x1f8] sm:$0xff]
    %v258 = vld [vmem:[#allocation7 + $0x200] sm:$0xff]
    %v259 = vld [vmem:[#allocation7 + $0x208] sm:$0xff]
    %v260 = vld [vmem:[#allocation7 + $0x210] sm:$0xff]
    %v261 = vld [vmem:[#allocation7 + $0x218] sm:$0xff]
    %v262 = vld [vmem:[#allocation7 + $0x220] sm:$0xff]
    %v263 = vld [vmem:[#allocation7 + $0x228] sm:$0xff]
    %v264 = vld [vmem:[#allocation7 + $0x230] sm:$0xff]
    %v265 = vld [vmem:[#allocation7 + $0x238] sm:$0xff]
    %v266 = vld [vmem:[#allocation7 + $0x240] sm:$0xff]
    %v267 = vld [vmem:[#allocation7 + $0x248] sm:$0xff]
    %v268 = vld [vmem:[#allocation7 + $0x250] sm:$0xff]
    %v269 = vld [vmem:[#allocation7 + $0x258] sm:$0xff]
    %v270 = vld [vmem:[#allocation7 + $0x260] sm:$0xff]
    %v271 = vld [vmem:[#allocation7 + $0x268] sm:$0xff]
    %v272 = vld [vmem:[#allocation7 + $0x270] sm:$0xff]
    %v273 = vld [vmem:[#allocation7 + $0x278] sm:$0xff]
    %v274 = vld [vmem:[#allocation7 + $0x280] sm:$0xff]
    %v275 = vld [vmem:[#allocation7 + $0x288] sm:$0xff]
    %v276 = vld [vmem:[#allocation7 + $0x290] sm:$0xff]
    %v277 = vld [vmem:[#allocation7 + $0x298] sm:$0xff]
    %v278 = vld [vmem:[#allocation7 + $0x2a0] sm:$0xff]
    %v279 = vld [vmem:[#allocation7 + $0x2a8] sm:$0xff]
    %v280 = vld [vmem:[#allocation7 + $0x2b0] sm:$0xff]
    %v281 = vld [vmem:[#allocation7 + $0x2b8] sm:$0xff]
    %v282 = vld [vmem:[#allocation7 + $0x2c0] sm:$0xff]
    %v283 = vld [vmem:[#allocation7 + $0x2c8] sm:$0xff]
    %v284 = vld [vmem:[#allocation7 + $0x2d0] sm:$0xff]
    %v285 = vld [vmem:[#allocation7 + $0x2d8] sm:$0xff]
    %v286 = vld [vmem:[#allocation7 + $0x2e0] sm:$0xff]
    %v287 = vld [vmem:[#allocation7 + $0x2e8] sm:$0xff]
    %v288 = vld [vmem:[#allocation7 + $0x2f0] sm:$0xff]
    %v289 = vld [vmem:[#allocation7 + $0x2f8] sm:$0xff]
    %v290 = vld [vmem:[#allocation7 + $0x300] sm:$0xff]
    %v291 = vld [vmem:[#allocation7 + $0x308] sm:$0xff]
    %v292 = vld [vmem:[#allocation7 + $0x310] sm:$0xff]
    %v293 = vld [vmem:[#allocation7 + $0x318] sm:$0xff]
    %v294 = vld [vmem:[#allocation7 + $0x320] sm:$0xff]
    %v295 = vld [vmem:[#allocation7 + $0x328] sm:$0xff]
    %v296 = vld [vmem:[#allocation7 + $0x330] sm:$0xff]
    %v297 = vld [vmem:[#allocation7 + $0x338] sm:$0xff]
    %v298 = vld [vmem:[#allocation7 + $0x340] sm:$0xff]
    %v299 = vld [vmem:[#allocation7 + $0x348] sm:$0xff]
    %v300 = vld [vmem:[#allocation7 + $0x350] sm:$0xff]
    %v301 = vld [vmem:[#allocation7 + $0x358] sm:$0xff]
    %v302 = vld [vmem:[#allocation7 + $0x360] sm:$0xff]
    %v303 = vld [vmem:[#allocation7 + $0x368] sm:$0xff]
    %v304 = vld [vmem:[#allocation7 + $0x370] sm:$0xff]
    %v305 = vld [vmem:[#allocation7 + $0x378] sm:$0xff]
    %v306 = vld [vmem:[#allocation7 + $0x380] sm:$0xff]
    %v307 = vld [vmem:[#allocation7 + $0x388] sm:$0xff]
    %v308 = vld [vmem:[#allocation7 + $0x390] sm:$0xff]
    %v309 = vld [vmem:[#allocation7 + $0x398] sm:$0xff]
    %v310 = vld [vmem:[#allocation7 + $0x3a0] sm:$0xff]
    %v311 = vld [vmem:[#allocation7 + $0x3a8] sm:$0xff]
    %v312 = vld [vmem:[#allocation7 + $0x3b0] sm:$0xff]
    %v313 = vld [vmem:[#allocation7 + $0x3b8] sm:$0xff]
    %v314 = vld [vmem:[#allocation7 + $0x3c0] sm:$0xff]
    %v315 = vld [vmem:[#allocation7 + $0x3c8] sm:$0xff]
    %v316 = vld [vmem:[#allocation7 + $0x3d0] sm:$0xff]
    %v317 = vld [vmem:[#allocation7 + $0x3d8] sm:$0xff]
    %v318 = vld [vmem:[#allocation7 + $0x3e0] sm:$0xff]
    %v319 = vld [vmem:[#allocation7 + $0x3e8] sm:$0xff]
    %v320 = vld [vmem:[#allocation7 + $0x3f0] sm:$0xff]
    %v321 = vld [vmem:[#allocation7 + $0x3f8] sm:$0xff]
    %v323 = vlaneseq
    %v324 = vshrl.u32 %v323, 7
    %v325 = vsub.s32 0, %v324
    %v326 = vrot.slane %v193, %v325
    %v327 = vlaneseq
    %v328 = vshrl.u32 %v327, 7
    %v329 = vsub.s32 1, %v328
    %v330 = vrot.slane %v193, %v329
    %v331 = vlaneseq
    %v332 = vshrl.u32 %v331, 7
    %v333 = vsub.s32 2, %v332
    %v334 = vrot.slane %v193, %v333
    %v335 = vlaneseq
    %v336 = vshrl.u32 %v335, 7
    %v337 = vsub.s32 3, %v336
    %v338 = vrot.slane %v193, %v337
    %v339 = vlaneseq
    %v340 = vshrl.u32 %v339, 7
    %v341 = vsub.s32 4, %v340
    %v342 = vrot.slane %v193, %v341
    %v343 = vlaneseq
    %v344 = vshrl.u32 %v343, 7
    %v345 = vsub.s32 5, %v344
    %v346 = vrot.slane %v193, %v345
    %v347 = vlaneseq
    %v348 = vshrl.u32 %v347, 7
    %v349 = vsub.s32 6, %v348
    %v350 = vrot.slane %v193, %v349
    %v351 = vlaneseq
    %v352 = vshrl.u32 %v351, 7
    %v353 = vsub.s32 7, %v352
    %v354 = vrot.slane %v193, %v353
    %v491 = vunpack.c.l.b16 %v194
    %v492 = vunpack.c.h.b16 %v194
    %v493 = vunpack.c.l.b16 %v195
    %v494 = vunpack.c.h.b16 %v195
    %v495 = vunpack.c.l.b16 %v196
    %v496 = vunpack.c.h.b16 %v196
    %v497 = vunpack.c.l.b16 %v197
    %v498 = vunpack.c.h.b16 %v197
    %v499 = vunpack.c.l.b16 %v198
    %v500 = vunpack.c.h.b16 %v198
    %v501 = vunpack.c.l.b16 %v199
    %v502 = vunpack.c.h.b16 %v199
    %v503 = vunpack.c.l.b16 %v200
    %v504 = vunpack.c.h.b16 %v200
    %v505 = vunpack.c.l.b16 %v201
    %v506 = vunpack.c.h.b16 %v201
    %v507 = vunpack.c.l.b16 %v202
    %v508 = vunpack.c.h.b16 %v202
    %v509 = vunpack.c.l.b16 %v203
    %v510 = vunpack.c.h.b16 %v203
    %v511 = vunpack.c.l.b16 %v204
    %v512 = vunpack.c.h.b16 %v204
    %v513 = vunpack.c.l.b16 %v205
    %v514 = vunpack.c.h.b16 %v205
    %v515 = vunpack.c.l.b16 %v206
    %v516 = vunpack.c.h.b16 %v206
    %v517 = vunpack.c.l.b16 %v207
    %v518 = vunpack.c.h.b16 %v207
    %v519 = vunpack.c.l.b16 %v208
    %v520 = vunpack.c.h.b16 %v208
    %v521 = vunpack.c.l.b16 %v209
    %v522 = vunpack.c.h.b16 %v209
    %v523 = vunpack.c.l.b16 %v210
    %v524 = vunpack.c.h.b16 %v210
    %v525 = vunpack.c.l.b16 %v211
    %v526 = vunpack.c.h.b16 %v211
    %v527 = vunpack.c.l.b16 %v212
    %v528 = vunpack.c.h.b16 %v212
    %v529 = vunpack.c.l.b16 %v213
    %v530 = vunpack.c.h.b16 %v213
    %v531 = vunpack.c.l.b16 %v214
    %v532 = vunpack.c.h.b16 %v214
    %v533 = vunpack.c.l.b16 %v215
    %v534 = vunpack.c.h.b16 %v215
    %v535 = vunpack.c.l.b16 %v216
    %v536 = vunpack.c.h.b16 %v216
    %v537 = vunpack.c.l.b16 %v217
    %v538 = vunpack.c.h.b16 %v217
    %v539 = vunpack.c.l.b16 %v218
    %v540 = vunpack.c.h.b16 %v218
    %v541 = vunpack.c.l.b16 %v219
    %v542 = vunpack.c.h.b16 %v219
    %v543 = vunpack.c.l.b16 %v220
    %v544 = vunpack.c.h.b16 %v220
    %v545 = vunpack.c.l.b16 %v221
    %v546 = vunpack.c.h.b16 %v221
    %v547 = vunpack.c.l.b16 %v222
    %v548 = vunpack.c.h.b16 %v222
    %v549 = vunpack.c.l.b16 %v223
    %v550 = vunpack.c.h.b16 %v223
    %v551 = vunpack.c.l.b16 %v224
    %v552 = vunpack.c.h.b16 %v224
    %v553 = vunpack.c.l.b16 %v225
    %v554 = vunpack.c.h.b16 %v225
    %v555 = vunpack.c.l.b16 %v226
    %v556 = vunpack.c.h.b16 %v226
    %v557 = vunpack.c.l.b16 %v227
    %v558 = vunpack.c.h.b16 %v227
    %v559 = vunpack.c.l.b16 %v228
    %v560 = vunpack.c.h.b16 %v228
    %v561 = vunpack.c.l.b16 %v229
    %v562 = vunpack.c.h.b16 %v229
    %v563 = vunpack.c.l.b16 %v230
    %v564 = vunpack.c.h.b16 %v230
    %v565 = vunpack.c.l.b16 %v231
    %v566 = vunpack.c.h.b16 %v231
    %v567 = vunpack.c.l.b16 %v232
    %v568 = vunpack.c.h.b16 %v232
    %v569 = vunpack.c.l.b16 %v233
    %v570 = vunpack.c.h.b16 %v233
    %v571 = vunpack.c.l.b16 %v234
    %v572 = vunpack.c.h.b16 %v234
    %v573 = vunpack.c.l.b16 %v235
    %v574 = vunpack.c.h.b16 %v235
    %v575 = vunpack.c.l.b16 %v236
    %v576 = vunpack.c.h.b16 %v236
    %v577 = vunpack.c.l.b16 %v237
    %v578 = vunpack.c.h.b16 %v237
    %v579 = vunpack.c.l.b16 %v238
    %v580 = vunpack.c.h.b16 %v238
    %v581 = vunpack.c.l.b16 %v239
    %v582 = vunpack.c.h.b16 %v239
    %v583 = vunpack.c.l.b16 %v240
    %v584 = vunpack.c.h.b16 %v240
    %v585 = vunpack.c.l.b16 %v241
    %v586 = vunpack.c.h.b16 %v241
    %v587 = vunpack.c.l.b16 %v242
    %v588 = vunpack.c.h.b16 %v242
    %v589 = vunpack.c.l.b16 %v243
    %v590 = vunpack.c.h.b16 %v243
    %v591 = vunpack.c.l.b16 %v244
    %v592 = vunpack.c.h.b16 %v244
    %v593 = vunpack.c.l.b16 %v245
    %v594 = vunpack.c.h.b16 %v245
    %v595 = vunpack.c.l.b16 %v246
    %v596 = vunpack.c.h.b16 %v246
    %v597 = vunpack.c.l.b16 %v247
    %v598 = vunpack.c.h.b16 %v247
    %v599 = vunpack.c.l.b16 %v248
    %v600 = vunpack.c.h.b16 %v248
    %v601 = vunpack.c.l.b16 %v249
    %v602 = vunpack.c.h.b16 %v249
    %v603 = vunpack.c.l.b16 %v250
    %v604 = vunpack.c.h.b16 %v250
    %v605 = vunpack.c.l.b16 %v251
    %v606 = vunpack.c.h.b16 %v251
    %v607 = vunpack.c.l.b16 %v252
    %v608 = vunpack.c.h.b16 %v252
    %v609 = vunpack.c.l.b16 %v253
    %v610 = vunpack.c.h.b16 %v253
    %v611 = vunpack.c.l.b16 %v254
    %v612 = vunpack.c.h.b16 %v254
    %v613 = vunpack.c.l.b16 %v255
    %v614 = vunpack.c.h.b16 %v255
    %v615 = vunpack.c.l.b16 %v256
    %v616 = vunpack.c.h.b16 %v256
    %v617 = vunpack.c.l.b16 %v257
    %v618 = vunpack.c.h.b16 %v257
    %v619 = vunpack.c.l.b16 %v258
    %v620 = vunpack.c.h.b16 %v258
    %v621 = vunpack.c.l.b16 %v259
    %v622 = vunpack.c.h.b16 %v259
    %v623 = vunpack.c.l.b16 %v260
    %v624 = vunpack.c.h.b16 %v260
    %v625 = vunpack.c.l.b16 %v261
    %v626 = vunpack.c.h.b16 %v261
    %v627 = vunpack.c.l.b16 %v262
    %v628 = vunpack.c.h.b16 %v262
    %v629 = vunpack.c.l.b16 %v263
    %v630 = vunpack.c.h.b16 %v263
    %v631 = vunpack.c.l.b16 %v264
    %v632 = vunpack.c.h.b16 %v264
    %v633 = vunpack.c.l.b16 %v265
    %v634 = vunpack.c.h.b16 %v265
    %v635 = vunpack.c.l.b16 %v266
    %v636 = vunpack.c.h.b16 %v266
    %v637 = vunpack.c.l.b16 %v267
    %v638 = vunpack.c.h.b16 %v267
    %v639 = vunpack.c.l.b16 %v268
    %v640 = vunpack.c.h.b16 %v268
    %v641 = vunpack.c.l.b16 %v269
    %v642 = vunpack.c.h.b16 %v269
    %v643 = vunpack.c.l.b16 %v270
    %v644 = vunpack.c.h.b16 %v270
    %v645 = vunpack.c.l.b16 %v271
    %v646 = vunpack.c.h.b16 %v271
    %v647 = vunpack.c.l.b16 %v272
    %v648 = vunpack.c.h.b16 %v272
    %v649 = vunpack.c.l.b16 %v273
    %v650 = vunpack.c.h.b16 %v273
    %v651 = vunpack.c.l.b16 %v274
    %v652 = vunpack.c.h.b16 %v274
    %v653 = vunpack.c.l.b16 %v275
    %v654 = vunpack.c.h.b16 %v275
    %v655 = vunpack.c.l.b16 %v276
    %v656 = vunpack.c.h.b16 %v276
    %v657 = vunpack.c.l.b16 %v277
    %v658 = vunpack.c.h.b16 %v277
    %v659 = vunpack.c.l.b16 %v278
    %v660 = vunpack.c.h.b16 %v278
    %v661 = vunpack.c.l.b16 %v279
    %v662 = vunpack.c.h.b16 %v279
    %v663 = vunpack.c.l.b16 %v280
    %v664 = vunpack.c.h.b16 %v280
    %v665 = vunpack.c.l.b16 %v281
    %v666 = vunpack.c.h.b16 %v281
    %v667 = vunpack.c.l.b16 %v282
    %v668 = vunpack.c.h.b16 %v282
    %v669 = vunpack.c.l.b16 %v283
    %v670 = vunpack.c.h.b16 %v283
    %v671 = vunpack.c.l.b16 %v284
    %v672 = vunpack.c.h.b16 %v284
    %v673 = vunpack.c.l.b16 %v285
    %v674 = vunpack.c.h.b16 %v285
    %v675 = vunpack.c.l.b16 %v286
    %v676 = vunpack.c.h.b16 %v286
    %v677 = vunpack.c.l.b16 %v287
    %v678 = vunpack.c.h.b16 %v287
    %v679 = vunpack.c.l.b16 %v288
    %v680 = vunpack.c.h.b16 %v288
    %v681 = vunpack.c.l.b16 %v289
    %v682 = vunpack.c.h.b16 %v289
    %v683 = vunpack.c.l.b16 %v290
    %v684 = vunpack.c.h.b16 %v290
    %v685 = vunpack.c.l.b16 %v291
    %v686 = vunpack.c.h.b16 %v291
    %v687 = vunpack.c.l.b16 %v292
    %v688 = vunpack.c.h.b16 %v292
    %v689 = vunpack.c.l.b16 %v293
    %v690 = vunpack.c.h.b16 %v293
    %v691 = vunpack.c.l.b16 %v294
    %v692 = vunpack.c.h.b16 %v294
    %v693 = vunpack.c.l.b16 %v295
    %v694 = vunpack.c.h.b16 %v295
    %v695 = vunpack.c.l.b16 %v296
    %v696 = vunpack.c.h.b16 %v296
    %v697 = vunpack.c.l.b16 %v297
    %v698 = vunpack.c.h.b16 %v297
    %v699 = vunpack.c.l.b16 %v298
    %v700 = vunpack.c.h.b16 %v298
    %v701 = vunpack.c.l.b16 %v299
    %v702 = vunpack.c.h.b16 %v299
    %v703 = vunpack.c.l.b16 %v300
    %v704 = vunpack.c.h.b16 %v300
    %v705 = vunpack.c.l.b16 %v301
    %v706 = vunpack.c.h.b16 %v301
    %v707 = vunpack.c.l.b16 %v302
    %v708 = vunpack.c.h.b16 %v302
    %v709 = vunpack.c.l.b16 %v303
    %v710 = vunpack.c.h.b16 %v303
    %v711 = vunpack.c.l.b16 %v304
    %v712 = vunpack.c.h.b16 %v304
    %v713 = vunpack.c.l.b16 %v305
    %v714 = vunpack.c.h.b16 %v305
    %v715 = vunpack.c.l.b16 %v306
    %v716 = vunpack.c.h.b16 %v306
    %v717 = vunpack.c.l.b16 %v307
    %v718 = vunpack.c.h.b16 %v307
    %v719 = vunpack.c.l.b16 %v308
    %v720 = vunpack.c.h.b16 %v308
    %v721 = vunpack.c.l.b16 %v309
    %v722 = vunpack.c.h.b16 %v309
    %v723 = vunpack.c.l.b16 %v310
    %v724 = vunpack.c.h.b16 %v310
    %v725 = vunpack.c.l.b16 %v311
    %v726 = vunpack.c.h.b16 %v311
    %v727 = vunpack.c.l.b16 %v312
    %v728 = vunpack.c.h.b16 %v312
    %v729 = vunpack.c.l.b16 %v313
    %v730 = vunpack.c.h.b16 %v313
    %v731 = vunpack.c.l.b16 %v314
    %v732 = vunpack.c.h.b16 %v314
    %v733 = vunpack.c.l.b16 %v315
    %v734 = vunpack.c.h.b16 %v315
    %v735 = vunpack.c.l.b16 %v316
    %v736 = vunpack.c.h.b16 %v316
    %v737 = vunpack.c.l.b16 %v317
    %v738 = vunpack.c.h.b16 %v317
    %v739 = vunpack.c.l.b16 %v318
    %v740 = vunpack.c.h.b16 %v318
    %v741 = vunpack.c.l.b16 %v319
    %v742 = vunpack.c.h.b16 %v319
    %v743 = vunpack.c.l.b16 %v320
    %v744 = vunpack.c.h.b16 %v320
    %v745 = vunpack.c.l.b16 %v321
    %v746 = vunpack.c.h.b16 %v321
    %v747 = vpack.c.b16 %v499, %v491
    %v748 = vpack.c.b16 %v500, %v492
    %v749 = vpack.c.b16 %v501, %v493
    %v750 = vpack.c.b16 %v502, %v494
    %v751 = vpack.c.b16 %v503, %v495
    %v752 = vpack.c.b16 %v504, %v496
    %v753 = vpack.c.b16 %v505, %v497
    %v754 = vpack.c.b16 %v506, %v498
    %v755 = vpack.c.b16 %v515, %v507
    %v756 = vpack.c.b16 %v516, %v508
    %v757 = vpack.c.b16 %v517, %v509
    %v758 = vpack.c.b16 %v518, %v510
    %v759 = vpack.c.b16 %v519, %v511
    %v760 = vpack.c.b16 %v520, %v512
    %v761 = vpack.c.b16 %v521, %v513
    %v762 = vpack.c.b16 %v522, %v514
    %v763 = vpack.c.b16 %v531, %v523
    %v764 = vpack.c.b16 %v532, %v524
    %v765 = vpack.c.b16 %v533, %v525
    %v766 = vpack.c.b16 %v534, %v526
    %v767 = vpack.c.b16 %v535, %v527
    %v768 = vpack.c.b16 %v536, %v528
    %v769 = vpack.c.b16 %v537, %v529
    %v770 = vpack.c.b16 %v538, %v530
    %v771 = vpack.c.b16 %v547, %v539
    %v772 = vpack.c.b16 %v548, %v540
    %v773 = vpack.c.b16 %v549, %v541
    %v774 = vpack.c.b16 %v550, %v542
    %v775 = vpack.c.b16 %v551, %v543
    %v776 = vpack.c.b16 %v552, %v544
    %v777 = vpack.c.b16 %v553, %v545
    %v778 = vpack.c.b16 %v554, %v546
    %v779 = vpack.c.b16 %v563, %v555
    %v780 = vpack.c.b16 %v564, %v556
    %v781 = vpack.c.b16 %v565, %v557
    %v782 = vpack.c.b16 %v566, %v558
    %v783 = vpack.c.b16 %v567, %v559
    %v784 = vpack.c.b16 %v568, %v560
    %v785 = vpack.c.b16 %v569, %v561
    %v786 = vpack.c.b16 %v570, %v562
    %v787 = vpack.c.b16 %v579, %v571
    %v788 = vpack.c.b16 %v580, %v572
    %v789 = vpack.c.b16 %v581, %v573
    %v790 = vpack.c.b16 %v582, %v574
    %v791 = vpack.c.b16 %v583, %v575
    %v792 = vpack.c.b16 %v584, %v576
    %v793 = vpack.c.b16 %v585, %v577
    %v794 = vpack.c.b16 %v586, %v578
    %v795 = vpack.c.b16 %v595, %v587
    %v796 = vpack.c.b16 %v596, %v588
    %v797 = vpack.c.b16 %v597, %v589
    %v798 = vpack.c.b16 %v598, %v590
    %v799 = vpack.c.b16 %v599, %v591
    %v800 = vpack.c.b16 %v600, %v592
    %v801 = vpack.c.b16 %v601, %v593
    %v802 = vpack.c.b16 %v602, %v594
    %v803 = vpack.c.b16 %v611, %v603
    %v804 = vpack.c.b16 %v612, %v604
    %v805 = vpack.c.b16 %v613, %v605
    %v806 = vpack.c.b16 %v614, %v606
    %v807 = vpack.c.b16 %v615, %v607
    %v808 = vpack.c.b16 %v616, %v608
    %v809 = vpack.c.b16 %v617, %v609
    %v810 = vpack.c.b16 %v618, %v610
    %v811 = vpack.c.b16 %v627, %v619
    %v812 = vpack.c.b16 %v628, %v620
    %v813 = vpack.c.b16 %v629, %v621
    %v814 = vpack.c.b16 %v630, %v622
    %v815 = vpack.c.b16 %v631, %v623
    %v816 = vpack.c.b16 %v632, %v624
    %v817 = vpack.c.b16 %v633, %v625
    %v818 = vpack.c.b16 %v634, %v626
    %v819 = vpack.c.b16 %v643, %v635
    %v820 = vpack.c.b16 %v644, %v636
    %v821 = vpack.c.b16 %v645, %v637
    %v822 = vpack.c.b16 %v646, %v638
    %v823 = vpack.c.b16 %v647, %v639
    %v824 = vpack.c.b16 %v648, %v640
    %v825 = vpack.c.b16 %v649, %v641
    %v826 = vpack.c.b16 %v650, %v642
    %v827 = vpack.c.b16 %v659, %v651
    %v828 = vpack.c.b16 %v660, %v652
    %v829 = vpack.c.b16 %v661, %v653
    %v830 = vpack.c.b16 %v662, %v654
    %v831 = vpack.c.b16 %v663, %v655
    %v832 = vpack.c.b16 %v664, %v656
    %v833 = vpack.c.b16 %v665, %v657
    %v834 = vpack.c.b16 %v666, %v658
    %v835 = vpack.c.b16 %v675, %v667
    %v836 = vpack.c.b16 %v676, %v668
    %v837 = vpack.c.b16 %v677, %v669
    %v838 = vpack.c.b16 %v678, %v670
    %v839 = vpack.c.b16 %v679, %v671
    %v840 = vpack.c.b16 %v680, %v672
    %v841 = vpack.c.b16 %v681, %v673
    %v842 = vpack.c.b16 %v682, %v674
    %v843 = vpack.c.b16 %v691, %v683
    %v844 = vpack.c.b16 %v692, %v684
    %v845 = vpack.c.b16 %v693, %v685
    %v846 = vpack.c.b16 %v694, %v686
    %v847 = vpack.c.b16 %v695, %v687
    %v848 = vpack.c.b16 %v696, %v688
    %v849 = vpack.c.b16 %v697, %v689
    %v850 = vpack.c.b16 %v698, %v690
    %v851 = vpack.c.b16 %v707, %v699
    %v852 = vpack.c.b16 %v708, %v700
    %v853 = vpack.c.b16 %v709, %v701
    %v854 = vpack.c.b16 %v710, %v702
    %v855 = vpack.c.b16 %v711, %v703
    %v856 = vpack.c.b16 %v712, %v704
    %v857 = vpack.c.b16 %v713, %v705
    %v858 = vpack.c.b16 %v714, %v706
    %v859 = vpack.c.b16 %v723, %v715
    %v860 = vpack.c.b16 %v724, %v716
    %v861 = vpack.c.b16 %v725, %v717
    %v862 = vpack.c.b16 %v726, %v718
    %v863 = vpack.c.b16 %v727, %v719
    %v864 = vpack.c.b16 %v728, %v720
    %v865 = vpack.c.b16 %v729, %v721
    %v866 = vpack.c.b16 %v730, %v722
    %v867 = vpack.c.b16 %v739, %v731
    %v868 = vpack.c.b16 %v740, %v732
    %v869 = vpack.c.b16 %v741, %v733
    %v870 = vpack.c.b16 %v742, %v734
    %v871 = vpack.c.b16 %v743, %v735
    %v872 = vpack.c.b16 %v744, %v736
    %v873 = vpack.c.b16 %v745, %v737
    %v874 = vpack.c.b16 %v746, %v738
    %1003 = vmatprep.subr.bf16.mxu0 %v748
    %1004 = vmatpush1.bf16.msra.mxu0 %v747
    %1005 = vmatprep.subr.bf16.mxu0 %v756
    %1006 = vmatpush1.bf16.msra.mxu0 %v755
    %1007 = vmatprep.subr.bf16.mxu0 %v764
    %1008 = vmatpush1.bf16.msra.mxu0 %v763
    %1009 = vmatprep.subr.bf16.mxu0 %v772
    %1010 = vmatpush1.bf16.msra.mxu0 %v771
    %1011 = vmatprep.subr.bf16.mxu0 %v780
    %1012 = vmatpush1.bf16.msra.mxu0 %v779
    %1013 = vmatprep.subr.bf16.mxu0 %v788
    %1014 = vmatpush1.bf16.msra.mxu0 %v787
    %1015 = vmatprep.subr.bf16.mxu0 %v796
    %1016 = vmatpush1.bf16.msra.mxu0 %v795
    %1017 = vmatprep.subr.bf16.mxu0 %v804
    %1018 = vmatpush1.bf16.msra.mxu0 %v803
    %1019 = vmatprep.subr.bf16.mxu0 %v812
    %1020 = vmatpush1.bf16.msra.mxu0 %v811
    %1021 = vmatprep.subr.bf16.mxu0 %v820
    %1022 = vmatpush1.bf16.msra.mxu0 %v819
    %1023 = vmatprep.subr.bf16.mxu0 %v828
    %1024 = vmatpush1.bf16.msra.mxu0 %v827
    %1025 = vmatprep.subr.bf16.mxu0 %v836
    %1026 = vmatpush1.bf16.msra.mxu0 %v835
    %1027 = vmatprep.subr.bf16.mxu0 %v844
    %1028 = vmatpush1.bf16.msra.mxu0 %v843
    %1029 = vmatprep.subr.bf16.mxu0 %v852
    %1030 = vmatpush1.bf16.msra.mxu0 %v851
    %1031 = vmatprep.subr.bf16.mxu0 %v860
    %1032 = vmatpush1.bf16.msra.mxu0 %v859
    %1033 = vmatprep.subr.bf16.mxu0 %v868
    %1034 = vmatpush1.bf16.msra.mxu0 %v867
    %1035 = vmatprep.mubr.bf16.mxu0 %v192
    %1036 = vmatmul.mubr.bf16.gmra.mrb[0].mxu0 %v191
    %v1037 = vpop.f32.mrb[0].mxu0
    %v1038 = vadd.f32 %v326, %v1037
    %v1039 = vpop.f32.mrb[0].mxu0
    %v1040 = vadd.f32 %v330, %v1039
    %v1041 = vpop.f32.mrb[0].mxu0
    %v1042 = vpop.f32.mrb[0].mxu0
    %1043 = vdwg.mxu0
    %1044 = vmatprep.subr.bf16.mxu0 %v750
    %1045 = vmatpush1.bf16.msra.mxu0 %v749
    %1046 = vmatprep.subr.bf16.mxu0 %v758
    %1047 = vmatpush1.bf16.msra.mxu0 %v757
    %1048 = vmatprep.subr.bf16.mxu0 %v766
    %1049 = vmatpush1.bf16.msra.mxu0 %v765
    %1050 = vmatprep.subr.bf16.mxu0 %v774
    %1051 = vmatpush1.bf16.msra.mxu0 %v773
    %1052 = vmatprep.subr.bf16.mxu0 %v782
    %1053 = vmatpush1.bf16.msra.mxu0 %v781
    %1054 = vmatprep.subr.bf16.mxu0 %v790
    %1055 = vmatpush1.bf16.msra.mxu0 %v789
    %1056 = vmatprep.subr.bf16.mxu0 %v798
    %1057 = vmatpush1.bf16.msra.mxu0 %v797
    %1058 = vmatprep.subr.bf16.mxu0 %v806
    %1059 = vmatpush1.bf16.msra.mxu0 %v805
    %1060 = vmatprep.subr.bf16.mxu0 %v814
    %1061 = vmatpush1.bf16.msra.mxu0 %v813
    %1062 = vmatprep.subr.bf16.mxu0 %v822
    %1063 = vmatpush1.bf16.msra.mxu0 %v821
    %1064 = vmatprep.subr.bf16.mxu0 %v830
    %1065 = vmatpush1.bf16.msra.mxu0 %v829
    %1066 = vmatprep.subr.bf16.mxu0 %v838
    %1067 = vmatpush1.bf16.msra.mxu0 %v837
    %1068 = vmatprep.subr.bf16.mxu0 %v846
    %1069 = vmatpush1.bf16.msra.mxu0 %v845
    %1070 = vmatprep.subr.bf16.mxu0 %v854
    %1071 = vmatpush1.bf16.msra.mxu0 %v853
    %1072 = vmatprep.subr.bf16.mxu0 %v862
    %1073 = vmatpush1.bf16.msra.mxu0 %v861
    %1074 = vmatprep.subr.bf16.mxu0 %v870
    %1075 = vmatpush1.bf16.msra.mxu0 %v869
    %1076 = vmatprep.mubr.bf16.mxu0 %v192
    %1077 = vmatmul.mubr.bf16.gmra.mrb[0].mxu0 %v191
    %v1078 = vpop.f32.mrb[0].mxu0
    %v1079 = vadd.f32 %v334, %v1078
    %v1080 = vpop.f32.mrb[0].mxu0
    %v1081 = vadd.f32 %v338, %v1080
    %v1082 = vpop.f32.mrb[0].mxu0
    %v1083 = vpop.f32.mrb[0].mxu0
    %1084 = vdwg.mxu0
    %1085 = vmatprep.subr.bf16.mxu0 %v752
    %1086 = vmatpush1.bf16.msra.mxu0 %v751
    %1087 = vmatprep.subr.bf16.mxu0 %v760
    %1088 = vmatpush1.bf16.msra.mxu0 %v759
    %1089 = vmatprep.subr.bf16.mxu0 %v768
    %1090 = vmatpush1.bf16.msra.mxu0 %v767
    %1091 = vmatprep.subr.bf16.mxu0 %v776
    %1092 = vmatpush1.bf16.msra.mxu0 %v775
    %1093 = vmatprep.subr.bf16.mxu0 %v784
    %1094 = vmatpush1.bf16.msra.mxu0 %v783
    %1095 = vmatprep.subr.bf16.mxu0 %v792
    %1096 = vmatpush1.bf16.msra.mxu0 %v791
    %1097 = vmatprep.subr.bf16.mxu0 %v800
    %1098 = vmatpush1.bf16.msra.mxu0 %v799
    %1099 = vmatprep.subr.bf16.mxu0 %v808
    %1100 = vmatpush1.bf16.msra.mxu0 %v807
    %1101 = vmatprep.subr.bf16.mxu0 %v816
    %1102 = vmatpush1.bf16.msra.mxu0 %v815
    %1103 = vmatprep.subr.bf16.mxu0 %v824
    %1104 = vmatpush1.bf16.msra.mxu0 %v823
    %1105 = vmatprep.subr.bf16.mxu0 %v832
    %1106 = vmatpush1.bf16.msra.mxu0 %v831
    %1107 = vmatprep.subr.bf16.mxu0 %v840
    %1108 = vmatpush1.bf16.msra.mxu0 %v839
    %1109 = vmatprep.subr.bf16.mxu0 %v848
    %1110 = vmatpush1.bf16.msra.mxu0 %v847
    %1111 = vmatprep.subr.bf16.mxu0 %v856
    %1112 = vmatpush1.bf16.msra.mxu0 %v855
    %1113 = vmatprep.subr.bf16.mxu0 %v864
    %1114 = vmatpush1.bf16.msra.mxu0 %v863
    %1115 = vmatprep.subr.bf16.mxu0 %v872
    %1116 = vmatpush1.bf16.msra.mxu0 %v871
    %1117 = vmatprep.mubr.bf16.mxu0 %v192
    %1118 = vmatmul.mubr.bf16.gmra.mrb[0].mxu0 %v191
    %v1119 = vpop.f32.mrb[0].mxu0
    %v1120 = vadd.f32 %v342, %v1119
    %v1121 = vpop.f32.mrb[0].mxu0
    %v1122 = vadd.f32 %v346, %v1121
    %v1123 = vpop.f32.mrb[0].mxu0
    %v1124 = vpop.f32.mrb[0].mxu0
    %1125 = vdwg.mxu0
    %1126 = vmatprep.subr.bf16.mxu0 %v754
    %1127 = vmatpush1.bf16.msra.mxu0 %v753
    %1128 = vmatprep.subr.bf16.mxu0 %v762
    %1129 = vmatpush1.bf16.msra.mxu0 %v761
    %1130 = vmatprep.subr.bf16.mxu0 %v770
    %1131 = vmatpush1.bf16.msra.mxu0 %v769
    %1132 = vmatprep.subr.bf16.mxu0 %v778
    %1133 = vmatpush1.bf16.msra.mxu0 %v777
    %1134 = vmatprep.subr.bf16.mxu0 %v786
    %1135 = vmatpush1.bf16.msra.mxu0 %v785
    %1136 = vmatprep.subr.bf16.mxu0 %v794
    %1137 = vmatpush1.bf16.msra.mxu0 %v793
    %1138 = vmatprep.subr.bf16.mxu0 %v802
    %1139 = vmatpush1.bf16.msra.mxu0 %v801
    %1140 = vmatprep.subr.bf16.mxu0 %v810
    %1141 = vmatpush1.bf16.msra.mxu0 %v809
    %1142 = vmatprep.subr.bf16.mxu0 %v818
    %1143 = vmatpush1.bf16.msra.mxu0 %v817
    %1144 = vmatprep.subr.bf16.mxu0 %v826
    %1145 = vmatpush1.bf16.msra.mxu0 %v825
    %1146 = vmatprep.subr.bf16.mxu0 %v834
    %1147 = vmatpush1.bf16.msra.mxu0 %v833
    %1148 = vmatprep.subr.bf16.mxu0 %v842
    %1149 = vmatpush1.bf16.msra.mxu0 %v841
    %1150 = vmatprep.subr.bf16.mxu0 %v850
    %1151 = vmatpush1.bf16.msra.mxu0 %v849
    %1152 = vmatprep.subr.bf16.mxu0 %v858
    %1153 = vmatpush1.bf16.msra.mxu0 %v857
    %1154 = vmatprep.subr.bf16.mxu0 %v866
    %1155 = vmatpush1.bf16.msra.mxu0 %v865
    %1156 = vmatprep.subr.bf16.mxu0 %v874
    %1157 = vmatpush1.bf16.msra.mxu0 %v873
    %1158 = vmatprep.mubr.bf16.mxu0 %v192
    %1159 = vmatmul.mubr.bf16.gmra.mrb[0].mxu0 %v191
    %v1160 = vpop.f32.mrb[0].mxu0
    %v1161 = vadd.f32 %v350, %v1160
    %v1162 = vpop.f32.mrb[0].mxu0
    %v1163 = vadd.f32 %v354, %v1162
    %v1164 = vpop.f32.mrb[0].mxu0
    %v1165 = vpop.f32.mrb[0].mxu0
    %1166 = vdwg.mxu0
    %v1167 = vmax.f32 %v1038, 0.0
    %v1168 = vmax.f32 %v1040, 0.0
    %v1169 = vmax.f32 %v1079, 0.0
    %v1170 = vmax.f32 %v1081, 0.0
    %v1171 = vmax.f32 %v1120, 0.0
    %v1172 = vmax.f32 %v1122, 0.0
    %v1173 = vmax.f32 %v1161, 0.0
    %v1174 = vmax.f32 %v1163, 0.0
    %v1175 = vpack.c.bf16 %v1167, %v1167
    %v1176 = vpack.c.bf16 %v1168, %v1168
    %v1177 = vpack.c.bf16 %v1169, %v1169
    %v1178 = vpack.c.bf16 %v1170, %v1170
    %v1179 = vpack.c.bf16 %v1171, %v1171
    %v1180 = vpack.c.bf16 %v1172, %v1172
    %v1181 = vpack.c.bf16 %v1173, %v1173
    %v1182 = vpack.c.bf16 %v1174, %v1174
    %v1183 = vld [vmem:[#allocation11 + $0xa] sm:$0xff]
    %v1184 = vld [vmem:[#allocation8] sm:$0xff]
    %v1185 = vld [vmem:[#allocation8 + $0x8] sm:$0xff]
    %v1186 = vld [vmem:[#allocation8 + $0x10] sm:$0xff]
    %v1187 = vld [vmem:[#allocation8 + $0x18] sm:$0xff]
    %v1188 = vld [vmem:[#allocation8 + $0x20] sm:$0xff]
    %v1189 = vld [vmem:[#allocation8 + $0x28] sm:$0xff]
    %v1190 = vld [vmem:[#allocation8 + $0x30] sm:$0xff]
    %v1191 = vld [vmem:[#allocation8 + $0x38] sm:$0xff]
    %v1192 = vld [vmem:[#allocation8 + $0x40] sm:$0xff]
    %v1193 = vld [vmem:[#allocation8 + $0x48] sm:$0xff]
    %v1194 = vld [vmem:[#allocation8 + $0x50] sm:$0xff]
    %v1195 = vld [vmem:[#allocation8 + $0x58] sm:$0xff]
    %v1196 = vld [vmem:[#allocation8 + $0x60] sm:$0xff]
    %v1197 = vld [vmem:[#allocation8 + $0x68] sm:$0xff]
    %v1198 = vld [vmem:[#allocation8 + $0x70] sm:$0xff]
    %v1199 = vld [vmem:[#allocation8 + $0x78] sm:$0xff]
    %v1200 = vld [vmem:[#allocation8 + $0x80] sm:$0xff]
    %v1201 = vld [vmem:[#allocation8 + $0x88] sm:$0xff]
    %v1202 = vld [vmem:[#allocation8 + $0x90] sm:$0xff]
    %v1203 = vld [vmem:[#allocation8 + $0x98] sm:$0xff]
    %v1204 = vld [vmem:[#allocation8 + $0xa0] sm:$0xff]
    %v1205 = vld [vmem:[#allocation8 + $0xa8] sm:$0xff]
    %v1206 = vld [vmem:[#allocation8 + $0xb0] sm:$0xff]
    %v1207 = vld [vmem:[#allocation8 + $0xb8] sm:$0xff]
    %v1208 = vld [vmem:[#allocation8 + $0xc0] sm:$0xff]
    %v1209 = vld [vmem:[#allocation8 + $0xc8] sm:$0xff]
    %v1210 = vld [vmem:[#allocation8 + $0xd0] sm:$0xff]
    %v1211 = vld [vmem:[#allocation8 + $0xd8] sm:$0xff]
    %v1212 = vld [vmem:[#allocation8 + $0xe0] sm:$0xff]
    %v1213 = vld [vmem:[#allocation8 + $0xe8] sm:$0xff]
    %v1214 = vld [vmem:[#allocation8 + $0xf0] sm:$0xff]
    %v1215 = vld [vmem:[#allocation8 + $0xf8] sm:$0xff]
    %v1216 = vld [vmem:[#allocation8 + $0x100] sm:$0xff]
    %v1217 = vld [vmem:[#allocation8 + $0x108] sm:$0xff]
    %v1218 = vld [vmem:[#allocation8 + $0x110] sm:$0xff]
    %v1219 = vld [vmem:[#allocation8 + $0x118] sm:$0xff]
    %v1220 = vld [vmem:[#allocation8 + $0x120] sm:$0xff]
    %v1221 = vld [vmem:[#allocation8 + $0x128] sm:$0xff]
    %v1222 = vld [vmem:[#allocation8 + $0x130] sm:$0xff]
    %v1223 = vld [vmem:[#allocation8 + $0x138] sm:$0xff]
    %v1224 = vld [vmem:[#allocation8 + $0x140] sm:$0xff]
    %v1225 = vld [vmem:[#allocation8 + $0x148] sm:$0xff]
    %v1226 = vld [vmem:[#allocation8 + $0x150] sm:$0xff]
    %v1227 = vld [vmem:[#allocation8 + $0x158] sm:$0xff]
    %v1228 = vld [vmem:[#allocation8 + $0x160] sm:$0xff]
    %v1229 = vld [vmem:[#allocation8 + $0x168] sm:$0xff]
    %v1230 = vld [vmem:[#allocation8 + $0x170] sm:$0xff]
    %v1231 = vld [vmem:[#allocation8 + $0x178] sm:$0xff]
    %v1232 = vld [vmem:[#allocation8 + $0x180] sm:$0xff]
    %v1233 = vld [vmem:[#allocation8 + $0x188] sm:$0xff]
    %v1234 = vld [vmem:[#allocation8 + $0x190] sm:$0xff]
    %v1235 = vld [vmem:[#allocation8 + $0x198] sm:$0xff]
    %v1236 = vld [vmem:[#allocation8 + $0x1a0] sm:$0xff]
    %v1237 = vld [vmem:[#allocation8 + $0x1a8] sm:$0xff]
    %v1238 = vld [vmem:[#allocation8 + $0x1b0] sm:$0xff]
    %v1239 = vld [vmem:[#allocation8 + $0x1b8] sm:$0xff]
    %v1240 = vld [vmem:[#allocation8 + $0x1c0] sm:$0xff]
    %v1241 = vld [vmem:[#allocation8 + $0x1c8] sm:$0xff]
    %v1242 = vld [vmem:[#allocation8 + $0x1d0] sm:$0xff]
    %v1243 = vld [vmem:[#allocation8 + $0x1d8] sm:$0xff]
    %v1244 = vld [vmem:[#allocation8 + $0x1e0] sm:$0xff]
    %v1245 = vld [vmem:[#allocation8 + $0x1e8] sm:$0xff]
    %v1246 = vld [vmem:[#allocation8 + $0x1f0] sm:$0xff]
    %v1247 = vld [vmem:[#allocation8 + $0x1f8] sm:$0xff]
    %v1248 = vld [vmem:[#allocation8 + $0x200] sm:$0xff]
    %v1249 = vld [vmem:[#allocation8 + $0x208] sm:$0xff]
    %v1250 = vld [vmem:[#allocation8 + $0x210] sm:$0xff]
    %v1251 = vld [vmem:[#allocation8 + $0x218] sm:$0xff]
    %v1252 = vld [vmem:[#allocation8 + $0x220] sm:$0xff]
    %v1253 = vld [vmem:[#allocation8 + $0x228] sm:$0xff]
    %v1254 = vld [vmem:[#allocation8 + $0x230] sm:$0xff]
    %v1255 = vld [vmem:[#allocation8 + $0x238] sm:$0xff]
    %v1256 = vld [vmem:[#allocation8 + $0x240] sm:$0xff]
    %v1257 = vld [vmem:[#allocation8 + $0x248] sm:$0xff]
    %v1258 = vld [vmem:[#allocation8 + $0x250] sm:$0xff]
    %v1259 = vld [vmem:[#allocation8 + $0x258] sm:$0xff]
    %v1260 = vld [vmem:[#allocation8 + $0x260] sm:$0xff]
    %v1261 = vld [vmem:[#allocation8 + $0x268] sm:$0xff]
    %v1262 = vld [vmem:[#allocation8 + $0x270] sm:$0xff]
    %v1263 = vld [vmem:[#allocation8 + $0x278] sm:$0xff]
    %v1264 = vld [vmem:[#allocation8 + $0x280] sm:$0xff]
    %v1265 = vld [vmem:[#allocation8 + $0x288] sm:$0xff]
    %v1266 = vld [vmem:[#allocation8 + $0x290] sm:$0xff]
    %v1267 = vld [vmem:[#allocation8 + $0x298] sm:$0xff]
    %v1268 = vld [vmem:[#allocation8 + $0x2a0] sm:$0xff]
    %v1269 = vld [vmem:[#allocation8 + $0x2a8] sm:$0xff]
    %v1270 = vld [vmem:[#allocation8 + $0x2b0] sm:$0xff]
    %v1271 = vld [vmem:[#allocation8 + $0x2b8] sm:$0xff]
    %v1272 = vld [vmem:[#allocation8 + $0x2c0] sm:$0xff]
    %v1273 = vld [vmem:[#allocation8 + $0x2c8] sm:$0xff]
    %v1274 = vld [vmem:[#allocation8 + $0x2d0] sm:$0xff]
    %v1275 = vld [vmem:[#allocation8 + $0x2d8] sm:$0xff]
    %v1276 = vld [vmem:[#allocation8 + $0x2e0] sm:$0xff]
    %v1277 = vld [vmem:[#allocation8 + $0x2e8] sm:$0xff]
    %v1278 = vld [vmem:[#allocation8 + $0x2f0] sm:$0xff]
    %v1279 = vld [vmem:[#allocation8 + $0x2f8] sm:$0xff]
    %v1280 = vld [vmem:[#allocation8 + $0x300] sm:$0xff]
    %v1281 = vld [vmem:[#allocation8 + $0x308] sm:$0xff]
    %v1282 = vld [vmem:[#allocation8 + $0x310] sm:$0xff]
    %v1283 = vld [vmem:[#allocation8 + $0x318] sm:$0xff]
    %v1284 = vld [vmem:[#allocation8 + $0x320] sm:$0xff]
    %v1285 = vld [vmem:[#allocation8 + $0x328] sm:$0xff]
    %v1286 = vld [vmem:[#allocation8 + $0x330] sm:$0xff]
    %v1287 = vld [vmem:[#allocation8 + $0x338] sm:$0xff]
    %v1288 = vld [vmem:[#allocation8 + $0x340] sm:$0xff]
    %v1289 = vld [vmem:[#allocation8 + $0x348] sm:$0xff]
    %v1290 = vld [vmem:[#allocation8 + $0x350] sm:$0xff]
    %v1291 = vld [vmem:[#allocation8 + $0x358] sm:$0xff]
    %v1292 = vld [vmem:[#allocation8 + $0x360] sm:$0xff]
    %v1293 = vld [vmem:[#allocation8 + $0x368] sm:$0xff]
    %v1294 = vld [vmem:[#allocation8 + $0x370] sm:$0xff]
    %v1295 = vld [vmem:[#allocation8 + $0x378] sm:$0xff]
    %v1296 = vld [vmem:[#allocation8 + $0x380] sm:$0xff]
    %v1297 = vld [vmem:[#allocation8 + $0x388] sm:$0xff]
    %v1298 = vld [vmem:[#allocation8 + $0x390] sm:$0xff]
    %v1299 = vld [vmem:[#allocation8 + $0x398] sm:$0xff]
    %v1300 = vld [vmem:[#allocation8 + $0x3a0] sm:$0xff]
    %v1301 = vld [vmem:[#allocation8 + $0x3a8] sm:$0xff]
    %v1302 = vld [vmem:[#allocation8 + $0x3b0] sm:$0xff]
    %v1303 = vld [vmem:[#allocation8 + $0x3b8] sm:$0xff]
    %v1304 = vld [vmem:[#allocation8 + $0x3c0] sm:$0xff]
    %v1305 = vld [vmem:[#allocation8 + $0x3c8] sm:$0xff]
    %v1306 = vld [vmem:[#allocation8 + $0x3d0] sm:$0xff]
    %v1307 = vld [vmem:[#allocation8 + $0x3d8] sm:$0xff]
    %v1308 = vld [vmem:[#allocation8 + $0x3e0] sm:$0xff]
    %v1309 = vld [vmem:[#allocation8 + $0x3e8] sm:$0xff]
    %v1310 = vld [vmem:[#allocation8 + $0x3f0] sm:$0xff]
    %v1311 = vld [vmem:[#allocation8 + $0x3f8] sm:$0xff]
    %v1312 = vld [vmem:[#allocation8 + $0x400] sm:$0xff]
    %v1313 = vld [vmem:[#allocation8 + $0x408] sm:$0xff]
    %v1314 = vld [vmem:[#allocation8 + $0x410] sm:$0xff]
    %v1315 = vld [vmem:[#allocation8 + $0x418] sm:$0xff]
    %v1316 = vld [vmem:[#allocation8 + $0x420] sm:$0xff]
    %v1317 = vld [vmem:[#allocation8 + $0x428] sm:$0xff]
    %v1318 = vld [vmem:[#allocation8 + $0x430] sm:$0xff]
    %v1319 = vld [vmem:[#allocation8 + $0x438] sm:$0xff]
    %v1320 = vld [vmem:[#allocation8 + $0x440] sm:$0xff]
    %v1321 = vld [vmem:[#allocation8 + $0x448] sm:$0xff]
    %v1322 = vld [vmem:[#allocation8 + $0x450] sm:$0xff]
    %v1323 = vld [vmem:[#allocation8 + $0x458] sm:$0xff]
    %v1324 = vld [vmem:[#allocation8 + $0x460] sm:$0xff]
    %v1325 = vld [vmem:[#allocation8 + $0x468] sm:$0xff]
    %v1326 = vld [vmem:[#allocation8 + $0x470] sm:$0xff]
    %v1327 = vld [vmem:[#allocation8 + $0x478] sm:$0xff]
    %v1328 = vld [vmem:[#allocation8 + $0x480] sm:$0xff]
    %v1329 = vld [vmem:[#allocation8 + $0x488] sm:$0xff]
    %v1330 = vld [vmem:[#allocation8 + $0x490] sm:$0xff]
    %v1331 = vld [vmem:[#allocation8 + $0x498] sm:$0xff]
    %v1332 = vld [vmem:[#allocation8 + $0x4a0] sm:$0xff]
    %v1333 = vld [vmem:[#allocation8 + $0x4a8] sm:$0xff]
    %v1334 = vld [vmem:[#allocation8 + $0x4b0] sm:$0xff]
    %v1335 = vld [vmem:[#allocation8 + $0x4b8] sm:$0xff]
    %v1336 = vld [vmem:[#allocation8 + $0x4c0] sm:$0xff]
    %v1337 = vld [vmem:[#allocation8 + $0x4c8] sm:$0xff]
    %v1338 = vld [vmem:[#allocation8 + $0x4d0] sm:$0xff]
    %v1339 = vld [vmem:[#allocation8 + $0x4d8] sm:$0xff]
    %v1340 = vld [vmem:[#allocation8 + $0x4e0] sm:$0xff]
    %v1341 = vld [vmem:[#allocation8 + $0x4e8] sm:$0xff]
    %v1342 = vld [vmem:[#allocation8 + $0x4f0] sm:$0xff]
    %v1343 = vld [vmem:[#allocation8 + $0x4f8] sm:$0xff]
    %v1344 = vld [vmem:[#allocation8 + $0x500] sm:$0xff]
    %v1345 = vld [vmem:[#allocation8 + $0x508] sm:$0xff]
    %v1346 = vld [vmem:[#allocation8 + $0x510] sm:$0xff]
    %v1347 = vld [vmem:[#allocation8 + $0x518] sm:$0xff]
    %v1348 = vld [vmem:[#allocation8 + $0x520] sm:$0xff]
    %v1349 = vld [vmem:[#allocation8 + $0x528] sm:$0xff]
    %v1350 = vld [vmem:[#allocation8 + $0x530] sm:$0xff]
    %v1351 = vld [vmem:[#allocation8 + $0x538] sm:$0xff]
    %v1352 = vld [vmem:[#allocation8 + $0x540] sm:$0xff]
    %v1353 = vld [vmem:[#allocation8 + $0x548] sm:$0xff]
    %v1354 = vld [vmem:[#allocation8 + $0x550] sm:$0xff]
    %v1355 = vld [vmem:[#allocation8 + $0x558] sm:$0xff]
    %v1356 = vld [vmem:[#allocation8 + $0x560] sm:$0xff]
    %v1357 = vld [vmem:[#allocation8 + $0x568] sm:$0xff]
    %v1358 = vld [vmem:[#allocation8 + $0x570] sm:$0xff]
    %v1359 = vld [vmem:[#allocation8 + $0x578] sm:$0xff]
    %v1360 = vld [vmem:[#allocation8 + $0x580] sm:$0xff]
    %v1361 = vld [vmem:[#allocation8 + $0x588] sm:$0xff]
    %v1362 = vld [vmem:[#allocation8 + $0x590] sm:$0xff]
    %v1363 = vld [vmem:[#allocation8 + $0x598] sm:$0xff]
    %v1364 = vld [vmem:[#allocation8 + $0x5a0] sm:$0xff]
    %v1365 = vld [vmem:[#allocation8 + $0x5a8] sm:$0xff]
    %v1366 = vld [vmem:[#allocation8 + $0x5b0] sm:$0xff]
    %v1367 = vld [vmem:[#allocation8 + $0x5b8] sm:$0xff]
    %v1368 = vld [vmem:[#allocation8 + $0x5c0] sm:$0xff]
    %v1369 = vld [vmem:[#allocation8 + $0x5c8] sm:$0xff]
    %v1370 = vld [vmem:[#allocation8 + $0x5d0] sm:$0xff]
    %v1371 = vld [vmem:[#allocation8 + $0x5d8] sm:$0xff]
    %v1372 = vld [vmem:[#allocation8 + $0x5e0] sm:$0xff]
    %v1373 = vld [vmem:[#allocation8 + $0x5e8] sm:$0xff]
    %v1374 = vld [vmem:[#allocation8 + $0x5f0] sm:$0xff]
    %v1375 = vld [vmem:[#allocation8 + $0x5f8] sm:$0xff]
    %v1376 = vld [vmem:[#allocation8 + $0x600] sm:$0xff]
    %v1377 = vld [vmem:[#allocation8 + $0x608] sm:$0xff]
    %v1378 = vld [vmem:[#allocation8 + $0x610] sm:$0xff]
    %v1379 = vld [vmem:[#allocation8 + $0x618] sm:$0xff]
    %v1380 = vld [vmem:[#allocation8 + $0x620] sm:$0xff]
    %v1381 = vld [vmem:[#allocation8 + $0x628] sm:$0xff]
    %v1382 = vld [vmem:[#allocation8 + $0x630] sm:$0xff]
    %v1383 = vld [vmem:[#allocation8 + $0x638] sm:$0xff]
    %v1384 = vld [vmem:[#allocation8 + $0x640] sm:$0xff]
    %v1385 = vld [vmem:[#allocation8 + $0x648] sm:$0xff]
    %v1386 = vld [vmem:[#allocation8 + $0x650] sm:$0xff]
    %v1387 = vld [vmem:[#allocation8 + $0x658] sm:$0xff]
    %v1388 = vld [vmem:[#allocation8 + $0x660] sm:$0xff]
    %v1389 = vld [vmem:[#allocation8 + $0x668] sm:$0xff]
    %v1390 = vld [vmem:[#allocation8 + $0x670] sm:$0xff]
    %v1391 = vld [vmem:[#allocation8 + $0x678] sm:$0xff]
    %v1392 = vld [vmem:[#allocation8 + $0x680] sm:$0xff]
    %v1393 = vld [vmem:[#allocation8 + $0x688] sm:$0xff]
    %v1394 = vld [vmem:[#allocation8 + $0x690] sm:$0xff]
    %v1395 = vld [vmem:[#allocation8 + $0x698] sm:$0xff]
    %v1396 = vld [vmem:[#allocation8 + $0x6a0] sm:$0xff]
    %v1397 = vld [vmem:[#allocation8 + $0x6a8] sm:$0xff]
    %v1398 = vld [vmem:[#allocation8 + $0x6b0] sm:$0xff]
    %v1399 = vld [vmem:[#allocation8 + $0x6b8] sm:$0xff]
    %v1400 = vld [vmem:[#allocation8 + $0x6c0] sm:$0xff]
    %v1401 = vld [vmem:[#allocation8 + $0x6c8] sm:$0xff]
    %v1402 = vld [vmem:[#allocation8 + $0x6d0] sm:$0xff]
    %v1403 = vld [vmem:[#allocation8 + $0x6d8] sm:$0xff]
    %v1404 = vld [vmem:[#allocation8 + $0x6e0] sm:$0xff]
    %v1405 = vld [vmem:[#allocation8 + $0x6e8] sm:$0xff]
    %v1406 = vld [vmem:[#allocation8 + $0x6f0] sm:$0xff]
    %v1407 = vld [vmem:[#allocation8 + $0x6f8] sm:$0xff]
    %v1408 = vld [vmem:[#allocation8 + $0x700] sm:$0xff]
    %v1409 = vld [vmem:[#allocation8 + $0x708] sm:$0xff]
    %v1410 = vld [vmem:[#allocation8 + $0x710] sm:$0xff]
    %v1411 = vld [vmem:[#allocation8 + $0x718] sm:$0xff]
    %v1412 = vld [vmem:[#allocation8 + $0x720] sm:$0xff]
    %v1413 = vld [vmem:[#allocation8 + $0x728] sm:$0xff]
    %v1414 = vld [vmem:[#allocation8 + $0x730] sm:$0xff]
    %v1415 = vld [vmem:[#allocation8 + $0x738] sm:$0xff]
    %v1416 = vld [vmem:[#allocation8 + $0x740] sm:$0xff]
    %v1417 = vld [vmem:[#allocation8 + $0x748] sm:$0xff]
    %v1418 = vld [vmem:[#allocation8 + $0x750] sm:$0xff]
    %v1419 = vld [vmem:[#allocation8 + $0x758] sm:$0xff]
    %v1420 = vld [vmem:[#allocation8 + $0x760] sm:$0xff]
    %v1421 = vld [vmem:[#allocation8 + $0x768] sm:$0xff]
    %v1422 = vld [vmem:[#allocation8 + $0x770] sm:$0xff]
    %v1423 = vld [vmem:[#allocation8 + $0x778] sm:$0xff]
    %v1424 = vld [vmem:[#allocation8 + $0x780] sm:$0xff]
    %v1425 = vld [vmem:[#allocation8 + $0x788] sm:$0xff]
    %v1426 = vld [vmem:[#allocation8 + $0x790] sm:$0xff]
    %v1427 = vld [vmem:[#allocation8 + $0x798] sm:$0xff]
    %v1428 = vld [vmem:[#allocation8 + $0x7a0] sm:$0xff]
    %v1429 = vld [vmem:[#allocation8 + $0x7a8] sm:$0xff]
    %v1430 = vld [vmem:[#allocation8 + $0x7b0] sm:$0xff]
    %v1431 = vld [vmem:[#allocation8 + $0x7b8] sm:$0xff]
    %v1432 = vld [vmem:[#allocation8 + $0x7c0] sm:$0xff]
    %v1433 = vld [vmem:[#allocation8 + $0x7c8] sm:$0xff]
    %v1434 = vld [vmem:[#allocation8 + $0x7d0] sm:$0xff]
    %v1435 = vld [vmem:[#allocation8 + $0x7d8] sm:$0xff]
    %v1436 = vld [vmem:[#allocation8 + $0x7e0] sm:$0xff]
    %v1437 = vld [vmem:[#allocation8 + $0x7e8] sm:$0xff]
    %v1438 = vld [vmem:[#allocation8 + $0x7f0] sm:$0xff]
    %v1439 = vld [vmem:[#allocation8 + $0x7f8] sm:$0xff]
    %v1440 = vld [vmem:[#allocation8 + $0x800] sm:$0xff]
    %v1441 = vld [vmem:[#allocation8 + $0x808] sm:$0xff]
    %v1442 = vld [vmem:[#allocation8 + $0x810] sm:$0xff]
    %v1443 = vld [vmem:[#allocation8 + $0x818] sm:$0xff]
    %v1444 = vld [vmem:[#allocation8 + $0x820] sm:$0xff]
    %v1445 = vld [vmem:[#allocation8 + $0x828] sm:$0xff]
    %v1446 = vld [vmem:[#allocation8 + $0x830] sm:$0xff]
    %v1447 = vld [vmem:[#allocation8 + $0x838] sm:$0xff]
    %v1448 = vld [vmem:[#allocation8 + $0x840] sm:$0xff]
    %v1449 = vld [vmem:[#allocation8 + $0x848] sm:$0xff]
    %v1450 = vld [vmem:[#allocation8 + $0x850] sm:$0xff]
    %v1451 = vld [vmem:[#allocation8 + $0x858] sm:$0xff]
    %v1452 = vld [vmem:[#allocation8 + $0x860] sm:$0xff]
    %v1453 = vld [vmem:[#allocation8 + $0x868] sm:$0xff]
    %v1454 = vld [vmem:[#allocation8 + $0x870] sm:$0xff]
    %v1455 = vld [vmem:[#allocation8 + $0x878] sm:$0xff]
    %v1456 = vld [vmem:[#allocation8 + $0x880] sm:$0xff]
    %v1457 = vld [vmem:[#allocation8 + $0x888] sm:$0xff]
    %v1458 = vld [vmem:[#allocation8 + $0x890] sm:$0xff]
    %v1459 = vld [vmem:[#allocation8 + $0x898] sm:$0xff]
    %v1460 = vld [vmem:[#allocation8 + $0x8a0] sm:$0xff]
    %v1461 = vld [vmem:[#allocation8 + $0x8a8] sm:$0xff]
    %v1462 = vld [vmem:[#allocation8 + $0x8b0] sm:$0xff]
    %v1463 = vld [vmem:[#allocation8 + $0x8b8] sm:$0xff]
    %v1464 = vld [vmem:[#allocation8 + $0x8c0] sm:$0xff]
    %v1465 = vld [vmem:[#allocation8 + $0x8c8] sm:$0xff]
    %v1466 = vld [vmem:[#allocation8 + $0x8d0] sm:$0xff]
    %v1467 = vld [vmem:[#allocation8 + $0x8d8] sm:$0xff]
    %v1468 = vld [vmem:[#allocation8 + $0x8e0] sm:$0xff]
    %v1469 = vld [vmem:[#allocation8 + $0x8e8] sm:$0xff]
    %v1470 = vld [vmem:[#allocation8 + $0x8f0] sm:$0xff]
    %v1471 = vld [vmem:[#allocation8 + $0x8f8] sm:$0xff]
    %v1472 = vld [vmem:[#allocation8 + $0x900] sm:$0xff]
    %v1473 = vld [vmem:[#allocation8 + $0x908] sm:$0xff]
    %v1474 = vld [vmem:[#allocation8 + $0x910] sm:$0xff]
    %v1475 = vld [vmem:[#allocation8 + $0x918] sm:$0xff]
    %v1476 = vld [vmem:[#allocation8 + $0x920] sm:$0xff]
    %v1477 = vld [vmem:[#allocation8 + $0x928] sm:$0xff]
    %v1478 = vld [vmem:[#allocation8 + $0x930] sm:$0xff]
    %v1479 = vld [vmem:[#allocation8 + $0x938] sm:$0xff]
    %v1480 = vld [vmem:[#allocation8 + $0x940] sm:$0xff]
    %v1481 = vld [vmem:[#allocation8 + $0x948] sm:$0xff]
    %v1482 = vld [vmem:[#allocation8 + $0x950] sm:$0xff]
    %v1483 = vld [vmem:[#allocation8 + $0x958] sm:$0xff]
    %v1484 = vld [vmem:[#allocation8 + $0x960] sm:$0xff]
    %v1485 = vld [vmem:[#allocation8 + $0x968] sm:$0xff]
    %v1486 = vld [vmem:[#allocation8 + $0x970] sm:$0xff]
    %v1487 = vld [vmem:[#allocation8 + $0x978] sm:$0xff]
    %v1488 = vld [vmem:[#allocation8 + $0x980] sm:$0xff]
    %v1489 = vld [vmem:[#allocation8 + $0x988] sm:$0xff]
    %v1490 = vld [vmem:[#allocation8 + $0x990] sm:$0xff]
    %v1491 = vld [vmem:[#allocation8 + $0x998] sm:$0xff]
    %v1492 = vld [vmem:[#allocation8 + $0x9a0] sm:$0xff]
    %v1493 = vld [vmem:[#allocation8 + $0x9a8] sm:$0xff]
    %v1494 = vld [vmem:[#allocation8 + $0x9b0] sm:$0xff]
    %v1495 = vld [vmem:[#allocation8 + $0x9b8] sm:$0xff]
    %v1496 = vld [vmem:[#allocation8 + $0x9c0] sm:$0xff]
    %v1497 = vld [vmem:[#allocation8 + $0x9c8] sm:$0xff]
    %v1498 = vld [vmem:[#allocation8 + $0x9d0] sm:$0xff]
    %v1499 = vld [vmem:[#allocation8 + $0x9d8] sm:$0xff]
    %v1500 = vld [vmem:[#allocation8 + $0x9e0] sm:$0xff]
    %v1501 = vld [vmem:[#allocation8 + $0x9e8] sm:$0xff]
    %v1502 = vld [vmem:[#allocation8 + $0x9f0] sm:$0xff]
    %v1503 = vld [vmem:[#allocation8 + $0x9f8] sm:$0xff]
    %v1504 = vld [vmem:[#allocation8 + $0xa00] sm:$0xff]
    %v1505 = vld [vmem:[#allocation8 + $0xa08] sm:$0xff]
    %v1506 = vld [vmem:[#allocation8 + $0xa10] sm:$0xff]
    %v1507 = vld [vmem:[#allocation8 + $0xa18] sm:$0xff]
    %v1508 = vld [vmem:[#allocation8 + $0xa20] sm:$0xff]
    %v1509 = vld [vmem:[#allocation8 + $0xa28] sm:$0xff]
    %v1510 = vld [vmem:[#allocation8 + $0xa30] sm:$0xff]
    %v1511 = vld [vmem:[#allocation8 + $0xa38] sm:$0xff]
    %v1512 = vld [vmem:[#allocation8 + $0xa40] sm:$0xff]
    %v1513 = vld [vmem:[#allocation8 + $0xa48] sm:$0xff]
    %v1514 = vld [vmem:[#allocation8 + $0xa50] sm:$0xff]
    %v1515 = vld [vmem:[#allocation8 + $0xa58] sm:$0xff]
    %v1516 = vld [vmem:[#allocation8 + $0xa60] sm:$0xff]
    %v1517 = vld [vmem:[#allocation8 + $0xa68] sm:$0xff]
    %v1518 = vld [vmem:[#allocation8 + $0xa70] sm:$0xff]
    %v1519 = vld [vmem:[#allocation8 + $0xa78] sm:$0xff]
    %v1520 = vld [vmem:[#allocation8 + $0xa80] sm:$0xff]
    %v1521 = vld [vmem:[#allocation8 + $0xa88] sm:$0xff]
    %v1522 = vld [vmem:[#allocation8 + $0xa90] sm:$0xff]
    %v1523 = vld [vmem:[#allocation8 + $0xa98] sm:$0xff]
    %v1524 = vld [vmem:[#allocation8 + $0xaa0] sm:$0xff]
    %v1525 = vld [vmem:[#allocation8 + $0xaa8] sm:$0xff]
    %v1526 = vld [vmem:[#allocation8 + $0xab0] sm:$0xff]
    %v1527 = vld [vmem:[#allocation8 + $0xab8] sm:$0xff]
    %v1528 = vld [vmem:[#allocation8 + $0xac0] sm:$0xff]
    %v1529 = vld [vmem:[#allocation8 + $0xac8] sm:$0xff]
    %v1530 = vld [vmem:[#allocation8 + $0xad0] sm:$0xff]
    %v1531 = vld [vmem:[#allocation8 + $0xad8] sm:$0xff]
    %v1532 = vld [vmem:[#allocation8 + $0xae0] sm:$0xff]
    %v1533 = vld [vmem:[#allocation8 + $0xae8] sm:$0xff]
    %v1534 = vld [vmem:[#allocation8 + $0xaf0] sm:$0xff]
    %v1535 = vld [vmem:[#allocation8 + $0xaf8] sm:$0xff]
    %v1536 = vld [vmem:[#allocation8 + $0xb00] sm:$0xff]
    %v1537 = vld [vmem:[#allocation8 + $0xb08] sm:$0xff]
    %v1538 = vld [vmem:[#allocation8 + $0xb10] sm:$0xff]
    %v1539 = vld [vmem:[#allocation8 + $0xb18] sm:$0xff]
    %v1540 = vld [vmem:[#allocation8 + $0xb20] sm:$0xff]
    %v1541 = vld [vmem:[#allocation8 + $0xb28] sm:$0xff]
    %v1542 = vld [vmem:[#allocation8 + $0xb30] sm:$0xff]
    %v1543 = vld [vmem:[#allocation8 + $0xb38] sm:$0xff]
    %v1544 = vld [vmem:[#allocation8 + $0xb40] sm:$0xff]
    %v1545 = vld [vmem:[#allocation8 + $0xb48] sm:$0xff]
    %v1546 = vld [vmem:[#allocation8 + $0xb50] sm:$0xff]
    %v1547 = vld [vmem:[#allocation8 + $0xb58] sm:$0xff]
    %v1548 = vld [vmem:[#allocation8 + $0xb60] sm:$0xff]
    %v1549 = vld [vmem:[#allocation8 + $0xb68] sm:$0xff]
    %v1550 = vld [vmem:[#allocation8 + $0xb70] sm:$0xff]
    %v1551 = vld [vmem:[#allocation8 + $0xb78] sm:$0xff]
    %v1552 = vld [vmem:[#allocation8 + $0xb80] sm:$0xff]
    %v1553 = vld [vmem:[#allocation8 + $0xb88] sm:$0xff]
    %v1554 = vld [vmem:[#allocation8 + $0xb90] sm:$0xff]
    %v1555 = vld [vmem:[#allocation8 + $0xb98] sm:$0xff]
    %v1556 = vld [vmem:[#allocation8 + $0xba0] sm:$0xff]
    %v1557 = vld [vmem:[#allocation8 + $0xba8] sm:$0xff]
    %v1558 = vld [vmem:[#allocation8 + $0xbb0] sm:$0xff]
    %v1559 = vld [vmem:[#allocation8 + $0xbb8] sm:$0xff]
    %v1560 = vld [vmem:[#allocation8 + $0xbc0] sm:$0xff]
    %v1561 = vld [vmem:[#allocation8 + $0xbc8] sm:$0xff]
    %v1562 = vld [vmem:[#allocation8 + $0xbd0] sm:$0xff]
    %v1563 = vld [vmem:[#allocation8 + $0xbd8] sm:$0xff]
    %v1564 = vld [vmem:[#allocation8 + $0xbe0] sm:$0xff]
    %v1565 = vld [vmem:[#allocation8 + $0xbe8] sm:$0xff]
    %v1566 = vld [vmem:[#allocation8 + $0xbf0] sm:$0xff]
    %v1567 = vld [vmem:[#allocation8 + $0xbf8] sm:$0xff]
    %v1568 = vld [vmem:[#allocation8 + $0xc00] sm:$0xff]
    %v1569 = vld [vmem:[#allocation8 + $0xc08] sm:$0xff]
    %v1570 = vld [vmem:[#allocation8 + $0xc10] sm:$0xff]
    %v1571 = vld [vmem:[#allocation8 + $0xc18] sm:$0xff]
    %v1572 = vld [vmem:[#allocation8 + $0xc20] sm:$0xff]
    %v1573 = vld [vmem:[#allocation8 + $0xc28] sm:$0xff]
    %v1574 = vld [vmem:[#allocation8 + $0xc30] sm:$0xff]
    %v1575 = vld [vmem:[#allocation8 + $0xc38] sm:$0xff]
    %v1576 = vld [vmem:[#allocation8 + $0xc40] sm:$0xff]
    %v1577 = vld [vmem:[#allocation8 + $0xc48] sm:$0xff]
    %v1578 = vld [vmem:[#allocation8 + $0xc50] sm:$0xff]
    %v1579 = vld [vmem:[#allocation8 + $0xc58] sm:$0xff]
    %v1580 = vld [vmem:[#allocation8 + $0xc60] sm:$0xff]
    %v1581 = vld [vmem:[#allocation8 + $0xc68] sm:$0xff]
    %v1582 = vld [vmem:[#allocation8 + $0xc70] sm:$0xff]
    %v1583 = vld [vmem:[#allocation8 + $0xc78] sm:$0xff]
    %v1584 = vld [vmem:[#allocation8 + $0xc80] sm:$0xff]
    %v1585 = vld [vmem:[#allocation8 + $0xc88] sm:$0xff]
    %v1586 = vld [vmem:[#allocation8 + $0xc90] sm:$0xff]
    %v1587 = vld [vmem:[#allocation8 + $0xc98] sm:$0xff]
    %v1588 = vld [vmem:[#allocation8 + $0xca0] sm:$0xff]
    %v1589 = vld [vmem:[#allocation8 + $0xca8] sm:$0xff]
    %v1590 = vld [vmem:[#allocation8 + $0xcb0] sm:$0xff]
    %v1591 = vld [vmem:[#allocation8 + $0xcb8] sm:$0xff]
    %v1592 = vld [vmem:[#allocation8 + $0xcc0] sm:$0xff]
    %v1593 = vld [vmem:[#allocation8 + $0xcc8] sm:$0xff]
    %v1594 = vld [vmem:[#allocation8 + $0xcd0] sm:$0xff]
    %v1595 = vld [vmem:[#allocation8 + $0xcd8] sm:$0xff]
    %v1596 = vld [vmem:[#allocation8 + $0xce0] sm:$0xff]
    %v1597 = vld [vmem:[#allocation8 + $0xce8] sm:$0xff]
    %v1598 = vld [vmem:[#allocation8 + $0xcf0] sm:$0xff]
    %v1599 = vld [vmem:[#allocation8 + $0xcf8] sm:$0xff]
    %v1600 = vld [vmem:[#allocation8 + $0xd00] sm:$0xff]
    %v1601 = vld [vmem:[#allocation8 + $0xd08] sm:$0xff]
    %v1602 = vld [vmem:[#allocation8 + $0xd10] sm:$0xff]
    %v1603 = vld [vmem:[#allocation8 + $0xd18] sm:$0xff]
    %v1604 = vld [vmem:[#allocation8 + $0xd20] sm:$0xff]
    %v1605 = vld [vmem:[#allocation8 + $0xd28] sm:$0xff]
    %v1606 = vld [vmem:[#allocation8 + $0xd30] sm:$0xff]
    %v1607 = vld [vmem:[#allocation8 + $0xd38] sm:$0xff]
    %v1608 = vld [vmem:[#allocation8 + $0xd40] sm:$0xff]
    %v1609 = vld [vmem:[#allocation8 + $0xd48] sm:$0xff]
    %v1610 = vld [vmem:[#allocation8 + $0xd50] sm:$0xff]
    %v1611 = vld [vmem:[#allocation8 + $0xd58] sm:$0xff]
    %v1612 = vld [vmem:[#allocation8 + $0xd60] sm:$0xff]
    %v1613 = vld [vmem:[#allocation8 + $0xd68] sm:$0xff]
    %v1614 = vld [vmem:[#allocation8 + $0xd70] sm:$0xff]
    %v1615 = vld [vmem:[#allocation8 + $0xd78] sm:$0xff]
    %v1616 = vld [vmem:[#allocation8 + $0xd80] sm:$0xff]
    %v1617 = vld [vmem:[#allocation8 + $0xd88] sm:$0xff]
    %v1618 = vld [vmem:[#allocation8 + $0xd90] sm:$0xff]
    %v1619 = vld [vmem:[#allocation8 + $0xd98] sm:$0xff]
    %v1620 = vld [vmem:[#allocation8 + $0xda0] sm:$0xff]
    %v1621 = vld [vmem:[#allocation8 + $0xda8] sm:$0xff]
    %v1622 = vld [vmem:[#allocation8 + $0xdb0] sm:$0xff]
    %v1623 = vld [vmem:[#allocation8 + $0xdb8] sm:$0xff]
    %v1624 = vld [vmem:[#allocation8 + $0xdc0] sm:$0xff]
    %v1625 = vld [vmem:[#allocation8 + $0xdc8] sm:$0xff]
    %v1626 = vld [vmem:[#allocation8 + $0xdd0] sm:$0xff]
    %v1627 = vld [vmem:[#allocation8 + $0xdd8] sm:$0xff]
    %v1628 = vld [vmem:[#allocation8 + $0xde0] sm:$0xff]
    %v1629 = vld [vmem:[#allocation8 + $0xde8] sm:$0xff]
    %v1630 = vld [vmem:[#allocation8 + $0xdf0] sm:$0xff]
    %v1631 = vld [vmem:[#allocation8 + $0xdf8] sm:$0xff]
    %v1632 = vld [vmem:[#allocation8 + $0xe00] sm:$0xff]
    %v1633 = vld [vmem:[#allocation8 + $0xe08] sm:$0xff]
    %v1634 = vld [vmem:[#allocation8 + $0xe10] sm:$0xff]
    %v1635 = vld [vmem:[#allocation8 + $0xe18] sm:$0xff]
    %v1636 = vld [vmem:[#allocation8 + $0xe20] sm:$0xff]
    %v1637 = vld [vmem:[#allocation8 + $0xe28] sm:$0xff]
    %v1638 = vld [vmem:[#allocation8 + $0xe30] sm:$0xff]
    %v1639 = vld [vmem:[#allocation8 + $0xe38] sm:$0xff]
    %v1640 = vld [vmem:[#allocation8 + $0xe40] sm:$0xff]
    %v1641 = vld [vmem:[#allocation8 + $0xe48] sm:$0xff]
    %v1642 = vld [vmem:[#allocation8 + $0xe50] sm:$0xff]
    %v1643 = vld [vmem:[#allocation8 + $0xe58] sm:$0xff]
    %v1644 = vld [vmem:[#allocation8 + $0xe60] sm:$0xff]
    %v1645 = vld [vmem:[#allocation8 + $0xe68] sm:$0xff]
    %v1646 = vld [vmem:[#allocation8 + $0xe70] sm:$0xff]
    %v1647 = vld [vmem:[#allocation8 + $0xe78] sm:$0xff]
    %v1648 = vld [vmem:[#allocation8 + $0xe80] sm:$0xff]
    %v1649 = vld [vmem:[#allocation8 + $0xe88] sm:$0xff]
    %v1650 = vld [vmem:[#allocation8 + $0xe90] sm:$0xff]
    %v1651 = vld [vmem:[#allocation8 + $0xe98] sm:$0xff]
    %v1652 = vld [vmem:[#allocation8 + $0xea0] sm:$0xff]
    %v1653 = vld [vmem:[#allocation8 + $0xea8] sm:$0xff]
    %v1654 = vld [vmem:[#allocation8 + $0xeb0] sm:$0xff]
    %v1655 = vld [vmem:[#allocation8 + $0xeb8] sm:$0xff]
    %v1656 = vld [vmem:[#allocation8 + $0xec0] sm:$0xff]
    %v1657 = vld [vmem:[#allocation8 + $0xec8] sm:$0xff]
    %v1658 = vld [vmem:[#allocation8 + $0xed0] sm:$0xff]
    %v1659 = vld [vmem:[#allocation8 + $0xed8] sm:$0xff]
    %v1660 = vld [vmem:[#allocation8 + $0xee0] sm:$0xff]
    %v1661 = vld [vmem:[#allocation8 + $0xee8] sm:$0xff]
    %v1662 = vld [vmem:[#allocation8 + $0xef0] sm:$0xff]
    %v1663 = vld [vmem:[#allocation8 + $0xef8] sm:$0xff]
    %v1664 = vld [vmem:[#allocation8 + $0xf00] sm:$0xff]
    %v1665 = vld [vmem:[#allocation8 + $0xf08] sm:$0xff]
    %v1666 = vld [vmem:[#allocation8 + $0xf10] sm:$0xff]
    %v1667 = vld [vmem:[#allocation8 + $0xf18] sm:$0xff]
    %v1668 = vld [vmem:[#allocation8 + $0xf20] sm:$0xff]
    %v1669 = vld [vmem:[#allocation8 + $0xf28] sm:$0xff]
    %v1670 = vld [vmem:[#allocation8 + $0xf30] sm:$0xff]
    %v1671 = vld [vmem:[#allocation8 + $0xf38] sm:$0xff]
    %v1672 = vld [vmem:[#allocation8 + $0xf40] sm:$0xff]
    %v1673 = vld [vmem:[#allocation8 + $0xf48] sm:$0xff]
    %v1674 = vld [vmem:[#allocation8 + $0xf50] sm:$0xff]
    %v1675 = vld [vmem:[#allocation8 + $0xf58] sm:$0xff]
    %v1676 = vld [vmem:[#allocation8 + $0xf60] sm:$0xff]
    %v1677 = vld [vmem:[#allocation8 + $0xf68] sm:$0xff]
    %v1678 = vld [vmem:[#allocation8 + $0xf70] sm:$0xff]
    %v1679 = vld [vmem:[#allocation8 + $0xf78] sm:$0xff]
    %v1680 = vld [vmem:[#allocation8 + $0xf80] sm:$0xff]
    %v1681 = vld [vmem:[#allocation8 + $0xf88] sm:$0xff]
    %v1682 = vld [vmem:[#allocation8 + $0xf90] sm:$0xff]
    %v1683 = vld [vmem:[#allocation8 + $0xf98] sm:$0xff]
    %v1684 = vld [vmem:[#allocation8 + $0xfa0] sm:$0xff]
    %v1685 = vld [vmem:[#allocation8 + $0xfa8] sm:$0xff]
    %v1686 = vld [vmem:[#allocation8 + $0xfb0] sm:$0xff]
    %v1687 = vld [vmem:[#allocation8 + $0xfb8] sm:$0xff]
    %v1688 = vld [vmem:[#allocation8 + $0xfc0] sm:$0xff]
    %v1689 = vld [vmem:[#allocation8 + $0xfc8] sm:$0xff]
    %v1690 = vld [vmem:[#allocation8 + $0xfd0] sm:$0xff]
    %v1691 = vld [vmem:[#allocation8 + $0xfd8] sm:$0xff]
    %v1692 = vld [vmem:[#allocation8 + $0xfe0] sm:$0xff]
    %v1693 = vld [vmem:[#allocation8 + $0xfe8] sm:$0xff]
    %v1694 = vld [vmem:[#allocation8 + $0xff0] sm:$0xff]
    %v1695 = vld [vmem:[#allocation8 + $0xff8] sm:$0xff]
    %v1697 = vlaneseq
    %v1698 = vshrl.u32 %v1697, 7
    %v1699 = vsub.s32 0, %v1698
    %v1700 = vrot.slane %v1183, %v1699
    %v1701 = vlaneseq
    %v1702 = vshrl.u32 %v1701, 7
    %v1703 = vsub.s32 1, %v1702
    %v1704 = vrot.slane %v1183, %v1703
    %v1705 = vlaneseq
    %v1706 = vshrl.u32 %v1705, 7
    %v1707 = vsub.s32 2, %v1706
    %v1708 = vrot.slane %v1183, %v1707
    %v1709 = vlaneseq
    %v1710 = vshrl.u32 %v1709, 7
    %v1711 = vsub.s32 3, %v1710
    %v1712 = vrot.slane %v1183, %v1711
    %v1713 = vlaneseq
    %v1714 = vshrl.u32 %v1713, 7
    %v1715 = vsub.s32 4, %v1714
    %v1716 = vrot.slane %v1183, %v1715
    %v1717 = vlaneseq
    %v1718 = vshrl.u32 %v1717, 7
    %v1719 = vsub.s32 5, %v1718
    %v1720 = vrot.slane %v1183, %v1719
    %v1721 = vlaneseq
    %v1722 = vshrl.u32 %v1721, 7
    %v1723 = vsub.s32 6, %v1722
    %v1724 = vrot.slane %v1183, %v1723
    %v1725 = vlaneseq
    %v1726 = vshrl.u32 %v1725, 7
    %v1727 = vsub.s32 7, %v1726
    %v1728 = vrot.slane %v1183, %v1727
    %v2249 = vunpack.c.l.b16 %v1184
    %v2250 = vunpack.c.h.b16 %v1184
    %v2251 = vunpack.c.l.b16 %v1185
    %v2252 = vunpack.c.h.b16 %v1185
    %v2253 = vunpack.c.l.b16 %v1186
    %v2254 = vunpack.c.h.b16 %v1186
    %v2255 = vunpack.c.l.b16 %v1187
    %v2256 = vunpack.c.h.b16 %v1187
    %v2257 = vunpack.c.l.b16 %v1188
    %v2258 = vunpack.c.h.b16 %v1188
    %v2259 = vunpack.c.l.b16 %v1189
    %v2260 = vunpack.c.h.b16 %v1189
    %v2261 = vunpack.c.l.b16 %v1190
    %v2262 = vunpack.c.h.b16 %v1190
    %v2263 = vunpack.c.l.b16 %v1191
    %v2264 = vunpack.c.h.b16 %v1191
    %v2265 = vunpack.c.l.b16 %v1192
    %v2266 = vunpack.c.h.b16 %v1192
    %v2267 = vunpack.c.l.b16 %v1193
    %v2268 = vunpack.c.h.b16 %v1193
    %v2269 = vunpack.c.l.b16 %v1194
    %v2270 = vunpack.c.h.b16 %v1194
    %v2271 = vunpack.c.l.b16 %v1195
    %v2272 = vunpack.c.h.b16 %v1195
    %v2273 = vunpack.c.l.b16 %v1196
    %v2274 = vunpack.c.h.b16 %v1196
    %v2275 = vunpack.c.l.b16 %v1197
    %v2276 = vunpack.c.h.b16 %v1197
    %v2277 = vunpack.c.l.b16 %v1198
    %v2278 = vunpack.c.h.b16 %v1198
    %v2279 = vunpack.c.l.b16 %v1199
    %v2280 = vunpack.c.h.b16 %v1199
    %v2281 = vunpack.c.l.b16 %v1200
    %v2282 = vunpack.c.h.b16 %v1200
    %v2283 = vunpack.c.l.b16 %v1201
    %v2284 = vunpack.c.h.b16 %v1201
    %v2285 = vunpack.c.l.b16 %v1202
    %v2286 = vunpack.c.h.b16 %v1202
    %v2287 = vunpack.c.l.b16 %v1203
    %v2288 = vunpack.c.h.b16 %v1203
    %v2289 = vunpack.c.l.b16 %v1204
    %v2290 = vunpack.c.h.b16 %v1204
    %v2291 = vunpack.c.l.b16 %v1205
    %v2292 = vunpack.c.h.b16 %v1205
    %v2293 = vunpack.c.l.b16 %v1206
    %v2294 = vunpack.c.h.b16 %v1206
    %v2295 = vunpack.c.l.b16 %v1207
    %v2296 = vunpack.c.h.b16 %v1207
    %v2297 = vunpack.c.l.b16 %v1208
    %v2298 = vunpack.c.h.b16 %v1208
    %v2299 = vunpack.c.l.b16 %v1209
    %v2300 = vunpack.c.h.b16 %v1209
    %v2301 = vunpack.c.l.b16 %v1210
    %v2302 = vunpack.c.h.b16 %v1210
    %v2303 = vunpack.c.l.b16 %v1211
    %v2304 = vunpack.c.h.b16 %v1211
    %v2305 = vunpack.c.l.b16 %v1212
    %v2306 = vunpack.c.h.b16 %v1212
    %v2307 = vunpack.c.l.b16 %v1213
    %v2308 = vunpack.c.h.b16 %v1213
    %v2309 = vunpack.c.l.b16 %v1214
    %v2310 = vunpack.c.h.b16 %v1214
    %v2311 = vunpack.c.l.b16 %v1215
    %v2312 = vunpack.c.h.b16 %v1215
    %v2313 = vunpack.c.l.b16 %v1216
    %v2314 = vunpack.c.h.b16 %v1216
    %v2315 = vunpack.c.l.b16 %v1217
    %v2316 = vunpack.c.h.b16 %v1217
    %v2317 = vunpack.c.l.b16 %v1218
    %v2318 = vunpack.c.h.b16 %v1218
    %v2319 = vunpack.c.l.b16 %v1219
    %v2320 = vunpack.c.h.b16 %v1219
    %v2321 = vunpack.c.l.b16 %v1220
    %v2322 = vunpack.c.h.b16 %v1220
    %v2323 = vunpack.c.l.b16 %v1221
    %v2324 = vunpack.c.h.b16 %v1221
    %v2325 = vunpack.c.l.b16 %v1222
    %v2326 = vunpack.c.h.b16 %v1222
    %v2327 = vunpack.c.l.b16 %v1223
    %v2328 = vunpack.c.h.b16 %v1223
    %v2329 = vunpack.c.l.b16 %v1224
    %v2330 = vunpack.c.h.b16 %v1224
    %v2331 = vunpack.c.l.b16 %v1225
    %v2332 = vunpack.c.h.b16 %v1225
    %v2333 = vunpack.c.l.b16 %v1226
    %v2334 = vunpack.c.h.b16 %v1226
    %v2335 = vunpack.c.l.b16 %v1227
    %v2336 = vunpack.c.h.b16 %v1227
    %v2337 = vunpack.c.l.b16 %v1228
    %v2338 = vunpack.c.h.b16 %v1228
    %v2339 = vunpack.c.l.b16 %v1229
    %v2340 = vunpack.c.h.b16 %v1229
    %v2341 = vunpack.c.l.b16 %v1230
    %v2342 = vunpack.c.h.b16 %v1230
    %v2343 = vunpack.c.l.b16 %v1231
    %v2344 = vunpack.c.h.b16 %v1231
    %v2345 = vunpack.c.l.b16 %v1232
    %v2346 = vunpack.c.h.b16 %v1232
    %v2347 = vunpack.c.l.b16 %v1233
    %v2348 = vunpack.c.h.b16 %v1233
    %v2349 = vunpack.c.l.b16 %v1234
    %v2350 = vunpack.c.h.b16 %v1234
    %v2351 = vunpack.c.l.b16 %v1235
    %v2352 = vunpack.c.h.b16 %v1235
    %v2353 = vunpack.c.l.b16 %v1236
    %v2354 = vunpack.c.h.b16 %v1236
    %v2355 = vunpack.c.l.b16 %v1237
    %v2356 = vunpack.c.h.b16 %v1237
    %v2357 = vunpack.c.l.b16 %v1238
    %v2358 = vunpack.c.h.b16 %v1238
    %v2359 = vunpack.c.l.b16 %v1239
    %v2360 = vunpack.c.h.b16 %v1239
    %v2361 = vunpack.c.l.b16 %v1240
    %v2362 = vunpack.c.h.b16 %v1240
    %v2363 = vunpack.c.l.b16 %v1241
    %v2364 = vunpack.c.h.b16 %v1241
    %v2365 = vunpack.c.l.b16 %v1242
    %v2366 = vunpack.c.h.b16 %v1242
    %v2367 = vunpack.c.l.b16 %v1243
    %v2368 = vunpack.c.h.b16 %v1243
    %v2369 = vunpack.c.l.b16 %v1244
    %v2370 = vunpack.c.h.b16 %v1244
    %v2371 = vunpack.c.l.b16 %v1245
    %v2372 = vunpack.c.h.b16 %v1245
    %v2373 = vunpack.c.l.b16 %v1246
    %v2374 = vunpack.c.h.b16 %v1246
    %v2375 = vunpack.c.l.b16 %v1247
    %v2376 = vunpack.c.h.b16 %v1247
    %v2377 = vunpack.c.l.b16 %v1248
    %v2378 = vunpack.c.h.b16 %v1248
    %v2379 = vunpack.c.l.b16 %v1249
    %v2380 = vunpack.c.h.b16 %v1249
    %v2381 = vunpack.c.l.b16 %v1250
    %v2382 = vunpack.c.h.b16 %v1250
    %v2383 = vunpack.c.l.b16 %v1251
    %v2384 = vunpack.c.h.b16 %v1251
    %v2385 = vunpack.c.l.b16 %v1252
    %v2386 = vunpack.c.h.b16 %v1252
    %v2387 = vunpack.c.l.b16 %v1253
    %v2388 = vunpack.c.h.b16 %v1253
    %v2389 = vunpack.c.l.b16 %v1254
    %v2390 = vunpack.c.h.b16 %v1254
    %v2391 = vunpack.c.l.b16 %v1255
    %v2392 = vunpack.c.h.b16 %v1255
    %v2393 = vunpack.c.l.b16 %v1256
    %v2394 = vunpack.c.h.b16 %v1256
    %v2395 = vunpack.c.l.b16 %v1257
    %v2396 = vunpack.c.h.b16 %v1257
    %v2397 = vunpack.c.l.b16 %v1258
    %v2398 = vunpack.c.h.b16 %v1258
    %v2399 = vunpack.c.l.b16 %v1259
    %v2400 = vunpack.c.h.b16 %v1259
    %v2401 = vunpack.c.l.b16 %v1260
    %v2402 = vunpack.c.h.b16 %v1260
    %v2403 = vunpack.c.l.b16 %v1261
    %v2404 = vunpack.c.h.b16 %v1261
    %v2405 = vunpack.c.l.b16 %v1262
    %v2406 = vunpack.c.h.b16 %v1262
    %v2407 = vunpack.c.l.b16 %v1263
    %v2408 = vunpack.c.h.b16 %v1263
    %v2409 = vunpack.c.l.b16 %v1264
    %v2410 = vunpack.c.h.b16 %v1264
    %v2411 = vunpack.c.l.b16 %v1265
    %v2412 = vunpack.c.h.b16 %v1265
    %v2413 = vunpack.c.l.b16 %v1266
    %v2414 = vunpack.c.h.b16 %v1266
    %v2415 = vunpack.c.l.b16 %v1267
    %v2416 = vunpack.c.h.b16 %v1267
    %v2417 = vunpack.c.l.b16 %v1268
    %v2418 = vunpack.c.h.b16 %v1268
    %v2419 = vunpack.c.l.b16 %v1269
    %v2420 = vunpack.c.h.b16 %v1269
    %v2421 = vunpack.c.l.b16 %v1270
    %v2422 = vunpack.c.h.b16 %v1270
    %v2423 = vunpack.c.l.b16 %v1271
    %v2424 = vunpack.c.h.b16 %v1271
    %v2425 = vunpack.c.l.b16 %v1272
    %v2426 = vunpack.c.h.b16 %v1272
    %v2427 = vunpack.c.l.b16 %v1273
    %v2428 = vunpack.c.h.b16 %v1273
    %v2429 = vunpack.c.l.b16 %v1274
    %v2430 = vunpack.c.h.b16 %v1274
    %v2431 = vunpack.c.l.b16 %v1275
    %v2432 = vunpack.c.h.b16 %v1275
    %v2433 = vunpack.c.l.b16 %v1276
    %v2434 = vunpack.c.h.b16 %v1276
    %v2435 = vunpack.c.l.b16 %v1277
    %v2436 = vunpack.c.h.b16 %v1277
    %v2437 = vunpack.c.l.b16 %v1278
    %v2438 = vunpack.c.h.b16 %v1278
    %v2439 = vunpack.c.l.b16 %v1279
    %v2440 = vunpack.c.h.b16 %v1279
    %v2441 = vunpack.c.l.b16 %v1280
    %v2442 = vunpack.c.h.b16 %v1280
    %v2443 = vunpack.c.l.b16 %v1281
    %v2444 = vunpack.c.h.b16 %v1281
    %v2445 = vunpack.c.l.b16 %v1282
    %v2446 = vunpack.c.h.b16 %v1282
    %v2447 = vunpack.c.l.b16 %v1283
    %v2448 = vunpack.c.h.b16 %v1283
    %v2449 = vunpack.c.l.b16 %v1284
    %v2450 = vunpack.c.h.b16 %v1284
    %v2451 = vunpack.c.l.b16 %v1285
    %v2452 = vunpack.c.h.b16 %v1285
    %v2453 = vunpack.c.l.b16 %v1286
    %v2454 = vunpack.c.h.b16 %v1286
    %v2455 = vunpack.c.l.b16 %v1287
    %v2456 = vunpack.c.h.b16 %v1287
    %v2457 = vunpack.c.l.b16 %v1288
    %v2458 = vunpack.c.h.b16 %v1288
    %v2459 = vunpack.c.l.b16 %v1289
    %v2460 = vunpack.c.h.b16 %v1289
    %v2461 = vunpack.c.l.b16 %v1290
    %v2462 = vunpack.c.h.b16 %v1290
    %v2463 = vunpack.c.l.b16 %v1291
    %v2464 = vunpack.c.h.b16 %v1291
    %v2465 = vunpack.c.l.b16 %v1292
    %v2466 = vunpack.c.h.b16 %v1292
    %v2467 = vunpack.c.l.b16 %v1293
    %v2468 = vunpack.c.h.b16 %v1293
    %v2469 = vunpack.c.l.b16 %v1294
    %v2470 = vunpack.c.h.b16 %v1294
    %v2471 = vunpack.c.l.b16 %v1295
    %v2472 = vunpack.c.h.b16 %v1295
    %v2473 = vunpack.c.l.b16 %v1296
    %v2474 = vunpack.c.h.b16 %v1296
    %v2475 = vunpack.c.l.b16 %v1297
    %v2476 = vunpack.c.h.b16 %v1297
    %v2477 = vunpack.c.l.b16 %v1298
    %v2478 = vunpack.c.h.b16 %v1298
    %v2479 = vunpack.c.l.b16 %v1299
    %v2480 = vunpack.c.h.b16 %v1299
    %v2481 = vunpack.c.l.b16 %v1300
    %v2482 = vunpack.c.h.b16 %v1300
    %v2483 = vunpack.c.l.b16 %v1301
    %v2484 = vunpack.c.h.b16 %v1301
    %v2485 = vunpack.c.l.b16 %v1302
    %v2486 = vunpack.c.h.b16 %v1302
    %v2487 = vunpack.c.l.b16 %v1303
    %v2488 = vunpack.c.h.b16 %v1303
    %v2489 = vunpack.c.l.b16 %v1304
    %v2490 = vunpack.c.h.b16 %v1304
    %v2491 = vunpack.c.l.b16 %v1305
    %v2492 = vunpack.c.h.b16 %v1305
    %v2493 = vunpack.c.l.b16 %v1306
    %v2494 = vunpack.c.h.b16 %v1306
    %v2495 = vunpack.c.l.b16 %v1307
    %v2496 = vunpack.c.h.b16 %v1307
    %v2497 = vunpack.c.l.b16 %v1308
    %v2498 = vunpack.c.h.b16 %v1308
    %v2499 = vunpack.c.l.b16 %v1309
    %v2500 = vunpack.c.h.b16 %v1309
    %v2501 = vunpack.c.l.b16 %v1310
    %v2502 = vunpack.c.h.b16 %v1310
    %v2503 = vunpack.c.l.b16 %v1311
    %v2504 = vunpack.c.h.b16 %v1311
    %v2505 = vunpack.c.l.b16 %v1312
    %v2506 = vunpack.c.h.b16 %v1312
    %v2507 = vunpack.c.l.b16 %v1313
    %v2508 = vunpack.c.h.b16 %v1313
    %v2509 = vunpack.c.l.b16 %v1314
    %v2510 = vunpack.c.h.b16 %v1314
    %v2511 = vunpack.c.l.b16 %v1315
    %v2512 = vunpack.c.h.b16 %v1315
    %v2513 = vunpack.c.l.b16 %v1316
    %v2514 = vunpack.c.h.b16 %v1316
    %v2515 = vunpack.c.l.b16 %v1317
    %v2516 = vunpack.c.h.b16 %v1317
    %v2517 = vunpack.c.l.b16 %v1318
    %v2518 = vunpack.c.h.b16 %v1318
    %v2519 = vunpack.c.l.b16 %v1319
    %v2520 = vunpack.c.h.b16 %v1319
    %v2521 = vunpack.c.l.b16 %v1320
    %v2522 = vunpack.c.h.b16 %v1320
    %v2523 = vunpack.c.l.b16 %v1321
    %v2524 = vunpack.c.h.b16 %v1321
    %v2525 = vunpack.c.l.b16 %v1322
    %v2526 = vunpack.c.h.b16 %v1322
    %v2527 = vunpack.c.l.b16 %v1323
    %v2528 = vunpack.c.h.b16 %v1323
    %v2529 = vunpack.c.l.b16 %v1324
    %v2530 = vunpack.c.h.b16 %v1324
    %v2531 = vunpack.c.l.b16 %v1325
    %v2532 = vunpack.c.h.b16 %v1325
    %v2533 = vunpack.c.l.b16 %v1326
    %v2534 = vunpack.c.h.b16 %v1326
    %v2535 = vunpack.c.l.b16 %v1327
    %v2536 = vunpack.c.h.b16 %v1327
    %v2537 = vunpack.c.l.b16 %v1328
    %v2538 = vunpack.c.h.b16 %v1328
    %v2539 = vunpack.c.l.b16 %v1329
    %v2540 = vunpack.c.h.b16 %v1329
    %v2541 = vunpack.c.l.b16 %v1330
    %v2542 = vunpack.c.h.b16 %v1330
    %v2543 = vunpack.c.l.b16 %v1331
    %v2544 = vunpack.c.h.b16 %v1331
    %v2545 = vunpack.c.l.b16 %v1332
    %v2546 = vunpack.c.h.b16 %v1332
    %v2547 = vunpack.c.l.b16 %v1333
    %v2548 = vunpack.c.h.b16 %v1333
    %v2549 = vunpack.c.l.b16 %v1334
    %v2550 = vunpack.c.h.b16 %v1334
    %v2551 = vunpack.c.l.b16 %v1335
    %v2552 = vunpack.c.h.b16 %v1335
    %v2553 = vunpack.c.l.b16 %v1336
    %v2554 = vunpack.c.h.b16 %v1336
    %v2555 = vunpack.c.l.b16 %v1337
    %v2556 = vunpack.c.h.b16 %v1337
    %v2557 = vunpack.c.l.b16 %v1338
    %v2558 = vunpack.c.h.b16 %v1338
    %v2559 = vunpack.c.l.b16 %v1339
    %v2560 = vunpack.c.h.b16 %v1339
    %v2561 = vunpack.c.l.b16 %v1340
    %v2562 = vunpack.c.h.b16 %v1340
    %v2563 = vunpack.c.l.b16 %v1341
    %v2564 = vunpack.c.h.b16 %v1341
    %v2565 = vunpack.c.l.b16 %v1342
    %v2566 = vunpack.c.h.b16 %v1342
    %v2567 = vunpack.c.l.b16 %v1343
    %v2568 = vunpack.c.h.b16 %v1343
    %v2569 = vunpack.c.l.b16 %v1344
    %v2570 = vunpack.c.h.b16 %v1344
    %v2571 = vunpack.c.l.b16 %v1345
    %v2572 = vunpack.c.h.b16 %v1345
    %v2573 = vunpack.c.l.b16 %v1346
    %v2574 = vunpack.c.h.b16 %v1346
    %v2575 = vunpack.c.l.b16 %v1347
    %v2576 = vunpack.c.h.b16 %v1347
    %v2577 = vunpack.c.l.b16 %v1348
    %v2578 = vunpack.c.h.b16 %v1348
    %v2579 = vunpack.c.l.b16 %v1349
    %v2580 = vunpack.c.h.b16 %v1349
    %v2581 = vunpack.c.l.b16 %v1350
    %v2582 = vunpack.c.h.b16 %v1350
    %v2583 = vunpack.c.l.b16 %v1351
    %v2584 = vunpack.c.h.b16 %v1351
    %v2585 = vunpack.c.l.b16 %v1352
    %v2586 = vunpack.c.h.b16 %v1352
    %v2587 = vunpack.c.l.b16 %v1353
    %v2588 = vunpack.c.h.b16 %v1353
    %v2589 = vunpack.c.l.b16 %v1354
    %v2590 = vunpack.c.h.b16 %v1354
    %v2591 = vunpack.c.l.b16 %v1355
    %v2592 = vunpack.c.h.b16 %v1355
    %v2593 = vunpack.c.l.b16 %v1356
    %v2594 = vunpack.c.h.b16 %v1356
    %v2595 = vunpack.c.l.b16 %v1357
    %v2596 = vunpack.c.h.b16 %v1357
    %v2597 = vunpack.c.l.b16 %v1358
    %v2598 = vunpack.c.h.b16 %v1358
    %v2599 = vunpack.c.l.b16 %v1359
    %v2600 = vunpack.c.h.b16 %v1359
    %v2601 = vunpack.c.l.b16 %v1360
    %v2602 = vunpack.c.h.b16 %v1360
    %v2603 = vunpack.c.l.b16 %v1361
    %v2604 = vunpack.c.h.b16 %v1361
    %v2605 = vunpack.c.l.b16 %v1362
    %v2606 = vunpack.c.h.b16 %v1362
    %v2607 = vunpack.c.l.b16 %v1363
    %v2608 = vunpack.c.h.b16 %v1363
    %v2609 = vunpack.c.l.b16 %v1364
    %v2610 = vunpack.c.h.b16 %v1364
    %v2611 = vunpack.c.l.b16 %v1365
    %v2612 = vunpack.c.h.b16 %v1365
    %v2613 = vunpack.c.l.b16 %v1366
    %v2614 = vunpack.c.h.b16 %v1366
    %v2615 = vunpack.c.l.b16 %v1367
    %v2616 = vunpack.c.h.b16 %v1367
    %v2617 = vunpack.c.l.b16 %v1368
    %v2618 = vunpack.c.h.b16 %v1368
    %v2619 = vunpack.c.l.b16 %v1369
    %v2620 = vunpack.c.h.b16 %v1369
    %v2621 = vunpack.c.l.b16 %v1370
    %v2622 = vunpack.c.h.b16 %v1370
    %v2623 = vunpack.c.l.b16 %v1371
    %v2624 = vunpack.c.h.b16 %v1371
    %v2625 = vunpack.c.l.b16 %v1372
    %v2626 = vunpack.c.h.b16 %v1372
    %v2627 = vunpack.c.l.b16 %v1373
    %v2628 = vunpack.c.h.b16 %v1373
    %v2629 = vunpack.c.l.b16 %v1374
    %v2630 = vunpack.c.h.b16 %v1374
    %v2631 = vunpack.c.l.b16 %v1375
    %v2632 = vunpack.c.h.b16 %v1375
    %v2633 = vunpack.c.l.b16 %v1376
    %v2634 = vunpack.c.h.b16 %v1376
    %v2635 = vunpack.c.l.b16 %v1377
    %v2636 = vunpack.c.h.b16 %v1377
    %v2637 = vunpack.c.l.b16 %v1378
    %v2638 = vunpack.c.h.b16 %v1378
    %v2639 = vunpack.c.l.b16 %v1379
    %v2640 = vunpack.c.h.b16 %v1379
    %v2641 = vunpack.c.l.b16 %v1380
    %v2642 = vunpack.c.h.b16 %v1380
    %v2643 = vunpack.c.l.b16 %v1381
    %v2644 = vunpack.c.h.b16 %v1381
    %v2645 = vunpack.c.l.b16 %v1382
    %v2646 = vunpack.c.h.b16 %v1382
    %v2647 = vunpack.c.l.b16 %v1383
    %v2648 = vunpack.c.h.b16 %v1383
    %v2649 = vunpack.c.l.b16 %v1384
    %v2650 = vunpack.c.h.b16 %v1384
    %v2651 = vunpack.c.l.b16 %v1385
    %v2652 = vunpack.c.h.b16 %v1385
    %v2653 = vunpack.c.l.b16 %v1386
    %v2654 = vunpack.c.h.b16 %v1386
    %v2655 = vunpack.c.l.b16 %v1387
    %v2656 = vunpack.c.h.b16 %v1387
    %v2657 = vunpack.c.l.b16 %v1388
    %v2658 = vunpack.c.h.b16 %v1388
    %v2659 = vunpack.c.l.b16 %v1389
    %v2660 = vunpack.c.h.b16 %v1389
    %v2661 = vunpack.c.l.b16 %v1390
    %v2662 = vunpack.c.h.b16 %v1390
    %v2663 = vunpack.c.l.b16 %v1391
    %v2664 = vunpack.c.h.b16 %v1391
    %v2665 = vunpack.c.l.b16 %v1392
    %v2666 = vunpack.c.h.b16 %v1392
    %v2667 = vunpack.c.l.b16 %v1393
    %v2668 = vunpack.c.h.b16 %v1393
    %v2669 = vunpack.c.l.b16 %v1394
    %v2670 = vunpack.c.h.b16 %v1394
    %v2671 = vunpack.c.l.b16 %v1395
    %v2672 = vunpack.c.h.b16 %v1395
    %v2673 = vunpack.c.l.b16 %v1396
    %v2674 = vunpack.c.h.b16 %v1396
    %v2675 = vunpack.c.l.b16 %v1397
    %v2676 = vunpack.c.h.b16 %v1397
    %v2677 = vunpack.c.l.b16 %v1398
    %v2678 = vunpack.c.h.b16 %v1398
    %v2679 = vunpack.c.l.b16 %v1399
    %v2680 = vunpack.c.h.b16 %v1399
    %v2681 = vunpack.c.l.b16 %v1400
    %v2682 = vunpack.c.h.b16 %v1400
    %v2683 = vunpack.c.l.b16 %v1401
    %v2684 = vunpack.c.h.b16 %v1401
    %v2685 = vunpack.c.l.b16 %v1402
    %v2686 = vunpack.c.h.b16 %v1402
    %v2687 = vunpack.c.l.b16 %v1403
    %v2688 = vunpack.c.h.b16 %v1403
    %v2689 = vunpack.c.l.b16 %v1404
    %v2690 = vunpack.c.h.b16 %v1404
    %v2691 = vunpack.c.l.b16 %v1405
    %v2692 = vunpack.c.h.b16 %v1405
    %v2693 = vunpack.c.l.b16 %v1406
    %v2694 = vunpack.c.h.b16 %v1406
    %v2695 = vunpack.c.l.b16 %v1407
    %v2696 = vunpack.c.h.b16 %v1407
    %v2697 = vunpack.c.l.b16 %v1408
    %v2698 = vunpack.c.h.b16 %v1408
    %v2699 = vunpack.c.l.b16 %v1409
    %v2700 = vunpack.c.h.b16 %v1409
    %v2701 = vunpack.c.l.b16 %v1410
    %v2702 = vunpack.c.h.b16 %v1410
    %v2703 = vunpack.c.l.b16 %v1411
    %v2704 = vunpack.c.h.b16 %v1411
    %v2705 = vunpack.c.l.b16 %v1412
    %v2706 = vunpack.c.h.b16 %v1412
    %v2707 = vunpack.c.l.b16 %v1413
    %v2708 = vunpack.c.h.b16 %v1413
    %v2709 = vunpack.c.l.b16 %v1414
    %v2710 = vunpack.c.h.b16 %v1414
    %v2711 = vunpack.c.l.b16 %v1415
    %v2712 = vunpack.c.h.b16 %v1415
    %v2713 = vunpack.c.l.b16 %v1416
    %v2714 = vunpack.c.h.b16 %v1416
    %v2715 = vunpack.c.l.b16 %v1417
    %v2716 = vunpack.c.h.b16 %v1417
    %v2717 = vunpack.c.l.b16 %v1418
    %v2718 = vunpack.c.h.b16 %v1418
    %v2719 = vunpack.c.l.b16 %v1419
    %v2720 = vunpack.c.h.b16 %v1419
    %v2721 = vunpack.c.l.b16 %v1420
    %v2722 = vunpack.c.h.b16 %v1420
    %v2723 = vunpack.c.l.b16 %v1421
    %v2724 = vunpack.c.h.b16 %v1421
    %v2725 = vunpack.c.l.b16 %v1422
    %v2726 = vunpack.c.h.b16 %v1422
    %v2727 = vunpack.c.l.b16 %v1423
    %v2728 = vunpack.c.h.b16 %v1423
    %v2729 = vunpack.c.l.b16 %v1424
    %v2730 = vunpack.c.h.b16 %v1424
    %v2731 = vunpack.c.l.b16 %v1425
    %v2732 = vunpack.c.h.b16 %v1425
    %v2733 = vunpack.c.l.b16 %v1426
    %v2734 = vunpack.c.h.b16 %v1426
    %v2735 = vunpack.c.l.b16 %v1427
    %v2736 = vunpack.c.h.b16 %v1427
    %v2737 = vunpack.c.l.b16 %v1428
    %v2738 = vunpack.c.h.b16 %v1428
    %v2739 = vunpack.c.l.b16 %v1429
    %v2740 = vunpack.c.h.b16 %v1429
    %v2741 = vunpack.c.l.b16 %v1430
    %v2742 = vunpack.c.h.b16 %v1430
    %v2743 = vunpack.c.l.b16 %v1431
    %v2744 = vunpack.c.h.b16 %v1431
    %v2745 = vunpack.c.l.b16 %v1432
    %v2746 = vunpack.c.h.b16 %v1432
    %v2747 = vunpack.c.l.b16 %v1433
    %v2748 = vunpack.c.h.b16 %v1433
    %v2749 = vunpack.c.l.b16 %v1434
    %v2750 = vunpack.c.h.b16 %v1434
    %v2751 = vunpack.c.l.b16 %v1435
    %v2752 = vunpack.c.h.b16 %v1435
    %v2753 = vunpack.c.l.b16 %v1436
    %v2754 = vunpack.c.h.b16 %v1436
    %v2755 = vunpack.c.l.b16 %v1437
    %v2756 = vunpack.c.h.b16 %v1437
    %v2757 = vunpack.c.l.b16 %v1438
    %v2758 = vunpack.c.h.b16 %v1438
    %v2759 = vunpack.c.l.b16 %v1439
    %v2760 = vunpack.c.h.b16 %v1439
    %v2761 = vunpack.c.l.b16 %v1440
    %v2762 = vunpack.c.h.b16 %v1440
    %v2763 = vunpack.c.l.b16 %v1441
    %v2764 = vunpack.c.h.b16 %v1441
    %v2765 = vunpack.c.l.b16 %v1442
    %v2766 = vunpack.c.h.b16 %v1442
    %v2767 = vunpack.c.l.b16 %v1443
    %v2768 = vunpack.c.h.b16 %v1443
    %v2769 = vunpack.c.l.b16 %v1444
    %v2770 = vunpack.c.h.b16 %v1444
    %v2771 = vunpack.c.l.b16 %v1445
    %v2772 = vunpack.c.h.b16 %v1445
    %v2773 = vunpack.c.l.b16 %v1446
    %v2774 = vunpack.c.h.b16 %v1446
    %v2775 = vunpack.c.l.b16 %v1447
    %v2776 = vunpack.c.h.b16 %v1447
    %v2777 = vunpack.c.l.b16 %v1448
    %v2778 = vunpack.c.h.b16 %v1448
    %v2779 = vunpack.c.l.b16 %v1449
    %v2780 = vunpack.c.h.b16 %v1449
    %v2781 = vunpack.c.l.b16 %v1450
    %v2782 = vunpack.c.h.b16 %v1450
    %v2783 = vunpack.c.l.b16 %v1451
    %v2784 = vunpack.c.h.b16 %v1451
    %v2785 = vunpack.c.l.b16 %v1452
    %v2786 = vunpack.c.h.b16 %v1452
    %v2787 = vunpack.c.l.b16 %v1453
    %v2788 = vunpack.c.h.b16 %v1453
    %v2789 = vunpack.c.l.b16 %v1454
    %v2790 = vunpack.c.h.b16 %v1454
    %v2791 = vunpack.c.l.b16 %v1455
    %v2792 = vunpack.c.h.b16 %v1455
    %v2793 = vunpack.c.l.b16 %v1456
    %v2794 = vunpack.c.h.b16 %v1456
    %v2795 = vunpack.c.l.b16 %v1457
    %v2796 = vunpack.c.h.b16 %v1457
    %v2797 = vunpack.c.l.b16 %v1458
    %v2798 = vunpack.c.h.b16 %v1458
    %v2799 = vunpack.c.l.b16 %v1459
    %v2800 = vunpack.c.h.b16 %v1459
    %v2801 = vunpack.c.l.b16 %v1460
    %v2802 = vunpack.c.h.b16 %v1460
    %v2803 = vunpack.c.l.b16 %v1461
    %v2804 = vunpack.c.h.b16 %v1461
    %v2805 = vunpack.c.l.b16 %v1462
    %v2806 = vunpack.c.h.b16 %v1462
    %v2807 = vunpack.c.l.b16 %v1463
    %v2808 = vunpack.c.h.b16 %v1463
    %v2809 = vunpack.c.l.b16 %v1464
    %v2810 = vunpack.c.h.b16 %v1464
    %v2811 = vunpack.c.l.b16 %v1465
    %v2812 = vunpack.c.h.b16 %v1465
    %v2813 = vunpack.c.l.b16 %v1466
    %v2814 = vunpack.c.h.b16 %v1466
    %v2815 = vunpack.c.l.b16 %v1467
    %v2816 = vunpack.c.h.b16 %v1467
    %v2817 = vunpack.c.l.b16 %v1468
    %v2818 = vunpack.c.h.b16 %v1468
    %v2819 = vunpack.c.l.b16 %v1469
    %v2820 = vunpack.c.h.b16 %v1469
    %v2821 = vunpack.c.l.b16 %v1470
    %v2822 = vunpack.c.h.b16 %v1470
    %v2823 = vunpack.c.l.b16 %v1471
    %v2824 = vunpack.c.h.b16 %v1471
    %v2825 = vunpack.c.l.b16 %v1472
    %v2826 = vunpack.c.h.b16 %v1472
    %v2827 = vunpack.c.l.b16 %v1473
    %v2828 = vunpack.c.h.b16 %v1473
    %v2829 = vunpack.c.l.b16 %v1474
    %v2830 = vunpack.c.h.b16 %v1474
    %v2831 = vunpack.c.l.b16 %v1475
    %v2832 = vunpack.c.h.b16 %v1475
    %v2833 = vunpack.c.l.b16 %v1476
    %v2834 = vunpack.c.h.b16 %v1476
    %v2835 = vunpack.c.l.b16 %v1477
    %v2836 = vunpack.c.h.b16 %v1477
    %v2837 = vunpack.c.l.b16 %v1478
    %v2838 = vunpack.c.h.b16 %v1478
    %v2839 = vunpack.c.l.b16 %v1479
    %v2840 = vunpack.c.h.b16 %v1479
    %v2841 = vunpack.c.l.b16 %v1480
    %v2842 = vunpack.c.h.b16 %v1480
    %v2843 = vunpack.c.l.b16 %v1481
    %v2844 = vunpack.c.h.b16 %v1481
    %v2845 = vunpack.c.l.b16 %v1482
    %v2846 = vunpack.c.h.b16 %v1482
    %v2847 = vunpack.c.l.b16 %v1483
    %v2848 = vunpack.c.h.b16 %v1483
    %v2849 = vunpack.c.l.b16 %v1484
    %v2850 = vunpack.c.h.b16 %v1484
    %v2851 = vunpack.c.l.b16 %v1485
    %v2852 = vunpack.c.h.b16 %v1485
    %v2853 = vunpack.c.l.b16 %v1486
    %v2854 = vunpack.c.h.b16 %v1486
    %v2855 = vunpack.c.l.b16 %v1487
    %v2856 = vunpack.c.h.b16 %v1487
    %v2857 = vunpack.c.l.b16 %v1488
    %v2858 = vunpack.c.h.b16 %v1488
    %v2859 = vunpack.c.l.b16 %v1489
    %v2860 = vunpack.c.h.b16 %v1489
    %v2861 = vunpack.c.l.b16 %v1490
    %v2862 = vunpack.c.h.b16 %v1490
    %v2863 = vunpack.c.l.b16 %v1491
    %v2864 = vunpack.c.h.b16 %v1491
    %v2865 = vunpack.c.l.b16 %v1492
    %v2866 = vunpack.c.h.b16 %v1492
    %v2867 = vunpack.c.l.b16 %v1493
    %v2868 = vunpack.c.h.b16 %v1493
    %v2869 = vunpack.c.l.b16 %v1494
    %v2870 = vunpack.c.h.b16 %v1494
    %v2871 = vunpack.c.l.b16 %v1495
    %v2872 = vunpack.c.h.b16 %v1495
    %v2873 = vunpack.c.l.b16 %v1496
    %v2874 = vunpack.c.h.b16 %v1496
    %v2875 = vunpack.c.l.b16 %v1497
    %v2876 = vunpack.c.h.b16 %v1497
    %v2877 = vunpack.c.l.b16 %v1498
    %v2878 = vunpack.c.h.b16 %v1498
    %v2879 = vunpack.c.l.b16 %v1499
    %v2880 = vunpack.c.h.b16 %v1499
    %v2881 = vunpack.c.l.b16 %v1500
    %v2882 = vunpack.c.h.b16 %v1500
    %v2883 = vunpack.c.l.b16 %v1501
    %v2884 = vunpack.c.h.b16 %v1501
    %v2885 = vunpack.c.l.b16 %v1502
    %v2886 = vunpack.c.h.b16 %v1502
    %v2887 = vunpack.c.l.b16 %v1503
    %v2888 = vunpack.c.h.b16 %v1503
    %v2889 = vunpack.c.l.b16 %v1504
    %v2890 = vunpack.c.h.b16 %v1504
    %v2891 = vunpack.c.l.b16 %v1505
    %v2892 = vunpack.c.h.b16 %v1505
    %v2893 = vunpack.c.l.b16 %v1506
    %v2894 = vunpack.c.h.b16 %v1506
    %v2895 = vunpack.c.l.b16 %v1507
    %v2896 = vunpack.c.h.b16 %v1507
    %v2897 = vunpack.c.l.b16 %v1508
    %v2898 = vunpack.c.h.b16 %v1508
    %v2899 = vunpack.c.l.b16 %v1509
    %v2900 = vunpack.c.h.b16 %v1509
    %v2901 = vunpack.c.l.b16 %v1510
    %v2902 = vunpack.c.h.b16 %v1510
    %v2903 = vunpack.c.l.b16 %v1511
    %v2904 = vunpack.c.h.b16 %v1511
    %v2905 = vunpack.c.l.b16 %v1512
    %v2906 = vunpack.c.h.b16 %v1512
    %v2907 = vunpack.c.l.b16 %v1513
    %v2908 = vunpack.c.h.b16 %v1513
    %v2909 = vunpack.c.l.b16 %v1514
    %v2910 = vunpack.c.h.b16 %v1514
    %v2911 = vunpack.c.l.b16 %v1515
    %v2912 = vunpack.c.h.b16 %v1515
    %v2913 = vunpack.c.l.b16 %v1516
    %v2914 = vunpack.c.h.b16 %v1516
    %v2915 = vunpack.c.l.b16 %v1517
    %v2916 = vunpack.c.h.b16 %v1517
    %v2917 = vunpack.c.l.b16 %v1518
    %v2918 = vunpack.c.h.b16 %v1518
    %v2919 = vunpack.c.l.b16 %v1519
    %v2920 = vunpack.c.h.b16 %v1519
    %v2921 = vunpack.c.l.b16 %v1520
    %v2922 = vunpack.c.h.b16 %v1520
    %v2923 = vunpack.c.l.b16 %v1521
    %v2924 = vunpack.c.h.b16 %v1521
    %v2925 = vunpack.c.l.b16 %v1522
    %v2926 = vunpack.c.h.b16 %v1522
    %v2927 = vunpack.c.l.b16 %v1523
    %v2928 = vunpack.c.h.b16 %v1523
    %v2929 = vunpack.c.l.b16 %v1524
    %v2930 = vunpack.c.h.b16 %v1524
    %v2931 = vunpack.c.l.b16 %v1525
    %v2932 = vunpack.c.h.b16 %v1525
    %v2933 = vunpack.c.l.b16 %v1526
    %v2934 = vunpack.c.h.b16 %v1526
    %v2935 = vunpack.c.l.b16 %v1527
    %v2936 = vunpack.c.h.b16 %v1527
    %v2937 = vunpack.c.l.b16 %v1528
    %v2938 = vunpack.c.h.b16 %v1528
    %v2939 = vunpack.c.l.b16 %v1529
    %v2940 = vunpack.c.h.b16 %v1529
    %v2941 = vunpack.c.l.b16 %v1530
    %v2942 = vunpack.c.h.b16 %v1530
    %v2943 = vunpack.c.l.b16 %v1531
    %v2944 = vunpack.c.h.b16 %v1531
    %v2945 = vunpack.c.l.b16 %v1532
    %v2946 = vunpack.c.h.b16 %v1532
    %v2947 = vunpack.c.l.b16 %v1533
    %v2948 = vunpack.c.h.b16 %v1533
    %v2949 = vunpack.c.l.b16 %v1534
    %v2950 = vunpack.c.h.b16 %v1534
    %v2951 = vunpack.c.l.b16 %v1535
    %v2952 = vunpack.c.h.b16 %v1535
    %v2953 = vunpack.c.l.b16 %v1536
    %v2954 = vunpack.c.h.b16 %v1536
    %v2955 = vunpack.c.l.b16 %v1537
    %v2956 = vunpack.c.h.b16 %v1537
    %v2957 = vunpack.c.l.b16 %v1538
    %v2958 = vunpack.c.h.b16 %v1538
    %v2959 = vunpack.c.l.b16 %v1539
    %v2960 = vunpack.c.h.b16 %v1539
    %v2961 = vunpack.c.l.b16 %v1540
    %v2962 = vunpack.c.h.b16 %v1540
    %v2963 = vunpack.c.l.b16 %v1541
    %v2964 = vunpack.c.h.b16 %v1541
    %v2965 = vunpack.c.l.b16 %v1542
    %v2966 = vunpack.c.h.b16 %v1542
    %v2967 = vunpack.c.l.b16 %v1543
    %v2968 = vunpack.c.h.b16 %v1543
    %v2969 = vunpack.c.l.b16 %v1544
    %v2970 = vunpack.c.h.b16 %v1544
    %v2971 = vunpack.c.l.b16 %v1545
    %v2972 = vunpack.c.h.b16 %v1545
    %v2973 = vunpack.c.l.b16 %v1546
    %v2974 = vunpack.c.h.b16 %v1546
    %v2975 = vunpack.c.l.b16 %v1547
    %v2976 = vunpack.c.h.b16 %v1547
    %v2977 = vunpack.c.l.b16 %v1548
    %v2978 = vunpack.c.h.b16 %v1548
    %v2979 = vunpack.c.l.b16 %v1549
    %v2980 = vunpack.c.h.b16 %v1549
    %v2981 = vunpack.c.l.b16 %v1550
    %v2982 = vunpack.c.h.b16 %v1550
    %v2983 = vunpack.c.l.b16 %v1551
    %v2984 = vunpack.c.h.b16 %v1551
    %v2985 = vunpack.c.l.b16 %v1552
    %v2986 = vunpack.c.h.b16 %v1552
    %v2987 = vunpack.c.l.b16 %v1553
    %v2988 = vunpack.c.h.b16 %v1553
    %v2989 = vunpack.c.l.b16 %v1554
    %v2990 = vunpack.c.h.b16 %v1554
    %v2991 = vunpack.c.l.b16 %v1555
    %v2992 = vunpack.c.h.b16 %v1555
    %v2993 = vunpack.c.l.b16 %v1556
    %v2994 = vunpack.c.h.b16 %v1556
    %v2995 = vunpack.c.l.b16 %v1557
    %v2996 = vunpack.c.h.b16 %v1557
    %v2997 = vunpack.c.l.b16 %v1558
    %v2998 = vunpack.c.h.b16 %v1558
    %v2999 = vunpack.c.l.b16 %v1559
    %v3000 = vunpack.c.h.b16 %v1559
    %v3001 = vunpack.c.l.b16 %v1560
    %v3002 = vunpack.c.h.b16 %v1560
    %v3003 = vunpack.c.l.b16 %v1561
    %v3004 = vunpack.c.h.b16 %v1561
    %v3005 = vunpack.c.l.b16 %v1562
    %v3006 = vunpack.c.h.b16 %v1562
    %v3007 = vunpack.c.l.b16 %v1563
    %v3008 = vunpack.c.h.b16 %v1563
    %v3009 = vunpack.c.l.b16 %v1564
    %v3010 = vunpack.c.h.b16 %v1564
    %v3011 = vunpack.c.l.b16 %v1565
    %v3012 = vunpack.c.h.b16 %v1565
    %v3013 = vunpack.c.l.b16 %v1566
    %v3014 = vunpack.c.h.b16 %v1566
    %v3015 = vunpack.c.l.b16 %v1567
    %v3016 = vunpack.c.h.b16 %v1567
    %v3017 = vunpack.c.l.b16 %v1568
    %v3018 = vunpack.c.h.b16 %v1568
    %v3019 = vunpack.c.l.b16 %v1569
    %v3020 = vunpack.c.h.b16 %v1569
    %v3021 = vunpack.c.l.b16 %v1570
    %v3022 = vunpack.c.h.b16 %v1570
    %v3023 = vunpack.c.l.b16 %v1571
    %v3024 = vunpack.c.h.b16 %v1571
    %v3025 = vunpack.c.l.b16 %v1572
    %v3026 = vunpack.c.h.b16 %v1572
    %v3027 = vunpack.c.l.b16 %v1573
    %v3028 = vunpack.c.h.b16 %v1573
    %v3029 = vunpack.c.l.b16 %v1574
    %v3030 = vunpack.c.h.b16 %v1574
    %v3031 = vunpack.c.l.b16 %v1575
    %v3032 = vunpack.c.h.b16 %v1575
    %v3033 = vunpack.c.l.b16 %v1576
    %v3034 = vunpack.c.h.b16 %v1576
    %v3035 = vunpack.c.l.b16 %v1577
    %v3036 = vunpack.c.h.b16 %v1577
    %v3037 = vunpack.c.l.b16 %v1578
    %v3038 = vunpack.c.h.b16 %v1578
    %v3039 = vunpack.c.l.b16 %v1579
    %v3040 = vunpack.c.h.b16 %v1579
    %v3041 = vunpack.c.l.b16 %v1580
    %v3042 = vunpack.c.h.b16 %v1580
    %v3043 = vunpack.c.l.b16 %v1581
    %v3044 = vunpack.c.h.b16 %v1581
    %v3045 = vunpack.c.l.b16 %v1582
    %v3046 = vunpack.c.h.b16 %v1582
    %v3047 = vunpack.c.l.b16 %v1583
    %v3048 = vunpack.c.h.b16 %v1583
    %v3049 = vunpack.c.l.b16 %v1584
    %v3050 = vunpack.c.h.b16 %v1584
    %v3051 = vunpack.c.l.b16 %v1585
    %v3052 = vunpack.c.h.b16 %v1585
    %v3053 = vunpack.c.l.b16 %v1586
    %v3054 = vunpack.c.h.b16 %v1586
    %v3055 = vunpack.c.l.b16 %v1587
    %v3056 = vunpack.c.h.b16 %v1587
    %v3057 = vunpack.c.l.b16 %v1588
    %v3058 = vunpack.c.h.b16 %v1588
    %v3059 = vunpack.c.l.b16 %v1589
    %v3060 = vunpack.c.h.b16 %v1589
    %v3061 = vunpack.c.l.b16 %v1590
    %v3062 = vunpack.c.h.b16 %v1590
    %v3063 = vunpack.c.l.b16 %v1591
    %v3064 = vunpack.c.h.b16 %v1591
    %v3065 = vunpack.c.l.b16 %v1592
    %v3066 = vunpack.c.h.b16 %v1592
    %v3067 = vunpack.c.l.b16 %v1593
    %v3068 = vunpack.c.h.b16 %v1593
    %v3069 = vunpack.c.l.b16 %v1594
    %v3070 = vunpack.c.h.b16 %v1594
    %v3071 = vunpack.c.l.b16 %v1595
    %v3072 = vunpack.c.h.b16 %v1595
    %v3073 = vunpack.c.l.b16 %v1596
    %v3074 = vunpack.c.h.b16 %v1596
    %v3075 = vunpack.c.l.b16 %v1597
    %v3076 = vunpack.c.h.b16 %v1597
    %v3077 = vunpack.c.l.b16 %v1598
    %v3078 = vunpack.c.h.b16 %v1598
    %v3079 = vunpack.c.l.b16 %v1599
    %v3080 = vunpack.c.h.b16 %v1599
    %v3081 = vunpack.c.l.b16 %v1600
    %v3082 = vunpack.c.h.b16 %v1600
    %v3083 = vunpack.c.l.b16 %v1601
    %v3084 = vunpack.c.h.b16 %v1601
    %v3085 = vunpack.c.l.b16 %v1602
    %v3086 = vunpack.c.h.b16 %v1602
    %v3087 = vunpack.c.l.b16 %v1603
    %v3088 = vunpack.c.h.b16 %v1603
    %v3089 = vunpack.c.l.b16 %v1604
    %v3090 = vunpack.c.h.b16 %v1604
    %v3091 = vunpack.c.l.b16 %v1605
    %v3092 = vunpack.c.h.b16 %v1605
    %v3093 = vunpack.c.l.b16 %v1606
    %v3094 = vunpack.c.h.b16 %v1606
    %v3095 = vunpack.c.l.b16 %v1607
    %v3096 = vunpack.c.h.b16 %v1607
    %v3097 = vunpack.c.l.b16 %v1608
    %v3098 = vunpack.c.h.b16 %v1608
    %v3099 = vunpack.c.l.b16 %v1609
    %v3100 = vunpack.c.h.b16 %v1609
    %v3101 = vunpack.c.l.b16 %v1610
    %v3102 = vunpack.c.h.b16 %v1610
    %v3103 = vunpack.c.l.b16 %v1611
    %v3104 = vunpack.c.h.b16 %v1611
    %v3105 = vunpack.c.l.b16 %v1612
    %v3106 = vunpack.c.h.b16 %v1612
    %v3107 = vunpack.c.l.b16 %v1613
    %v3108 = vunpack.c.h.b16 %v1613
    %v3109 = vunpack.c.l.b16 %v1614
    %v3110 = vunpack.c.h.b16 %v1614
    %v3111 = vunpack.c.l.b16 %v1615
    %v3112 = vunpack.c.h.b16 %v1615
    %v3113 = vunpack.c.l.b16 %v1616
    %v3114 = vunpack.c.h.b16 %v1616
    %v3115 = vunpack.c.l.b16 %v1617
    %v3116 = vunpack.c.h.b16 %v1617
    %v3117 = vunpack.c.l.b16 %v1618
    %v3118 = vunpack.c.h.b16 %v1618
    %v3119 = vunpack.c.l.b16 %v1619
    %v3120 = vunpack.c.h.b16 %v1619
    %v3121 = vunpack.c.l.b16 %v1620
    %v3122 = vunpack.c.h.b16 %v1620
    %v3123 = vunpack.c.l.b16 %v1621
    %v3124 = vunpack.c.h.b16 %v1621
    %v3125 = vunpack.c.l.b16 %v1622
    %v3126 = vunpack.c.h.b16 %v1622
    %v3127 = vunpack.c.l.b16 %v1623
    %v3128 = vunpack.c.h.b16 %v1623
    %v3129 = vunpack.c.l.b16 %v1624
    %v3130 = vunpack.c.h.b16 %v1624
    %v3131 = vunpack.c.l.b16 %v1625
    %v3132 = vunpack.c.h.b16 %v1625
    %v3133 = vunpack.c.l.b16 %v1626
    %v3134 = vunpack.c.h.b16 %v1626
    %v3135 = vunpack.c.l.b16 %v1627
    %v3136 = vunpack.c.h.b16 %v1627
    %v3137 = vunpack.c.l.b16 %v1628
    %v3138 = vunpack.c.h.b16 %v1628
    %v3139 = vunpack.c.l.b16 %v1629
    %v3140 = vunpack.c.h.b16 %v1629
    %v3141 = vunpack.c.l.b16 %v1630
    %v3142 = vunpack.c.h.b16 %v1630
    %v3143 = vunpack.c.l.b16 %v1631
    %v3144 = vunpack.c.h.b16 %v1631
    %v3145 = vunpack.c.l.b16 %v1632
    %v3146 = vunpack.c.h.b16 %v1632
    %v3147 = vunpack.c.l.b16 %v1633
    %v3148 = vunpack.c.h.b16 %v1633
    %v3149 = vunpack.c.l.b16 %v1634
    %v3150 = vunpack.c.h.b16 %v1634
    %v3151 = vunpack.c.l.b16 %v1635
    %v3152 = vunpack.c.h.b16 %v1635
    %v3153 = vunpack.c.l.b16 %v1636
    %v3154 = vunpack.c.h.b16 %v1636
    %v3155 = vunpack.c.l.b16 %v1637
    %v3156 = vunpack.c.h.b16 %v1637
    %v3157 = vunpack.c.l.b16 %v1638
    %v3158 = vunpack.c.h.b16 %v1638
    %v3159 = vunpack.c.l.b16 %v1639
    %v3160 = vunpack.c.h.b16 %v1639
    %v3161 = vunpack.c.l.b16 %v1640
    %v3162 = vunpack.c.h.b16 %v1640
    %v3163 = vunpack.c.l.b16 %v1641
    %v3164 = vunpack.c.h.b16 %v1641
    %v3165 = vunpack.c.l.b16 %v1642
    %v3166 = vunpack.c.h.b16 %v1642
    %v3167 = vunpack.c.l.b16 %v1643
    %v3168 = vunpack.c.h.b16 %v1643
    %v3169 = vunpack.c.l.b16 %v1644
    %v3170 = vunpack.c.h.b16 %v1644
    %v3171 = vunpack.c.l.b16 %v1645
    %v3172 = vunpack.c.h.b16 %v1645
    %v3173 = vunpack.c.l.b16 %v1646
    %v3174 = vunpack.c.h.b16 %v1646
    %v3175 = vunpack.c.l.b16 %v1647
    %v3176 = vunpack.c.h.b16 %v1647
    %v3177 = vunpack.c.l.b16 %v1648
    %v3178 = vunpack.c.h.b16 %v1648
    %v3179 = vunpack.c.l.b16 %v1649
    %v3180 = vunpack.c.h.b16 %v1649
    %v3181 = vunpack.c.l.b16 %v1650
    %v3182 = vunpack.c.h.b16 %v1650
    %v3183 = vunpack.c.l.b16 %v1651
    %v3184 = vunpack.c.h.b16 %v1651
    %v3185 = vunpack.c.l.b16 %v1652
    %v3186 = vunpack.c.h.b16 %v1652
    %v3187 = vunpack.c.l.b16 %v1653
    %v3188 = vunpack.c.h.b16 %v1653
    %v3189 = vunpack.c.l.b16 %v1654
    %v3190 = vunpack.c.h.b16 %v1654
    %v3191 = vunpack.c.l.b16 %v1655
    %v3192 = vunpack.c.h.b16 %v1655
    %v3193 = vunpack.c.l.b16 %v1656
    %v3194 = vunpack.c.h.b16 %v1656
    %v3195 = vunpack.c.l.b16 %v1657
    %v3196 = vunpack.c.h.b16 %v1657
    %v3197 = vunpack.c.l.b16 %v1658
    %v3198 = vunpack.c.h.b16 %v1658
    %v3199 = vunpack.c.l.b16 %v1659
    %v3200 = vunpack.c.h.b16 %v1659
    %v3201 = vunpack.c.l.b16 %v1660
    %v3202 = vunpack.c.h.b16 %v1660
    %v3203 = vunpack.c.l.b16 %v1661
    %v3204 = vunpack.c.h.b16 %v1661
    %v3205 = vunpack.c.l.b16 %v1662
    %v3206 = vunpack.c.h.b16 %v1662
    %v3207 = vunpack.c.l.b16 %v1663
    %v3208 = vunpack.c.h.b16 %v1663
    %v3209 = vunpack.c.l.b16 %v1664
    %v3210 = vunpack.c.h.b16 %v1664
    %v3211 = vunpack.c.l.b16 %v1665
    %v3212 = vunpack.c.h.b16 %v1665
    %v3213 = vunpack.c.l.b16 %v1666
    %v3214 = vunpack.c.h.b16 %v1666
    %v3215 = vunpack.c.l.b16 %v1667
    %v3216 = vunpack.c.h.b16 %v1667
    %v3217 = vunpack.c.l.b16 %v1668
    %v3218 = vunpack.c.h.b16 %v1668
    %v3219 = vunpack.c.l.b16 %v1669
    %v3220 = vunpack.c.h.b16 %v1669
    %v3221 = vunpack.c.l.b16 %v1670
    %v3222 = vunpack.c.h.b16 %v1670
    %v3223 = vunpack.c.l.b16 %v1671
    %v3224 = vunpack.c.h.b16 %v1671
    %v3225 = vunpack.c.l.b16 %v1672
    %v3226 = vunpack.c.h.b16 %v1672
    %v3227 = vunpack.c.l.b16 %v1673
    %v3228 = vunpack.c.h.b16 %v1673
    %v3229 = vunpack.c.l.b16 %v1674
    %v3230 = vunpack.c.h.b16 %v1674
    %v3231 = vunpack.c.l.b16 %v1675
    %v3232 = vunpack.c.h.b16 %v1675
    %v3233 = vunpack.c.l.b16 %v1676
    %v3234 = vunpack.c.h.b16 %v1676
    %v3235 = vunpack.c.l.b16 %v1677
    %v3236 = vunpack.c.h.b16 %v1677
    %v3237 = vunpack.c.l.b16 %v1678
    %v3238 = vunpack.c.h.b16 %v1678
    %v3239 = vunpack.c.l.b16 %v1679
    %v3240 = vunpack.c.h.b16 %v1679
    %v3241 = vunpack.c.l.b16 %v1680
    %v3242 = vunpack.c.h.b16 %v1680
    %v3243 = vunpack.c.l.b16 %v1681
    %v3244 = vunpack.c.h.b16 %v1681
    %v3245 = vunpack.c.l.b16 %v1682
    %v3246 = vunpack.c.h.b16 %v1682
    %v3247 = vunpack.c.l.b16 %v1683
    %v3248 = vunpack.c.h.b16 %v1683
    %v3249 = vunpack.c.l.b16 %v1684
    %v3250 = vunpack.c.h.b16 %v1684
    %v3251 = vunpack.c.l.b16 %v1685
    %v3252 = vunpack.c.h.b16 %v1685
    %v3253 = vunpack.c.l.b16 %v1686
    %v3254 = vunpack.c.h.b16 %v1686
    %v3255 = vunpack.c.l.b16 %v1687
    %v3256 = vunpack.c.h.b16 %v1687
    %v3257 = vunpack.c.l.b16 %v1688
    %v3258 = vunpack.c.h.b16 %v1688
    %v3259 = vunpack.c.l.b16 %v1689
    %v3260 = vunpack.c.h.b16 %v1689
    %v3261 = vunpack.c.l.b16 %v1690
    %v3262 = vunpack.c.h.b16 %v1690
    %v3263 = vunpack.c.l.b16 %v1691
    %v3264 = vunpack.c.h.b16 %v1691
    %v3265 = vunpack.c.l.b16 %v1692
    %v3266 = vunpack.c.h.b16 %v1692
    %v3267 = vunpack.c.l.b16 %v1693
    %v3268 = vunpack.c.h.b16 %v1693
    %v3269 = vunpack.c.l.b16 %v1694
    %v3270 = vunpack.c.h.b16 %v1694
    %v3271 = vunpack.c.l.b16 %v1695
    %v3272 = vunpack.c.h.b16 %v1695
    %v3273 = vpack.c.b16 %v2257, %v2249
    %v3274 = vpack.c.b16 %v2258, %v2250
    %v3275 = vpack.c.b16 %v2259, %v2251
    %v3276 = vpack.c.b16 %v2260, %v2252
    %v3277 = vpack.c.b16 %v2261, %v2253
    %v3278 = vpack.c.b16 %v2262, %v2254
    %v3279 = vpack.c.b16 %v2263, %v2255
    %v3280 = vpack.c.b16 %v2264, %v2256
    %v3281 = vpack.c.b16 %v2273, %v2265
    %v3282 = vpack.c.b16 %v2274, %v2266
    %v3283 = vpack.c.b16 %v2275, %v2267
    %v3284 = vpack.c.b16 %v2276, %v2268
    %v3285 = vpack.c.b16 %v2277, %v2269
    %v3286 = vpack.c.b16 %v2278, %v2270
    %v3287 = vpack.c.b16 %v2279, %v2271
    %v3288 = vpack.c.b16 %v2280, %v2272
    %v3289 = vpack.c.b16 %v2289, %v2281
    %v3290 = vpack.c.b16 %v2290, %v2282
    %v3291 = vpack.c.b16 %v2291, %v2283
    %v3292 = vpack.c.b16 %v2292, %v2284
    %v3293 = vpack.c.b16 %v2293, %v2285
    %v3294 = vpack.c.b16 %v2294, %v2286
    %v3295 = vpack.c.b16 %v2295, %v2287
    %v3296 = vpack.c.b16 %v2296, %v2288
    %v3297 = vpack.c.b16 %v2305, %v2297
    %v3298 = vpack.c.b16 %v2306, %v2298
    %v3299 = vpack.c.b16 %v2307, %v2299
    %v3300 = vpack.c.b16 %v2308, %v2300
    %v3301 = vpack.c.b16 %v2309, %v2301
    %v3302 = vpack.c.b16 %v2310, %v2302
    %v3303 = vpack.c.b16 %v2311, %v2303
    %v3304 = vpack.c.b16 %v2312, %v2304
    %v3305 = vpack.c.b16 %v2321, %v2313
    %v3306 = vpack.c.b16 %v2322, %v2314
    %v3307 = vpack.c.b16 %v2323, %v2315
    %v3308 = vpack.c.b16 %v2324, %v2316
    %v3309 = vpack.c.b16 %v2325, %v2317
    %v3310 = vpack.c.b16 %v2326, %v2318
    %v3311 = vpack.c.b16 %v2327, %v2319
    %v3312 = vpack.c.b16 %v2328, %v2320
    %v3313 = vpack.c.b16 %v2337, %v2329
    %v3314 = vpack.c.b16 %v2338, %v2330
    %v3315 = vpack.c.b16 %v2339, %v2331
    %v3316 = vpack.c.b16 %v2340, %v2332
    %v3317 = vpack.c.b16 %v2341, %v2333
    %v3318 = vpack.c.b16 %v2342, %v2334
    %v3319 = vpack.c.b16 %v2343, %v2335
    %v3320 = vpack.c.b16 %v2344, %v2336
    %v3321 = vpack.c.b16 %v2353, %v2345
    %v3322 = vpack.c.b16 %v2354, %v2346
    %v3323 = vpack.c.b16 %v2355, %v2347
    %v3324 = vpack.c.b16 %v2356, %v2348
    %v3325 = vpack.c.b16 %v2357, %v2349
    %v3326 = vpack.c.b16 %v2358, %v2350
    %v3327 = vpack.c.b16 %v2359, %v2351
    %v3328 = vpack.c.b16 %v2360, %v2352
    %v3329 = vpack.c.b16 %v2369, %v2361
    %v3330 = vpack.c.b16 %v2370, %v2362
    %v3331 = vpack.c.b16 %v2371, %v2363
    %v3332 = vpack.c.b16 %v2372, %v2364
    %v3333 = vpack.c.b16 %v2373, %v2365
    %v3334 = vpack.c.b16 %v2374, %v2366
    %v3335 = vpack.c.b16 %v2375, %v2367
    %v3336 = vpack.c.b16 %v2376, %v2368
    %v3337 = vpack.c.b16 %v2385, %v2377
    %v3338 = vpack.c.b16 %v2386, %v2378
    %v3339 = vpack.c.b16 %v2387, %v2379
    %v3340 = vpack.c.b16 %v2388, %v2380
    %v3341 = vpack.c.b16 %v2389, %v2381
    %v3342 = vpack.c.b16 %v2390, %v2382
    %v3343 = vpack.c.b16 %v2391, %v2383
    %v3344 = vpack.c.b16 %v2392, %v2384
    %v3345 = vpack.c.b16 %v2401, %v2393
    %v3346 = vpack.c.b16 %v2402, %v2394
    %v3347 = vpack.c.b16 %v2403, %v2395
    %v3348 = vpack.c.b16 %v2404, %v2396
    %v3349 = vpack.c.b16 %v2405, %v2397
    %v3350 = vpack.c.b16 %v2406, %v2398
    %v3351 = vpack.c.b16 %v2407, %v2399
    %v3352 = vpack.c.b16 %v2408, %v2400
    %v3353 = vpack.c.b16 %v2417, %v2409
    %v3354 = vpack.c.b16 %v2418, %v2410
    %v3355 = vpack.c.b16 %v2419, %v2411
    %v3356 = vpack.c.b16 %v2420, %v2412
    %v3357 = vpack.c.b16 %v2421, %v2413
    %v3358 = vpack.c.b16 %v2422, %v2414
    %v3359 = vpack.c.b16 %v2423, %v2415
    %v3360 = vpack.c.b16 %v2424, %v2416
    %v3361 = vpack.c.b16 %v2433, %v2425
    %v3362 = vpack.c.b16 %v2434, %v2426
    %v3363 = vpack.c.b16 %v2435, %v2427
    %v3364 = vpack.c.b16 %v2436, %v2428
    %v3365 = vpack.c.b16 %v2437, %v2429
    %v3366 = vpack.c.b16 %v2438, %v2430
    %v3367 = vpack.c.b16 %v2439, %v2431
    %v3368 = vpack.c.b16 %v2440, %v2432
    %v3369 = vpack.c.b16 %v2449, %v2441
    %v3370 = vpack.c.b16 %v2450, %v2442
    %v3371 = vpack.c.b16 %v2451, %v2443
    %v3372 = vpack.c.b16 %v2452, %v2444
    %v3373 = vpack.c.b16 %v2453, %v2445
    %v3374 = vpack.c.b16 %v2454, %v2446
    %v3375 = vpack.c.b16 %v2455, %v2447
    %v3376 = vpack.c.b16 %v2456, %v2448
    %v3377 = vpack.c.b16 %v2465, %v2457
    %v3378 = vpack.c.b16 %v2466, %v2458
    %v3379 = vpack.c.b16 %v2467, %v2459
    %v3380 = vpack.c.b16 %v2468, %v2460
    %v3381 = vpack.c.b16 %v2469, %v2461
    %v3382 = vpack.c.b16 %v2470, %v2462
    %v3383 = vpack.c.b16 %v2471, %v2463
    %v3384 = vpack.c.b16 %v2472, %v2464
    %v3385 = vpack.c.b16 %v2481, %v2473
    %v3386 = vpack.c.b16 %v2482, %v2474
    %v3387 = vpack.c.b16 %v2483, %v2475
    %v3388 = vpack.c.b16 %v2484, %v2476
    %v3389 = vpack.c.b16 %v2485, %v2477
    %v3390 = vpack.c.b16 %v2486, %v2478
    %v3391 = vpack.c.b16 %v2487, %v2479
    %v3392 = vpack.c.b16 %v2488, %v2480
    %v3393 = vpack.c.b16 %v2497, %v2489
    %v3394 = vpack.c.b16 %v2498, %v2490
    %v3395 = vpack.c.b16 %v2499, %v2491
    %v3396 = vpack.c.b16 %v2500, %v2492
    %v3397 = vpack.c.b16 %v2501, %v2493
    %v3398 = vpack.c.b16 %v2502, %v2494
    %v3399 = vpack.c.b16 %v2503, %v2495
    %v3400 = vpack.c.b16 %v2504, %v2496
    %v3401 = vpack.c.b16 %v2513, %v2505
    %v3402 = vpack.c.b16 %v2514, %v2506
    %v3403 = vpack.c.b16 %v2515, %v2507
    %v3404 = vpack.c.b16 %v2516, %v2508
    %v3405 = vpack.c.b16 %v2517, %v2509
    %v3406 = vpack.c.b16 %v2518, %v2510
    %v3407 = vpack.c.b16 %v2519, %v2511
    %v3408 = vpack.c.b16 %v2520, %v2512
    %v3409 = vpack.c.b16 %v2529, %v2521
    %v3410 = vpack.c.b16 %v2530, %v2522
    %v3411 = vpack.c.b16 %v2531, %v2523
    %v3412 = vpack.c.b16 %v2532, %v2524
    %v3413 = vpack.c.b16 %v2533, %v2525
    %v3414 = vpack.c.b16 %v2534, %v2526
    %v3415 = vpack.c.b16 %v2535, %v2527
    %v3416 = vpack.c.b16 %v2536, %v2528
    %v3417 = vpack.c.b16 %v2545, %v2537
    %v3418 = vpack.c.b16 %v2546, %v2538
    %v3419 = vpack.c.b16 %v2547, %v2539
    %v3420 = vpack.c.b16 %v2548, %v2540
    %v3421 = vpack.c.b16 %v2549, %v2541
    %v3422 = vpack.c.b16 %v2550, %v2542
    %v3423 = vpack.c.b16 %v2551, %v2543
    %v3424 = vpack.c.b16 %v2552, %v2544
    %v3425 = vpack.c.b16 %v2561, %v2553
    %v3426 = vpack.c.b16 %v2562, %v2554
    %v3427 = vpack.c.b16 %v2563, %v2555
    %v3428 = vpack.c.b16 %v2564, %v2556
    %v3429 = vpack.c.b16 %v2565, %v2557
    %v3430 = vpack.c.b16 %v2566, %v2558
    %v3431 = vpack.c.b16 %v2567, %v2559
    %v3432 = vpack.c.b16 %v2568, %v2560
    %v3433 = vpack.c.b16 %v2577, %v2569
    %v3434 = vpack.c.b16 %v2578, %v2570
    %v3435 = vpack.c.b16 %v2579, %v2571
    %v3436 = vpack.c.b16 %v2580, %v2572
    %v3437 = vpack.c.b16 %v2581, %v2573
    %v3438 = vpack.c.b16 %v2582, %v2574
    %v3439 = vpack.c.b16 %v2583, %v2575
    %v3440 = vpack.c.b16 %v2584, %v2576
    %v3441 = vpack.c.b16 %v2593, %v2585
    %v3442 = vpack.c.b16 %v2594, %v2586
    %v3443 = vpack.c.b16 %v2595, %v2587
    %v3444 = vpack.c.b16 %v2596, %v2588
    %v3445 = vpack.c.b16 %v2597, %v2589
    %v3446 = vpack.c.b16 %v2598, %v2590
    %v3447 = vpack.c.b16 %v2599, %v2591
    %v3448 = vpack.c.b16 %v2600, %v2592
    %v3449 = vpack.c.b16 %v2609, %v2601
    %v3450 = vpack.c.b16 %v2610, %v2602
    %v3451 = vpack.c.b16 %v2611, %v2603
    %v3452 = vpack.c.b16 %v2612, %v2604
    %v3453 = vpack.c.b16 %v2613, %v2605
    %v3454 = vpack.c.b16 %v2614, %v2606
    %v3455 = vpack.c.b16 %v2615, %v2607
    %v3456 = vpack.c.b16 %v2616, %v2608
    %v3457 = vpack.c.b16 %v2625, %v2617
    %v3458 = vpack.c.b16 %v2626, %v2618
    %v3459 = vpack.c.b16 %v2627, %v2619
    %v3460 = vpack.c.b16 %v2628, %v2620
    %v3461 = vpack.c.b16 %v2629, %v2621
    %v3462 = vpack.c.b16 %v2630, %v2622
    %v3463 = vpack.c.b16 %v2631, %v2623
    %v3464 = vpack.c.b16 %v2632, %v2624
    %v3465 = vpack.c.b16 %v2641, %v2633
    %v3466 = vpack.c.b16 %v2642, %v2634
    %v3467 = vpack.c.b16 %v2643, %v2635
    %v3468 = vpack.c.b16 %v2644, %v2636
    %v3469 = vpack.c.b16 %v2645, %v2637
    %v3470 = vpack.c.b16 %v2646, %v2638
    %v3471 = vpack.c.b16 %v2647, %v2639
    %v3472 = vpack.c.b16 %v2648, %v2640
    %v3473 = vpack.c.b16 %v2657, %v2649
    %v3474 = vpack.c.b16 %v2658, %v2650
    %v3475 = vpack.c.b16 %v2659, %v2651
    %v3476 = vpack.c.b16 %v2660, %v2652
    %v3477 = vpack.c.b16 %v2661, %v2653
    %v3478 = vpack.c.b16 %v2662, %v2654
    %v3479 = vpack.c.b16 %v2663, %v2655
    %v3480 = vpack.c.b16 %v2664, %v2656
    %v3481 = vpack.c.b16 %v2673, %v2665
    %v3482 = vpack.c.b16 %v2674, %v2666
    %v3483 = vpack.c.b16 %v2675, %v2667
    %v3484 = vpack.c.b16 %v2676, %v2668
    %v3485 = vpack.c.b16 %v2677, %v2669
    %v3486 = vpack.c.b16 %v2678, %v2670
    %v3487 = vpack.c.b16 %v2679, %v2671
    %v3488 = vpack.c.b16 %v2680, %v2672
    %v3489 = vpack.c.b16 %v2689, %v2681
    %v3490 = vpack.c.b16 %v2690, %v2682
    %v3491 = vpack.c.b16 %v2691, %v2683
    %v3492 = vpack.c.b16 %v2692, %v2684
    %v3493 = vpack.c.b16 %v2693, %v2685
    %v3494 = vpack.c.b16 %v2694, %v2686
    %v3495 = vpack.c.b16 %v2695, %v2687
    %v3496 = vpack.c.b16 %v2696, %v2688
    %v3497 = vpack.c.b16 %v2705, %v2697
    %v3498 = vpack.c.b16 %v2706, %v2698
    %v3499 = vpack.c.b16 %v2707, %v2699
    %v3500 = vpack.c.b16 %v2708, %v2700
    %v3501 = vpack.c.b16 %v2709, %v2701
    %v3502 = vpack.c.b16 %v2710, %v2702
    %v3503 = vpack.c.b16 %v2711, %v2703
    %v3504 = vpack.c.b16 %v2712, %v2704
    %v3505 = vpack.c.b16 %v2721, %v2713
    %v3506 = vpack.c.b16 %v2722, %v2714
    %v3507 = vpack.c.b16 %v2723, %v2715
    %v3508 = vpack.c.b16 %v2724, %v2716
    %v3509 = vpack.c.b16 %v2725, %v2717
    %v3510 = vpack.c.b16 %v2726, %v2718
    %v3511 = vpack.c.b16 %v2727, %v2719
    %v3512 = vpack.c.b16 %v2728, %v2720
    %v3513 = vpack.c.b16 %v2737, %v2729
    %v3514 = vpack.c.b16 %v2738, %v2730
    %v3515 = vpack.c.b16 %v2739, %v2731
    %v3516 = vpack.c.b16 %v2740, %v2732
    %v3517 = vpack.c.b16 %v2741, %v2733
    %v3518 = vpack.c.b16 %v2742, %v2734
    %v3519 = vpack.c.b16 %v2743, %v2735
    %v3520 = vpack.c.b16 %v2744, %v2736
    %v3521 = vpack.c.b16 %v2753, %v2745
    %v3522 = vpack.c.b16 %v2754, %v2746
    %v3523 = vpack.c.b16 %v2755, %v2747
    %v3524 = vpack.c.b16 %v2756, %v2748
    %v3525 = vpack.c.b16 %v2757, %v2749
    %v3526 = vpack.c.b16 %v2758, %v2750
    %v3527 = vpack.c.b16 %v2759, %v2751
    %v3528 = vpack.c.b16 %v2760, %v2752
    %v3529 = vpack.c.b16 %v2769, %v2761
    %v3530 = vpack.c.b16 %v2770, %v2762
    %v3531 = vpack.c.b16 %v2771, %v2763
    %v3532 = vpack.c.b16 %v2772, %v2764
    %v3533 = vpack.c.b16 %v2773, %v2765
    %v3534 = vpack.c.b16 %v2774, %v2766
    %v3535 = vpack.c.b16 %v2775, %v2767
    %v3536 = vpack.c.b16 %v2776, %v2768
    %v3537 = vpack.c.b16 %v2785, %v2777
    %v3538 = vpack.c.b16 %v2786, %v2778
    %v3539 = vpack.c.b16 %v2787, %v2779
    %v3540 = vpack.c.b16 %v2788, %v2780
    %v3541 = vpack.c.b16 %v2789, %v2781
    %v3542 = vpack.c.b16 %v2790, %v2782
    %v3543 = vpack.c.b16 %v2791, %v2783
    %v3544 = vpack.c.b16 %v2792, %v2784
    %v3545 = vpack.c.b16 %v2801, %v2793
    %v3546 = vpack.c.b16 %v2802, %v2794
    %v3547 = vpack.c.b16 %v2803, %v2795
    %v3548 = vpack.c.b16 %v2804, %v2796
    %v3549 = vpack.c.b16 %v2805, %v2797
    %v3550 = vpack.c.b16 %v2806, %v2798
    %v3551 = vpack.c.b16 %v2807, %v2799
    %v3552 = vpack.c.b16 %v2808, %v2800
    %v3553 = vpack.c.b16 %v2817, %v2809
    %v3554 = vpack.c.b16 %v2818, %v2810
    %v3555 = vpack.c.b16 %v2819, %v2811
    %v3556 = vpack.c.b16 %v2820, %v2812
    %v3557 = vpack.c.b16 %v2821, %v2813
    %v3558 = vpack.c.b16 %v2822, %v2814
    %v3559 = vpack.c.b16 %v2823, %v2815
    %v3560 = vpack.c.b16 %v2824, %v2816
    %v3561 = vpack.c.b16 %v2833, %v2825
    %v3562 = vpack.c.b16 %v2834, %v2826
    %v3563 = vpack.c.b16 %v2835, %v2827
    %v3564 = vpack.c.b16 %v2836, %v2828
    %v3565 = vpack.c.b16 %v2837, %v2829
    %v3566 = vpack.c.b16 %v2838, %v2830
    %v3567 = vpack.c.b16 %v2839, %v2831
    %v3568 = vpack.c.b16 %v2840, %v2832
    %v3569 = vpack.c.b16 %v2849, %v2841
    %v3570 = vpack.c.b16 %v2850, %v2842
    %v3571 = vpack.c.b16 %v2851, %v2843
    %v3572 = vpack.c.b16 %v2852, %v2844
    %v3573 = vpack.c.b16 %v2853, %v2845
    %v3574 = vpack.c.b16 %v2854, %v2846
    %v3575 = vpack.c.b16 %v2855, %v2847
    %v3576 = vpack.c.b16 %v2856, %v2848
    %v3577 = vpack.c.b16 %v2865, %v2857
    %v3578 = vpack.c.b16 %v2866, %v2858
    %v3579 = vpack.c.b16 %v2867, %v2859
    %v3580 = vpack.c.b16 %v2868, %v2860
    %v3581 = vpack.c.b16 %v2869, %v2861
    %v3582 = vpack.c.b16 %v2870, %v2862
    %v3583 = vpack.c.b16 %v2871, %v2863
    %v3584 = vpack.c.b16 %v2872, %v2864
    %v3585 = vpack.c.b16 %v2881, %v2873
    %v3586 = vpack.c.b16 %v2882, %v2874
    %v3587 = vpack.c.b16 %v2883, %v2875
    %v3588 = vpack.c.b16 %v2884, %v2876
    %v3589 = vpack.c.b16 %v2885, %v2877
    %v3590 = vpack.c.b16 %v2886, %v2878
    %v3591 = vpack.c.b16 %v2887, %v2879
    %v3592 = vpack.c.b16 %v2888, %v2880
    %v3593 = vpack.c.b16 %v2897, %v2889
    %v3594 = vpack.c.b16 %v2898, %v2890
    %v3595 = vpack.c.b16 %v2899, %v2891
    %v3596 = vpack.c.b16 %v2900, %v2892
    %v3597 = vpack.c.b16 %v2901, %v2893
    %v3598 = vpack.c.b16 %v2902, %v2894
    %v3599 = vpack.c.b16 %v2903, %v2895
    %v3600 = vpack.c.b16 %v2904, %v2896
    %v3601 = vpack.c.b16 %v2913, %v2905
    %v3602 = vpack.c.b16 %v2914, %v2906
    %v3603 = vpack.c.b16 %v2915, %v2907
    %v3604 = vpack.c.b16 %v2916, %v2908
    %v3605 = vpack.c.b16 %v2917, %v2909
    %v3606 = vpack.c.b16 %v2918, %v2910
    %v3607 = vpack.c.b16 %v2919, %v2911
    %v3608 = vpack.c.b16 %v2920, %v2912
    %v3609 = vpack.c.b16 %v2929, %v2921
    %v3610 = vpack.c.b16 %v2930, %v2922
    %v3611 = vpack.c.b16 %v2931, %v2923
    %v3612 = vpack.c.b16 %v2932, %v2924
    %v3613 = vpack.c.b16 %v2933, %v2925
    %v3614 = vpack.c.b16 %v2934, %v2926
    %v3615 = vpack.c.b16 %v2935, %v2927
    %v3616 = vpack.c.b16 %v2936, %v2928
    %v3617 = vpack.c.b16 %v2945, %v2937
    %v3618 = vpack.c.b16 %v2946, %v2938
    %v3619 = vpack.c.b16 %v2947, %v2939
    %v3620 = vpack.c.b16 %v2948, %v2940
    %v3621 = vpack.c.b16 %v2949, %v2941
    %v3622 = vpack.c.b16 %v2950, %v2942
    %v3623 = vpack.c.b16 %v2951, %v2943
    %v3624 = vpack.c.b16 %v2952, %v2944
    %v3625 = vpack.c.b16 %v2961, %v2953
    %v3626 = vpack.c.b16 %v2962, %v2954
    %v3627 = vpack.c.b16 %v2963, %v2955
    %v3628 = vpack.c.b16 %v2964, %v2956
    %v3629 = vpack.c.b16 %v2965, %v2957
    %v3630 = vpack.c.b16 %v2966, %v2958
    %v3631 = vpack.c.b16 %v2967, %v2959
    %v3632 = vpack.c.b16 %v2968, %v2960
    %v3633 = vpack.c.b16 %v2977, %v2969
    %v3634 = vpack.c.b16 %v2978, %v2970
    %v3635 = vpack.c.b16 %v2979, %v2971
    %v3636 = vpack.c.b16 %v2980, %v2972
    %v3637 = vpack.c.b16 %v2981, %v2973
    %v3638 = vpack.c.b16 %v2982, %v2974
    %v3639 = vpack.c.b16 %v2983, %v2975
    %v3640 = vpack.c.b16 %v2984, %v2976
    %v3641 = vpack.c.b16 %v2993, %v2985
    %v3642 = vpack.c.b16 %v2994, %v2986
    %v3643 = vpack.c.b16 %v2995, %v2987
    %v3644 = vpack.c.b16 %v2996, %v2988
    %v3645 = vpack.c.b16 %v2997, %v2989
    %v3646 = vpack.c.b16 %v2998, %v2990
    %v3647 = vpack.c.b16 %v2999, %v2991
    %v3648 = vpack.c.b16 %v3000, %v2992
    %v3649 = vpack.c.b16 %v3009, %v3001
    %v3650 = vpack.c.b16 %v3010, %v3002
    %v3651 = vpack.c.b16 %v3011, %v3003
    %v3652 = vpack.c.b16 %v3012, %v3004
    %v3653 = vpack.c.b16 %v3013, %v3005
    %v3654 = vpack.c.b16 %v3014, %v3006
    %v3655 = vpack.c.b16 %v3015, %v3007
    %v3656 = vpack.c.b16 %v3016, %v3008
    %v3657 = vpack.c.b16 %v3025, %v3017
    %v3658 = vpack.c.b16 %v3026, %v3018
    %v3659 = vpack.c.b16 %v3027, %v3019
    %v3660 = vpack.c.b16 %v3028, %v3020
    %v3661 = vpack.c.b16 %v3029, %v3021
    %v3662 = vpack.c.b16 %v3030, %v3022
    %v3663 = vpack.c.b16 %v3031, %v3023
    %v3664 = vpack.c.b16 %v3032, %v3024
    %v3665 = vpack.c.b16 %v3041, %v3033
    %v3666 = vpack.c.b16 %v3042, %v3034
    %v3667 = vpack.c.b16 %v3043, %v3035
    %v3668 = vpack.c.b16 %v3044, %v3036
    %v3669 = vpack.c.b16 %v3045, %v3037
    %v3670 = vpack.c.b16 %v3046, %v3038
    %v3671 = vpack.c.b16 %v3047, %v3039
    %v3672 = vpack.c.b16 %v3048, %v3040
    %v3673 = vpack.c.b16 %v3057, %v3049
    %v3674 = vpack.c.b16 %v3058, %v3050
    %v3675 = vpack.c.b16 %v3059, %v3051
    %v3676 = vpack.c.b16 %v3060, %v3052
    %v3677 = vpack.c.b16 %v3061, %v3053
    %v3678 = vpack.c.b16 %v3062, %v3054
    %v3679 = vpack.c.b16 %v3063, %v3055
    %v3680 = vpack.c.b16 %v3064, %v3056
    %v3681 = vpack.c.b16 %v3073, %v3065
    %v3682 = vpack.c.b16 %v3074, %v3066
    %v3683 = vpack.c.b16 %v3075, %v3067
    %v3684 = vpack.c.b16 %v3076, %v3068
    %v3685 = vpack.c.b16 %v3077, %v3069
    %v3686 = vpack.c.b16 %v3078, %v3070
    %v3687 = vpack.c.b16 %v3079, %v3071
    %v3688 = vpack.c.b16 %v3080, %v3072
    %v3689 = vpack.c.b16 %v3089, %v3081
    %v3690 = vpack.c.b16 %v3090, %v3082
    %v3691 = vpack.c.b16 %v3091, %v3083
    %v3692 = vpack.c.b16 %v3092, %v3084
    %v3693 = vpack.c.b16 %v3093, %v3085
    %v3694 = vpack.c.b16 %v3094, %v3086
    %v3695 = vpack.c.b16 %v3095, %v3087
    %v3696 = vpack.c.b16 %v3096, %v3088
    %v3697 = vpack.c.b16 %v3105, %v3097
    %v3698 = vpack.c.b16 %v3106, %v3098
    %v3699 = vpack.c.b16 %v3107, %v3099
    %v3700 = vpack.c.b16 %v3108, %v3100
    %v3701 = vpack.c.b16 %v3109, %v3101
    %v3702 = vpack.c.b16 %v3110, %v3102
    %v3703 = vpack.c.b16 %v3111, %v3103
    %v3704 = vpack.c.b16 %v3112, %v3104
    %v3705 = vpack.c.b16 %v3121, %v3113
    %v3706 = vpack.c.b16 %v3122, %v3114
    %v3707 = vpack.c.b16 %v3123, %v3115
    %v3708 = vpack.c.b16 %v3124, %v3116
    %v3709 = vpack.c.b16 %v3125, %v3117
    %v3710 = vpack.c.b16 %v3126, %v3118
    %v3711 = vpack.c.b16 %v3127, %v3119
    %v3712 = vpack.c.b16 %v3128, %v3120
    %v3713 = vpack.c.b16 %v3137, %v3129
    %v3714 = vpack.c.b16 %v3138, %v3130
    %v3715 = vpack.c.b16 %v3139, %v3131
    %v3716 = vpack.c.b16 %v3140, %v3132
    %v3717 = vpack.c.b16 %v3141, %v3133
    %v3718 = vpack.c.b16 %v3142, %v3134
    %v3719 = vpack.c.b16 %v3143, %v3135
    %v3720 = vpack.c.b16 %v3144, %v3136
    %v3721 = vpack.c.b16 %v3153, %v3145
    %v3722 = vpack.c.b16 %v3154, %v3146
    %v3723 = vpack.c.b16 %v3155, %v3147
    %v3724 = vpack.c.b16 %v3156, %v3148
    %v3725 = vpack.c.b16 %v3157, %v3149
    %v3726 = vpack.c.b16 %v3158, %v3150
    %v3727 = vpack.c.b16 %v3159, %v3151
    %v3728 = vpack.c.b16 %v3160, %v3152
    %v3729 = vpack.c.b16 %v3169, %v3161
    %v3730 = vpack.c.b16 %v3170, %v3162
    %v3731 = vpack.c.b16 %v3171, %v3163
    %v3732 = vpack.c.b16 %v3172, %v3164
    %v3733 = vpack.c.b16 %v3173, %v3165
    %v3734 = vpack.c.b16 %v3174, %v3166
    %v3735 = vpack.c.b16 %v3175, %v3167
    %v3736 = vpack.c.b16 %v3176, %v3168
    %v3737 = vpack.c.b16 %v3185, %v3177
    %v3738 = vpack.c.b16 %v3186, %v3178
    %v3739 = vpack.c.b16 %v3187, %v3179
    %v3740 = vpack.c.b16 %v3188, %v3180
    %v3741 = vpack.c.b16 %v3189, %v3181
    %v3742 = vpack.c.b16 %v3190, %v3182
    %v3743 = vpack.c.b16 %v3191, %v3183
    %v3744 = vpack.c.b16 %v3192, %v3184
    %v3745 = vpack.c.b16 %v3201, %v3193
    %v3746 = vpack.c.b16 %v3202, %v3194
    %v3747 = vpack.c.b16 %v3203, %v3195
    %v3748 = vpack.c.b16 %v3204, %v3196
    %v3749 = vpack.c.b16 %v3205, %v3197
    %v3750 = vpack.c.b16 %v3206, %v3198
    %v3751 = vpack.c.b16 %v3207, %v3199
    %v3752 = vpack.c.b16 %v3208, %v3200
    %v3753 = vpack.c.b16 %v3217, %v3209
    %v3754 = vpack.c.b16 %v3218, %v3210
    %v3755 = vpack.c.b16 %v3219, %v3211
    %v3756 = vpack.c.b16 %v3220, %v3212
    %v3757 = vpack.c.b16 %v3221, %v3213
    %v3758 = vpack.c.b16 %v3222, %v3214
    %v3759 = vpack.c.b16 %v3223, %v3215
    %v3760 = vpack.c.b16 %v3224, %v3216
    %v3761 = vpack.c.b16 %v3233, %v3225
    %v3762 = vpack.c.b16 %v3234, %v3226
    %v3763 = vpack.c.b16 %v3235, %v3227
    %v3764 = vpack.c.b16 %v3236, %v3228
    %v3765 = vpack.c.b16 %v3237, %v3229
    %v3766 = vpack.c.b16 %v3238, %v3230
    %v3767 = vpack.c.b16 %v3239, %v3231
    %v3768 = vpack.c.b16 %v3240, %v3232
    %v3769 = vpack.c.b16 %v3249, %v3241
    %v3770 = vpack.c.b16 %v3250, %v3242
    %v3771 = vpack.c.b16 %v3251, %v3243
    %v3772 = vpack.c.b16 %v3252, %v3244
    %v3773 = vpack.c.b16 %v3253, %v3245
    %v3774 = vpack.c.b16 %v3254, %v3246
    %v3775 = vpack.c.b16 %v3255, %v3247
    %v3776 = vpack.c.b16 %v3256, %v3248
    %v3777 = vpack.c.b16 %v3265, %v3257
    %v3778 = vpack.c.b16 %v3266, %v3258
    %v3779 = vpack.c.b16 %v3267, %v3259
    %v3780 = vpack.c.b16 %v3268, %v3260
    %v3781 = vpack.c.b16 %v3269, %v3261
    %v3782 = vpack.c.b16 %v3270, %v3262
    %v3783 = vpack.c.b16 %v3271, %v3263
    %v3784 = vpack.c.b16 %v3272, %v3264
    %4297 = vmatprep.subr.bf16.mxu0 %v3274
    %4298 = vmatpush1.bf16.msra.mxu0 %v3273
    %4299 = vmatprep.subr.bf16.mxu0 %v3282
    %4300 = vmatpush1.bf16.msra.mxu0 %v3281
    %4301 = vmatprep.subr.bf16.mxu0 %v3290
    %4302 = vmatpush1.bf16.msra.mxu0 %v3289
    %4303 = vmatprep.subr.bf16.mxu0 %v3298
    %4304 = vmatpush1.bf16.msra.mxu0 %v3297
    %4305 = vmatprep.subr.bf16.mxu0 %v3306
    %4306 = vmatpush1.bf16.msra.mxu0 %v3305
    %4307 = vmatprep.subr.bf16.mxu0 %v3314
    %4308 = vmatpush1.bf16.msra.mxu0 %v3313
    %4309 = vmatprep.subr.bf16.mxu0 %v3322
    %4310 = vmatpush1.bf16.msra.mxu0 %v3321
    %4311 = vmatprep.subr.bf16.mxu0 %v3330
    %4312 = vmatpush1.bf16.msra.mxu0 %v3329
    %4313 = vmatprep.subr.bf16.mxu0 %v3338
    %4314 = vmatpush1.bf16.msra.mxu0 %v3337
    %4315 = vmatprep.subr.bf16.mxu0 %v3346
    %4316 = vmatpush1.bf16.msra.mxu0 %v3345
    %4317 = vmatprep.subr.bf16.mxu0 %v3354
    %4318 = vmatpush1.bf16.msra.mxu0 %v3353
    %4319 = vmatprep.subr.bf16.mxu0 %v3362
    %4320 = vmatpush1.bf16.msra.mxu0 %v3361
    %4321 = vmatprep.subr.bf16.mxu0 %v3370
    %4322 = vmatpush1.bf16.msra.mxu0 %v3369
    %4323 = vmatprep.subr.bf16.mxu0 %v3378
    %4324 = vmatpush1.bf16.msra.mxu0 %v3377
    %4325 = vmatprep.subr.bf16.mxu0 %v3386
    %4326 = vmatpush1.bf16.msra.mxu0 %v3385
    %4327 = vmatprep.subr.bf16.mxu0 %v3394
    %4328 = vmatpush1.bf16.msra.mxu0 %v3393
    %4329 = vmatprep.mubr.bf16.mxu0 %v1176
    %4330 = vmatmul.mubr.bf16.gmra.mrb[0].mxu0 %v1175
    %v4331 = vpop.f32.mrb[0].mxu0
    %v4332 = vadd.f32 %v1700, %v4331
    %v4333 = vpop.f32.mrb[0].mxu0
    %v4334 = vadd.f32 %v1704, %v4333
    %v4335 = vpop.f32.mrb[0].mxu0
    %v4336 = vpop.f32.mrb[0].mxu0
    %4337 = vdwg.mxu0
    %4338 = vmatprep.subr.bf16.mxu0 %v3402
    %4339 = vmatpush1.bf16.msra.mxu0 %v3401
    %4340 = vmatprep.subr.bf16.mxu0 %v3410
    %4341 = vmatpush1.bf16.msra.mxu0 %v3409
    %4342 = vmatprep.subr.bf16.mxu0 %v3418
    %4343 = vmatpush1.bf16.msra.mxu0 %v3417
    %4344 = vmatprep.subr.bf16.mxu0 %v3426
    %4345 = vmatpush1.bf16.msra.mxu0 %v3425
    %4346 = vmatprep.subr.bf16.mxu0 %v3434
    %4347 = vmatpush1.bf16.msra.mxu0 %v3433
    %4348 = vmatprep.subr.bf16.mxu0 %v3442
    %4349 = vmatpush1.bf16.msra.mxu0 %v3441
    %4350 = vmatprep.subr.bf16.mxu0 %v3450
    %4351 = vmatpush1.bf16.msra.mxu0 %v3449
    %4352 = vmatprep.subr.bf16.mxu0 %v3458
    %4353 = vmatpush1.bf16.msra.mxu0 %v3457
    %4354 = vmatprep.subr.bf16.mxu0 %v3466
    %4355 = vmatpush1.bf16.msra.mxu0 %v3465
    %4356 = vmatprep.subr.bf16.mxu0 %v3474
    %4357 = vmatpush1.bf16.msra.mxu0 %v3473
    %4358 = vmatprep.subr.bf16.mxu0 %v3482
    %4359 = vmatpush1.bf16.msra.mxu0 %v3481
    %4360 = vmatprep.subr.bf16.mxu0 %v3490
    %4361 = vmatpush1.bf16.msra.mxu0 %v3489
    %4362 = vmatprep.subr.bf16.mxu0 %v3498
    %4363 = vmatpush1.bf16.msra.mxu0 %v3497
    %4364 = vmatprep.subr.bf16.mxu0 %v3506
    %4365 = vmatpush1.bf16.msra.mxu0 %v3505
    %4366 = vmatprep.subr.bf16.mxu0 %v3514
    %4367 = vmatpush1.bf16.msra.mxu0 %v3513
    %4368 = vmatprep.subr.bf16.mxu0 %v3522
    %4369 = vmatpush1.bf16.msra.mxu0 %v3521
    %4370 = vmatprep.mubr.bf16.mxu0 %v1178
    %4371 = vmatmul.mubr.bf16.gmra.mrb[0].mxu0 %v1177
    %v4372 = vpop.f32.mrb[0].mxu0
    %v4373 = vadd.f32 %v4332, %v4372
    %v4374 = vpop.f32.mrb[0].mxu0
    %v4375 = vadd.f32 %v4334, %v4374
    %v4376 = vpop.f32.mrb[0].mxu0
    %v4377 = vpop.f32.mrb[0].mxu0
    %4378 = vdwg.mxu0
    %4379 = vmatprep.subr.bf16.mxu0 %v3530
    %4380 = vmatpush1.bf16.msra.mxu0 %v3529
    %4381 = vmatprep.subr.bf16.mxu0 %v3538
    %4382 = vmatpush1.bf16.msra.mxu0 %v3537
    %4383 = vmatprep.subr.bf16.mxu0 %v3546
    %4384 = vmatpush1.bf16.msra.mxu0 %v3545
    %4385 = vmatprep.subr.bf16.mxu0 %v3554
    %4386 = vmatpush1.bf16.msra.mxu0 %v3553
    %4387 = vmatprep.subr.bf16.mxu0 %v3562
    %4388 = vmatpush1.bf16.msra.mxu0 %v3561
    %4389 = vmatprep.subr.bf16.mxu0 %v3570
    %4390 = vmatpush1.bf16.msra.mxu0 %v3569
    %4391 = vmatprep.subr.bf16.mxu0 %v3578
    %4392 = vmatpush1.bf16.msra.mxu0 %v3577
    %4393 = vmatprep.subr.bf16.mxu0 %v3586
    %4394 = vmatpush1.bf16.msra.mxu0 %v3585
    %4395 = vmatprep.subr.bf16.mxu0 %v3594
    %4396 = vmatpush1.bf16.msra.mxu0 %v3593
    %4397 = vmatprep.subr.bf16.mxu0 %v3602
    %4398 = vmatpush1.bf16.msra.mxu0 %v3601
    %4399 = vmatprep.subr.bf16.mxu0 %v3610
    %4400 = vmatpush1.bf16.msra.mxu0 %v3609
    %4401 = vmatprep.subr.bf16.mxu0 %v3618
    %4402 = vmatpush1.bf16.msra.mxu0 %v3617
    %4403 = vmatprep.subr.bf16.mxu0 %v3626
    %4404 = vmatpush1.bf16.msra.mxu0 %v3625
    %4405 = vmatprep.subr.bf16.mxu0 %v3634
    %4406 = vmatpush1.bf16.msra.mxu0 %v3633
    %4407 = vmatprep.subr.bf16.mxu0 %v3642
    %4408 = vmatpush1.bf16.msra.mxu0 %v3641
    %4409 = vmatprep.subr.bf16.mxu0 %v3650
    %4410 = vmatpush1.bf16.msra.mxu0 %v3649
    %4411 = vmatprep.mubr.bf16.mxu0 %v1180
    %4412 = vmatmul.mubr.bf16.gmra.mrb[0].mxu0 %v1179
    %v4413 = vpop.f32.mrb[0].mxu0
    %v4414 = vadd.f32 %v4373, %v4413
    %v4415 = vpop.f32.mrb[0].mxu0
    %v4416 = vadd.f32 %v4375, %v4415
    %v4417 = vpop.f32.mrb[0].mxu0
    %v4418 = vpop.f32.mrb[0].mxu0
    %4419 = vdwg.mxu0
    %4420 = vmatprep.subr.bf16.mxu0 %v3658
    %4421 = vmatpush1.bf16.msra.mxu0 %v3657
    %4422 = vmatprep.subr.bf16.mxu0 %v3666
    %4423 = vmatpush1.bf16.msra.mxu0 %v3665
    %4424 = vmatprep.subr.bf16.mxu0 %v3674
    %4425 = vmatpush1.bf16.msra.mxu0 %v3673
    %4426 = vmatprep.subr.bf16.mxu0 %v3682
    %4427 = vmatpush1.bf16.msra.mxu0 %v3681
    %4428 = vmatprep.subr.bf16.mxu0 %v3690
    %4429 = vmatpush1.bf16.msra.mxu0 %v3689
    %4430 = vmatprep.subr.bf16.mxu0 %v3698
    %4431 = vmatpush1.bf16.msra.mxu0 %v3697
    %4432 = vmatprep.subr.bf16.mxu0 %v3706
    %4433 = vmatpush1.bf16.msra.mxu0 %v3705
    %4434 = vmatprep.subr.bf16.mxu0 %v3714
    %4435 = vmatpush1.bf16.msra.mxu0 %v3713
    %4436 = vmatprep.subr.bf16.mxu0 %v3722
    %4437 = vmatpush1.bf16.msra.mxu0 %v3721
    %4438 = vmatprep.subr.bf16.mxu0 %v3730
    %4439 = vmatpush1.bf16.msra.mxu0 %v3729
    %4440 = vmatprep.subr.bf16.mxu0 %v3738
    %4441 = vmatpush1.bf16.msra.mxu0 %v3737
    %4442 = vmatprep.subr.bf16.mxu0 %v3746
    %4443 = vmatpush1.bf16.msra.mxu0 %v3745
    %4444 = vmatprep.subr.bf16.mxu0 %v3754
    %4445 = vmatpush1.bf16.msra.mxu0 %v3753
    %4446 = vmatprep.subr.bf16.mxu0 %v3762
    %4447 = vmatpush1.bf16.msra.mxu0 %v3761
    %4448 = vmatprep.subr.bf16.mxu0 %v3770
    %4449 = vmatpush1.bf16.msra.mxu0 %v3769
    %4450 = vmatprep.subr.bf16.mxu0 %v3778
    %4451 = vmatpush1.bf16.msra.mxu0 %v3777
    %4452 = vmatprep.mubr.bf16.mxu0 %v1182
    %4453 = vmatmul.mubr.bf16.gmra.mrb[0].mxu0 %v1181
    %v4454 = vpop.f32.mrb[0].mxu0
    %v4455 = vadd.f32 %v4414, %v4454
    %v4456 = vpop.f32.mrb[0].mxu0
    %v4457 = vadd.f32 %v4416, %v4456
    %v4458 = vpop.f32.mrb[0].mxu0
    %v4459 = vpop.f32.mrb[0].mxu0
    %4460 = vdwg.mxu0
    %4461 = vmatprep.subr.bf16.mxu0 %v3276
    %4462 = vmatpush1.bf16.msra.mxu0 %v3275
    %4463 = vmatprep.subr.bf16.mxu0 %v3284
    %4464 = vmatpush1.bf16.msra.mxu0 %v3283
    %4465 = vmatprep.subr.bf16.mxu0 %v3292
    %4466 = vmatpush1.bf16.msra.mxu0 %v3291
    %4467 = vmatprep.subr.bf16.mxu0 %v3300
    %4468 = vmatpush1.bf16.msra.mxu0 %v3299
    %4469 = vmatprep.subr.bf16.mxu0 %v3308
    %4470 = vmatpush1.bf16.msra.mxu0 %v3307
    %4471 = vmatprep.subr.bf16.mxu0 %v3316
    %4472 = vmatpush1.bf16.msra.mxu0 %v3315
    %4473 = vmatprep.subr.bf16.mxu0 %v3324
    %4474 = vmatpush1.bf16.msra.mxu0 %v3323
    %4475 = vmatprep.subr.bf16.mxu0 %v3332
    %4476 = vmatpush1.bf16.msra.mxu0 %v3331
    %4477 = vmatprep.subr.bf16.mxu0 %v3340
    %4478 = vmatpush1.bf16.msra.mxu0 %v3339
    %4479 = vmatprep.subr.bf16.mxu0 %v3348
    %4480 = vmatpush1.bf16.msra.mxu0 %v3347
    %4481 = vmatprep.subr.bf16.mxu0 %v3356
    %4482 = vmatpush1.bf16.msra.mxu0 %v3355
    %4483 = vmatprep.subr.bf16.mxu0 %v3364
    %4484 = vmatpush1.bf16.msra.mxu0 %v3363
    %4485 = vmatprep.subr.bf16.mxu0 %v3372
    %4486 = vmatpush1.bf16.msra.mxu0 %v3371
    %4487 = vmatprep.subr.bf16.mxu0 %v3380
    %4488 = vmatpush1.bf16.msra.mxu0 %v3379
    %4489 = vmatprep.subr.bf16.mxu0 %v3388
    %4490 = vmatpush1.bf16.msra.mxu0 %v3387
    %4491 = vmatprep.subr.bf16.mxu0 %v3396
    %4492 = vmatpush1.bf16.msra.mxu0 %v3395
    %4493 = vmatprep.mubr.bf16.mxu0 %v1176
    %4494 = vmatmul.mubr.bf16.gmra.mrb[0].mxu0 %v1175
    %v4495 = vpop.f32.mrb[0].mxu0
    %v4496 = vadd.f32 %v1708, %v4495
    %v4497 = vpop.f32.mrb[0].mxu0
    %v4498 = vadd.f32 %v1712, %v4497
    %v4499 = vpop.f32.mrb[0].mxu0
    %v4500 = vpop.f32.mrb[0].mxu0
    %4501 = vdwg.mxu0
    %4502 = vmatprep.subr.bf16.mxu0 %v3404
    %4503 = vmatpush1.bf16.msra.mxu0 %v3403
    %4504 = vmatprep.subr.bf16.mxu0 %v3412
    %4505 = vmatpush1.bf16.msra.mxu0 %v3411
    %4506 = vmatprep.subr.bf16.mxu0 %v3420
    %4507 = vmatpush1.bf16.msra.mxu0 %v3419
    %4508 = vmatprep.subr.bf16.mxu0 %v3428
    %4509 = vmatpush1.bf16.msra.mxu0 %v3427
    %4510 = vmatprep.subr.bf16.mxu0 %v3436
    %4511 = vmatpush1.bf16.msra.mxu0 %v3435
    %4512 = vmatprep.subr.bf16.mxu0 %v3444
    %4513 = vmatpush1.bf16.msra.mxu0 %v3443
    %4514 = vmatprep.subr.bf16.mxu0 %v3452
    %4515 = vmatpush1.bf16.msra.mxu0 %v3451
    %4516 = vmatprep.subr.bf16.mxu0 %v3460
    %4517 = vmatpush1.bf16.msra.mxu0 %v3459
    %4518 = vmatprep.subr.bf16.mxu0 %v3468
    %4519 = vmatpush1.bf16.msra.mxu0 %v3467
    %4520 = vmatprep.subr.bf16.mxu0 %v3476
    %4521 = vmatpush1.bf16.msra.mxu0 %v3475
    %4522 = vmatprep.subr.bf16.mxu0 %v3484
    %4523 = vmatpush1.bf16.msra.mxu0 %v3483
    %4524 = vmatprep.subr.bf16.mxu0 %v3492
    %4525 = vmatpush1.bf16.msra.mxu0 %v3491
    %4526 = vmatprep.subr.bf16.mxu0 %v3500
    %4527 = vmatpush1.bf16.msra.mxu0 %v3499
    %4528 = vmatprep.subr.bf16.mxu0 %v3508
    %4529 = vmatpush1.bf16.msra.mxu0 %v3507
    %4530 = vmatprep.subr.bf16.mxu0 %v3516
    %4531 = vmatpush1.bf16.msra.mxu0 %v3515
    %4532 = vmatprep.subr.bf16.mxu0 %v3524
    %4533 = vmatpush1.bf16.msra.mxu0 %v3523
    %4534 = vmatprep.mubr.bf16.mxu0 %v1178
    %4535 = vmatmul.mubr.bf16.gmra.mrb[0].mxu0 %v1177
    %v4536 = vpop.f32.mrb[0].mxu0
    %v4537 = vadd.f32 %v4496, %v4536
    %v4538 = vpop.f32.mrb[0].mxu0
    %v4539 = vadd.f32 %v4498, %v4538
    %v4540 = vpop.f32.mrb[0].mxu0
    %v4541 = vpop.f32.mrb[0].mxu0
    %4542 = vdwg.mxu0
    %4543 = vmatprep.subr.bf16.mxu0 %v3532
    %4544 = vmatpush1.bf16.msra.mxu0 %v3531
    %4545 = vmatprep.subr.bf16.mxu0 %v3540
    %4546 = vmatpush1.bf16.msra.mxu0 %v3539
    %4547 = vmatprep.subr.bf16.mxu0 %v3548
    %4548 = vmatpush1.bf16.msra.mxu0 %v3547
    %4549 = vmatprep.subr.bf16.mxu0 %v3556
    %4550 = vmatpush1.bf16.msra.mxu0 %v3555
    %4551 = vmatprep.subr.bf16.mxu0 %v3564
    %4552 = vmatpush1.bf16.msra.mxu0 %v3563
    %4553 = vmatprep.subr.bf16.mxu0 %v3572
    %4554 = vmatpush1.bf16.msra.mxu0 %v3571
    %4555 = vmatprep.subr.bf16.mxu0 %v3580
    %4556 = vmatpush1.bf16.msra.mxu0 %v3579
    %4557 = vmatprep.subr.bf16.mxu0 %v3588
    %4558 = vmatpush1.bf16.msra.mxu0 %v3587
    %4559 = vmatprep.subr.bf16.mxu0 %v3596
    %4560 = vmatpush1.bf16.msra.mxu0 %v3595
    %4561 = vmatprep.subr.bf16.mxu0 %v3604
    %4562 = vmatpush1.bf16.msra.mxu0 %v3603
    %4563 = vmatprep.subr.bf16.mxu0 %v3612
    %4564 = vmatpush1.bf16.msra.mxu0 %v3611
    %4565 = vmatprep.subr.bf16.mxu0 %v3620
    %4566 = vmatpush1.bf16.msra.mxu0 %v3619
    %4567 = vmatprep.subr.bf16.mxu0 %v3628
    %4568 = vmatpush1.bf16.msra.mxu0 %v3627
    %4569 = vmatprep.subr.bf16.mxu0 %v3636
    %4570 = vmatpush1.bf16.msra.mxu0 %v3635
    %4571 = vmatprep.subr.bf16.mxu0 %v3644
    %4572 = vmatpush1.bf16.msra.mxu0 %v3643
    %4573 = vmatprep.subr.bf16.mxu0 %v3652
    %4574 = vmatpush1.bf16.msra.mxu0 %v3651
    %4575 = vmatprep.mubr.bf16.mxu0 %v1180
    %4576 = vmatmul.mubr.bf16.gmra.mrb[0].mxu0 %v1179
    %v4577 = vpop.f32.mrb[0].mxu0
    %v4578 = vadd.f32 %v4537, %v4577
    %v4579 = vpop.f32.mrb[0].mxu0
    %v4580 = vadd.f32 %v4539, %v4579
    %v4581 = vpop.f32.mrb[0].mxu0
    %v4582 = vpop.f32.mrb[0].mxu0
    %4583 = vdwg.mxu0
    %4584 = vmatprep.subr.bf16.mxu0 %v3660
    %4585 = vmatpush1.bf16.msra.mxu0 %v3659
    %4586 = vmatprep.subr.bf16.mxu0 %v3668
    %4587 = vmatpush1.bf16.msra.mxu0 %v3667
    %4588 = vmatprep.subr.bf16.mxu0 %v3676
    %4589 = vmatpush1.bf16.msra.mxu0 %v3675
    %4590 = vmatprep.subr.bf16.mxu0 %v3684
    %4591 = vmatpush1.bf16.msra.mxu0 %v3683
    %4592 = vmatprep.subr.bf16.mxu0 %v3692
    %4593 = vmatpush1.bf16.msra.mxu0 %v3691
    %4594 = vmatprep.subr.bf16.mxu0 %v3700
    %4595 = vmatpush1.bf16.msra.mxu0 %v3699
    %4596 = vmatprep.subr.bf16.mxu0 %v3708
    %4597 = vmatpush1.bf16.msra.mxu0 %v3707
    %4598 = vmatprep.subr.bf16.mxu0 %v3716
    %4599 = vmatpush1.bf16.msra.mxu0 %v3715
    %4600 = vmatprep.subr.bf16.mxu0 %v3724
    %4601 = vmatpush1.bf16.msra.mxu0 %v3723
    %4602 = vmatprep.subr.bf16.mxu0 %v3732
    %4603 = vmatpush1.bf16.msra.mxu0 %v3731
    %4604 = vmatprep.subr.bf16.mxu0 %v3740
    %4605 = vmatpush1.bf16.msra.mxu0 %v3739
    %4606 = vmatprep.subr.bf16.mxu0 %v3748
    %4607 = vmatpush1.bf16.msra.mxu0 %v3747
    %4608 = vmatprep.subr.bf16.mxu0 %v3756
    %4609 = vmatpush1.bf16.msra.mxu0 %v3755
    %4610 = vmatprep.subr.bf16.mxu0 %v3764
    %4611 = vmatpush1.bf16.msra.mxu0 %v3763
    %4612 = vmatprep.subr.bf16.mxu0 %v3772
    %4613 = vmatpush1.bf16.msra.mxu0 %v3771
    %4614 = vmatprep.subr.bf16.mxu0 %v3780
    %4615 = vmatpush1.bf16.msra.mxu0 %v3779
    %4616 = vmatprep.mubr.bf16.mxu0 %v1182
    %4617 = vmatmul.mubr.bf16.gmra.mrb[0].mxu0 %v1181
    %v4618 = vpop.f32.mrb[0].mxu0
    %v4619 = vadd.f32 %v4578, %v4618
    %v4620 = vpop.f32.mrb[0].mxu0
    %v4621 = vadd.f32 %v4580, %v4620
    %v4622 = vpop.f32.mrb[0].mxu0
    %v4623 = vpop.f32.mrb[0].mxu0
    %4624 = vdwg.mxu0
    %4625 = vmatprep.subr.bf16.mxu0 %v3278
    %4626 = vmatpush1.bf16.msra.mxu0 %v3277
    %4627 = vmatprep.subr.bf16.mxu0 %v3286
    %4628 = vmatpush1.bf16.msra.mxu0 %v3285
    %4629 = vmatprep.subr.bf16.mxu0 %v3294
    %4630 = vmatpush1.bf16.msra.mxu0 %v3293
    %4631 = vmatprep.subr.bf16.mxu0 %v3302
    %4632 = vmatpush1.bf16.msra.mxu0 %v3301
    %4633 = vmatprep.subr.bf16.mxu0 %v3310
    %4634 = vmatpush1.bf16.msra.mxu0 %v3309
    %4635 = vmatprep.subr.bf16.mxu0 %v3318
    %4636 = vmatpush1.bf16.msra.mxu0 %v3317
    %4637 = vmatprep.subr.bf16.mxu0 %v3326
    %4638 = vmatpush1.bf16.msra.mxu0 %v3325
    %4639 = vmatprep.subr.bf16.mxu0 %v3334
    %4640 = vmatpush1.bf16.msra.mxu0 %v3333
    %4641 = vmatprep.subr.bf16.mxu0 %v3342
    %4642 = vmatpush1.bf16.msra.mxu0 %v3341
    %4643 = vmatprep.subr.bf16.mxu0 %v3350
    %4644 = vmatpush1.bf16.msra.mxu0 %v3349
    %4645 = vmatprep.subr.bf16.mxu0 %v3358
    %4646 = vmatpush1.bf16.msra.mxu0 %v3357
    %4647 = vmatprep.subr.bf16.mxu0 %v3366
    %4648 = vmatpush1.bf16.msra.mxu0 %v3365
    %4649 = vmatprep.subr.bf16.mxu0 %v3374
    %4650 = vmatpush1.bf16.msra.mxu0 %v3373
    %4651 = vmatprep.subr.bf16.mxu0 %v3382
    %4652 = vmatpush1.bf16.msra.mxu0 %v3381
    %4653 = vmatprep.subr.bf16.mxu0 %v3390
    %4654 = vmatpush1.bf16.msra.mxu0 %v3389
    %4655 = vmatprep.subr.bf16.mxu0 %v3398
    %4656 = vmatpush1.bf16.msra.mxu0 %v3397
    %4657 = vmatprep.mubr.bf16.mxu0 %v1176
    %4658 = vmatmul.mubr.bf16.gmra.mrb[0].mxu0 %v1175
    %v4659 = vpop.f32.mrb[0].mxu0
    %v4660 = vadd.f32 %v1716, %v4659
    %v4661 = vpop.f32.mrb[0].mxu0
    %v4662 = vadd.f32 %v1720, %v4661
    %v4663 = vpop.f32.mrb[0].mxu0
    %v4664 = vpop.f32.mrb[0].mxu0
    %4665 = vdwg.mxu0
    %4666 = vmatprep.subr.bf16.mxu0 %v3406
    %4667 = vmatpush1.bf16.msra.mxu0 %v3405
    %4668 = vmatprep.subr.bf16.mxu0 %v3414
    %4669 = vmatpush1.bf16.msra.mxu0 %v3413
    %4670 = vmatprep.subr.bf16.mxu0 %v3422
    %4671 = vmatpush1.bf16.msra.mxu0 %v3421
    %4672 = vmatprep.subr.bf16.mxu0 %v3430
    %4673 = vmatpush1.bf16.msra.mxu0 %v3429
    %4674 = vmatprep.subr.bf16.mxu0 %v3438
    %4675 = vmatpush1.bf16.msra.mxu0 %v3437
    %4676 = vmatprep.subr.bf16.mxu0 %v3446
    %4677 = vmatpush1.bf16.msra.mxu0 %v3445
    %4678 = vmatprep.subr.bf16.mxu0 %v3454
    %4679 = vmatpush1.bf16.msra.mxu0 %v3453
    %4680 = vmatprep.subr.bf16.mxu0 %v3462
    %4681 = vmatpush1.bf16.msra.mxu0 %v3461
    %4682 = vmatprep.subr.bf16.mxu0 %v3470
    %4683 = vmatpush1.bf16.msra.mxu0 %v3469
    %4684 = vmatprep.subr.bf16.mxu0 %v3478
    %4685 = vmatpush1.bf16.msra.mxu0 %v3477
    %4686 = vmatprep.subr.bf16.mxu0 %v3486
    %4687 = vmatpush1.bf16.msra.mxu0 %v3485
    %4688 = vmatprep.subr.bf16.mxu0 %v3494
    %4689 = vmatpush1.bf16.msra.mxu0 %v3493
    %4690 = vmatprep.subr.bf16.mxu0 %v3502
    %4691 = vmatpush1.bf16.msra.mxu0 %v3501
    %4692 = vmatprep.subr.bf16.mxu0 %v3510
    %4693 = vmatpush1.bf16.msra.mxu0 %v3509
    %4694 = vmatprep.subr.bf16.mxu0 %v3518
    %4695 = vmatpush1.bf16.msra.mxu0 %v3517
    %4696 = vmatprep.subr.bf16.mxu0 %v3526
    %4697 = vmatpush1.bf16.msra.mxu0 %v3525
    %4698 = vmatprep.mubr.bf16.mxu0 %v1178
    %4699 = vmatmul.mubr.bf16.gmra.mrb[0].mxu0 %v1177
    %v4700 = vpop.f32.mrb[0].mxu0
    %v4701 = vadd.f32 %v4660, %v4700
    %v4702 = vpop.f32.mrb[0].mxu0
    %v4703 = vadd.f32 %v4662, %v4702
    %v4704 = vpop.f32.mrb[0].mxu0
    %v4705 = vpop.f32.mrb[0].mxu0
    %4706 = vdwg.mxu0
    %4707 = vmatprep.subr.bf16.mxu0 %v3534
    %4708 = vmatpush1.bf16.msra.mxu0 %v3533
    %4709 = vmatprep.subr.bf16.mxu0 %v3542
    %4710 = vmatpush1.bf16.msra.mxu0 %v3541
    %4711 = vmatprep.subr.bf16.mxu0 %v3550
    %4712 = vmatpush1.bf16.msra.mxu0 %v3549
    %4713 = vmatprep.subr.bf16.mxu0 %v3558
    %4714 = vmatpush1.bf16.msra.mxu0 %v3557
    %4715 = vmatprep.subr.bf16.mxu0 %v3566
    %4716 = vmatpush1.bf16.msra.mxu0 %v3565
    %4717 = vmatprep.subr.bf16.mxu0 %v3574
    %4718 = vmatpush1.bf16.msra.mxu0 %v3573
    %4719 = vmatprep.subr.bf16.mxu0 %v3582
    %4720 = vmatpush1.bf16.msra.mxu0 %v3581
    %4721 = vmatprep.subr.bf16.mxu0 %v3590
    %4722 = vmatpush1.bf16.msra.mxu0 %v3589
    %4723 = vmatprep.subr.bf16.mxu0 %v3598
    %4724 = vmatpush1.bf16.msra.mxu0 %v3597
    %4725 = vmatprep.subr.bf16.mxu0 %v3606
    %4726 = vmatpush1.bf16.msra.mxu0 %v3605
    %4727 = vmatprep.subr.bf16.mxu0 %v3614
    %4728 = vmatpush1.bf16.msra.mxu0 %v3613
    %4729 = vmatprep.subr.bf16.mxu0 %v3622
    %4730 = vmatpush1.bf16.msra.mxu0 %v3621
    %4731 = vmatprep.subr.bf16.mxu0 %v3630
    %4732 = vmatpush1.bf16.msra.mxu0 %v3629
    %4733 = vmatprep.subr.bf16.mxu0 %v3638
    %4734 = vmatpush1.bf16.msra.mxu0 %v3637
    %4735 = vmatprep.subr.bf16.mxu0 %v3646
    %4736 = vmatpush1.bf16.msra.mxu0 %v3645
    %4737 = vmatprep.subr.bf16.mxu0 %v3654
    %4738 = vmatpush1.bf16.msra.mxu0 %v3653
    %4739 = vmatprep.mubr.bf16.mxu0 %v1180
    %4740 = vmatmul.mubr.bf16.gmra.mrb[0].mxu0 %v1179
    %v4741 = vpop.f32.mrb[0].mxu0
    %v4742 = vadd.f32 %v4701, %v4741
    %v4743 = vpop.f32.mrb[0].mxu0
    %v4744 = vadd.f32 %v4703, %v4743
    %v4745 = vpop.f32.mrb[0].mxu0
    %v4746 = vpop.f32.mrb[0].mxu0
    %4747 = vdwg.mxu0
    %4748 = vmatprep.subr.bf16.mxu0 %v3662
    %4749 = vmatpush1.bf16.msra.mxu0 %v3661
    %4750 = vmatprep.subr.bf16.mxu0 %v3670
    %4751 = vmatpush1.bf16.msra.mxu0 %v3669
    %4752 = vmatprep.subr.bf16.mxu0 %v3678
    %4753 = vmatpush1.bf16.msra.mxu0 %v3677
    %4754 = vmatprep.subr.bf16.mxu0 %v3686
    %4755 = vmatpush1.bf16.msra.mxu0 %v3685
    %4756 = vmatprep.subr.bf16.mxu0 %v3694
    %4757 = vmatpush1.bf16.msra.mxu0 %v3693
    %4758 = vmatprep.subr.bf16.mxu0 %v3702
    %4759 = vmatpush1.bf16.msra.mxu0 %v3701
    %4760 = vmatprep.subr.bf16.mxu0 %v3710
    %4761 = vmatpush1.bf16.msra.mxu0 %v3709
    %4762 = vmatprep.subr.bf16.mxu0 %v3718
    %4763 = vmatpush1.bf16.msra.mxu0 %v3717
    %4764 = vmatprep.subr.bf16.mxu0 %v3726
    %4765 = vmatpush1.bf16.msra.mxu0 %v3725
    %4766 = vmatprep.subr.bf16.mxu0 %v3734
    %4767 = vmatpush1.bf16.msra.mxu0 %v3733
    %4768 = vmatprep.subr.bf16.mxu0 %v3742
    %4769 = vmatpush1.bf16.msra.mxu0 %v3741
    %4770 = vmatprep.subr.bf16.mxu0 %v3750
    %4771 = vmatpush1.bf16.msra.mxu0 %v3749
    %4772 = vmatprep.subr.bf16.mxu0 %v3758
    %4773 = vmatpush1.bf16.msra.mxu0 %v3757
    %4774 = vmatprep.subr.bf16.mxu0 %v3766
    %4775 = vmatpush1.bf16.msra.mxu0 %v3765
    %4776 = vmatprep.subr.bf16.mxu0 %v3774
    %4777 = vmatpush1.bf16.msra.mxu0 %v3773
    %4778 = vmatprep.subr.bf16.mxu0 %v3782
    %4779 = vmatpush1.bf16.msra.mxu0 %v3781
    %4780 = vmatprep.mubr.bf16.mxu0 %v1182
    %4781 = vmatmul.mubr.bf16.gmra.mrb[0].mxu0 %v1181
    %v4782 = vpop.f32.mrb[0].mxu0
    %v4783 = vadd.f32 %v4742, %v4782
    %v4784 = vpop.f32.mrb[0].mxu0
    %v4785 = vadd.f32 %v4744, %v4784
    %v4786 = vpop.f32.mrb[0].mxu0
    %v4787 = vpop.f32.mrb[0].mxu0
    %4788 = vdwg.mxu0
    %4789 = vmatprep.subr.bf16.mxu0 %v3280
    %4790 = vmatpush1.bf16.msra.mxu0 %v3279
    %4791 = vmatprep.subr.bf16.mxu0 %v3288
    %4792 = vmatpush1.bf16.msra.mxu0 %v3287
    %4793 = vmatprep.subr.bf16.mxu0 %v3296
    %4794 = vmatpush1.bf16.msra.mxu0 %v3295
    %4795 = vmatprep.subr.bf16.mxu0 %v3304
    %4796 = vmatpush1.bf16.msra.mxu0 %v3303
    %4797 = vmatprep.subr.bf16.mxu0 %v3312
    %4798 = vmatpush1.bf16.msra.mxu0 %v3311
    %4799 = vmatprep.subr.bf16.mxu0 %v3320
    %4800 = vmatpush1.bf16.msra.mxu0 %v3319
    %4801 = vmatprep.subr.bf16.mxu0 %v3328
    %4802 = vmatpush1.bf16.msra.mxu0 %v3327
    %4803 = vmatprep.subr.bf16.mxu0 %v3336
    %4804 = vmatpush1.bf16.msra.mxu0 %v3335
    %4805 = vmatprep.subr.bf16.mxu0 %v3344
    %4806 = vmatpush1.bf16.msra.mxu0 %v3343
    %4807 = vmatprep.subr.bf16.mxu0 %v3352
    %4808 = vmatpush1.bf16.msra.mxu0 %v3351
    %4809 = vmatprep.subr.bf16.mxu0 %v3360
    %4810 = vmatpush1.bf16.msra.mxu0 %v3359
    %4811 = vmatprep.subr.bf16.mxu0 %v3368
    %4812 = vmatpush1.bf16.msra.mxu0 %v3367
    %4813 = vmatprep.subr.bf16.mxu0 %v3376
    %4814 = vmatpush1.bf16.msra.mxu0 %v3375
    %4815 = vmatprep.subr.bf16.mxu0 %v3384
    %4816 = vmatpush1.bf16.msra.mxu0 %v3383
    %4817 = vmatprep.subr.bf16.mxu0 %v3392
    %4818 = vmatpush1.bf16.msra.mxu0 %v3391
    %4819 = vmatprep.subr.bf16.mxu0 %v3400
    %4820 = vmatpush1.bf16.msra.mxu0 %v3399
    %4821 = vmatprep.mubr.bf16.mxu0 %v1176
    %4822 = vmatmul.mubr.bf16.gmra.mrb[0].mxu0 %v1175
    %v4823 = vpop.f32.mrb[0].mxu0
    %v4824 = vadd.f32 %v1724, %v4823
    %v4825 = vpop.f32.mrb[0].mxu0
    %v4826 = vadd.f32 %v1728, %v4825
    %v4827 = vpop.f32.mrb[0].mxu0
    %v4828 = vpop.f32.mrb[0].mxu0
    %4829 = vdwg.mxu0
    %4830 = vmatprep.subr.bf16.mxu0 %v3408
    %4831 = vmatpush1.bf16.msra.mxu0 %v3407
    %4832 = vmatprep.subr.bf16.mxu0 %v3416
    %4833 = vmatpush1.bf16.msra.mxu0 %v3415
    %4834 = vmatprep.subr.bf16.mxu0 %v3424
    %4835 = vmatpush1.bf16.msra.mxu0 %v3423
    %4836 = vmatprep.subr.bf16.mxu0 %v3432
    %4837 = vmatpush1.bf16.msra.mxu0 %v3431
    %4838 = vmatprep.subr.bf16.mxu0 %v3440
    %4839 = vmatpush1.bf16.msra.mxu0 %v3439
    %4840 = vmatprep.subr.bf16.mxu0 %v3448
    %4841 = vmatpush1.bf16.msra.mxu0 %v3447
    %4842 = vmatprep.subr.bf16.mxu0 %v3456
    %4843 = vmatpush1.bf16.msra.mxu0 %v3455
    %4844 = vmatprep.subr.bf16.mxu0 %v3464
    %4845 = vmatpush1.bf16.msra.mxu0 %v3463
    %4846 = vmatprep.subr.bf16.mxu0 %v3472
    %4847 = vmatpush1.bf16.msra.mxu0 %v3471
    %4848 = vmatprep.subr.bf16.mxu0 %v3480
    %4849 = vmatpush1.bf16.msra.mxu0 %v3479
    %4850 = vmatprep.subr.bf16.mxu0 %v3488
    %4851 = vmatpush1.bf16.msra.mxu0 %v3487
    %4852 = vmatprep.subr.bf16.mxu0 %v3496
    %4853 = vmatpush1.bf16.msra.mxu0 %v3495
    %4854 = vmatprep.subr.bf16.mxu0 %v3504
    %4855 = vmatpush1.bf16.msra.mxu0 %v3503
    %4856 = vmatprep.subr.bf16.mxu0 %v3512
    %4857 = vmatpush1.bf16.msra.mxu0 %v3511
    %4858 = vmatprep.subr.bf16.mxu0 %v3520
    %4859 = vmatpush1.bf16.msra.mxu0 %v3519
    %4860 = vmatprep.subr.bf16.mxu0 %v3528
    %4861 = vmatpush1.bf16.msra.mxu0 %v3527
    %4862 = vmatprep.mubr.bf16.mxu0 %v1178
    %4863 = vmatmul.mubr.bf16.gmra.mrb[0].mxu0 %v1177
    %v4864 = vpop.f32.mrb[0].mxu0
    %v4865 = vadd.f32 %v4824, %v4864
    %v4866 = vpop.f32.mrb[0].mxu0
    %v4867 = vadd.f32 %v4826, %v4866
    %v4868 = vpop.f32.mrb[0].mxu0
    %v4869 = vpop.f32.mrb[0].mxu0
    %4870 = vdwg.mxu0
    %4871 = vmatprep.subr.bf16.mxu0 %v3536
    %4872 = vmatpush1.bf16.msra.mxu0 %v3535
    %4873 = vmatprep.subr.bf16.mxu0 %v3544
    %4874 = vmatpush1.bf16.msra.mxu0 %v3543
    %4875 = vmatprep.subr.bf16.mxu0 %v3552
    %4876 = vmatpush1.bf16.msra.mxu0 %v3551
    %4877 = vmatprep.subr.bf16.mxu0 %v3560
    %4878 = vmatpush1.bf16.msra.mxu0 %v3559
    %4879 = vmatprep.subr.bf16.mxu0 %v3568
    %4880 = vmatpush1.bf16.msra.mxu0 %v3567
    %4881 = vmatprep.subr.bf16.mxu0 %v3576
    %4882 = vmatpush1.bf16.msra.mxu0 %v3575
    %4883 = vmatprep.subr.bf16.mxu0 %v3584
    %4884 = vmatpush1.bf16.msra.mxu0 %v3583
    %4885 = vmatprep.subr.bf16.mxu0 %v3592
    %4886 = vmatpush1.bf16.msra.mxu0 %v3591
    %4887 = vmatprep.subr.bf16.mxu0 %v3600
    %4888 = vmatpush1.bf16.msra.mxu0 %v3599
    %4889 = vmatprep.subr.bf16.mxu0 %v3608
    %4890 = vmatpush1.bf16.msra.mxu0 %v3607
    %4891 = vmatprep.subr.bf16.mxu0 %v3616
    %4892 = vmatpush1.bf16.msra.mxu0 %v3615
    %4893 = vmatprep.subr.bf16.mxu0 %v3624
    %4894 = vmatpush1.bf16.msra.mxu0 %v3623
    %4895 = vmatprep.subr.bf16.mxu0 %v3632
    %4896 = vmatpush1.bf16.msra.mxu0 %v3631
    %4897 = vmatprep.subr.bf16.mxu0 %v3640
    %4898 = vmatpush1.bf16.msra.mxu0 %v3639
    %4899 = vmatprep.subr.bf16.mxu0 %v3648
    %4900 = vmatpush1.bf16.msra.mxu0 %v3647
    %4901 = vmatprep.subr.bf16.mxu0 %v3656
    %4902 = vmatpush1.bf16.msra.mxu0 %v3655
    %4903 = vmatprep.mubr.bf16.mxu0 %v1180
    %4904 = vmatmul.mubr.bf16.gmra.mrb[0].mxu0 %v1179
    %v4905 = vpop.f32.mrb[0].mxu0
    %v4906 = vadd.f32 %v4865, %v4905
    %v4907 = vpop.f32.mrb[0].mxu0
    %v4908 = vadd.f32 %v4867, %v4907
    %v4909 = vpop.f32.mrb[0].mxu0
    %v4910 = vpop.f32.mrb[0].mxu0
    %4911 = vdwg.mxu0
    %4912 = vmatprep.subr.bf16.mxu0 %v3664
    %4913 = vmatpush1.bf16.msra.mxu0 %v3663
    %4914 = vmatprep.subr.bf16.mxu0 %v3672
    %4915 = vmatpush1.bf16.msra.mxu0 %v3671
    %4916 = vmatprep.subr.bf16.mxu0 %v3680
    %4917 = vmatpush1.bf16.msra.mxu0 %v3679
    %4918 = vmatprep.subr.bf16.mxu0 %v3688
    %4919 = vmatpush1.bf16.msra.mxu0 %v3687
    %4920 = vmatprep.subr.bf16.mxu0 %v3696
    %4921 = vmatpush1.bf16.msra.mxu0 %v3695
    %4922 = vmatprep.subr.bf16.mxu0 %v3704
    %4923 = vmatpush1.bf16.msra.mxu0 %v3703
    %4924 = vmatprep.subr.bf16.mxu0 %v3712
    %4925 = vmatpush1.bf16.msra.mxu0 %v3711
    %4926 = vmatprep.subr.bf16.mxu0 %v3720
    %4927 = vmatpush1.bf16.msra.mxu0 %v3719
    %4928 = vmatprep.subr.bf16.mxu0 %v3728
    %4929 = vmatpush1.bf16.msra.mxu0 %v3727
    %4930 = vmatprep.subr.bf16.mxu0 %v3736
    %4931 = vmatpush1.bf16.msra.mxu0 %v3735
    %4932 = vmatprep.subr.bf16.mxu0 %v3744
    %4933 = vmatpush1.bf16.msra.mxu0 %v3743
    %4934 = vmatprep.subr.bf16.mxu0 %v3752
    %4935 = vmatpush1.bf16.msra.mxu0 %v3751
    %4936 = vmatprep.subr.bf16.mxu0 %v3760
    %4937 = vmatpush1.bf16.msra.mxu0 %v3759
    %4938 = vmatprep.subr.bf16.mxu0 %v3768
    %4939 = vmatpush1.bf16.msra.mxu0 %v3767
    %4940 = vmatprep.subr.bf16.mxu0 %v3776
    %4941 = vmatpush1.bf16.msra.mxu0 %v3775
    %4942 = vmatprep.subr.bf16.mxu0 %v3784
    %4943 = vmatpush1.bf16.msra.mxu0 %v3783
    %4944 = vmatprep.mubr.bf16.mxu0 %v1182
    %4945 = vmatmul.mubr.bf16.gmra.mrb[0].mxu0 %v1181
    %v4946 = vpop.f32.mrb[0].mxu0
    %v4947 = vadd.f32 %v4906, %v4946
    %v4948 = vpop.f32.mrb[0].mxu0
    %v4949 = vadd.f32 %v4908, %v4948
    %v4950 = vpop.f32.mrb[0].mxu0
    %v4951 = vpop.f32.mrb[0].mxu0
    %4952 = vdwg.mxu0
    %v4953 = vmax.f32 %v4455, 0.0
    %v4954 = vmax.f32 %v4457, 0.0
    %v4955 = vmax.f32 %v4619, 0.0
    %v4956 = vmax.f32 %v4621, 0.0
    %v4957 = vmax.f32 %v4783, 0.0
    %v4958 = vmax.f32 %v4785, 0.0
    %v4959 = vmax.f32 %v4947, 0.0
    %v4960 = vmax.f32 %v4949, 0.0
    %v4961 = vpack.c.bf16 %v4953, %v4953
    %v4962 = vpack.c.bf16 %v4954, %v4954
    %v4963 = vpack.c.bf16 %v4955, %v4955
    %v4964 = vpack.c.bf16 %v4956, %v4956
    %v4965 = vpack.c.bf16 %v4957, %v4957
    %v4966 = vpack.c.bf16 %v4958, %v4958
    %v4967 = vpack.c.bf16 %v4959, %v4959
    %v4968 = vpack.c.bf16 %v4960, %v4960
    %v4969 = vld [vmem:[#allocation11 + $0x12] sm:$0x3]
    %v4970 = vld [vmem:[#allocation10] sm:$0xff]
    %v4971 = vld [vmem:[#allocation10 + $0x8] sm:$0xff]
    %v4972 = vld [vmem:[#allocation10 + $0x10] sm:$0xff]
    %v4973 = vld [vmem:[#allocation10 + $0x18] sm:$0xff]
    %v4974 = vld [vmem:[#allocation10 + $0x20] sm:$0xff]
    %v4975 = vld [vmem:[#allocation10 + $0x28] sm:$0xff]
    %v4976 = vld [vmem:[#allocation10 + $0x30] sm:$0xff]
    %v4977 = vld [vmem:[#allocation10 + $0x38] sm:$0xff]
    %v4978 = vld [vmem:[#allocation10 + $0x40] sm:$0xff]
    %v4979 = vld [vmem:[#allocation10 + $0x48] sm:$0xff]
    %v4980 = vld [vmem:[#allocation10 + $0x50] sm:$0xff]
    %v4981 = vld [vmem:[#allocation10 + $0x58] sm:$0xff]
    %v4982 = vld [vmem:[#allocation10 + $0x60] sm:$0xff]
    %v4983 = vld [vmem:[#allocation10 + $0x68] sm:$0xff]
    %v4984 = vld [vmem:[#allocation10 + $0x70] sm:$0xff]
    %v4985 = vld [vmem:[#allocation10 + $0x78] sm:$0xff]
    %v4986 = vld [vmem:[#allocation10 + $0x80] sm:$0xff]
    %v4987 = vld [vmem:[#allocation10 + $0x88] sm:$0xff]
    %v4988 = vld [vmem:[#allocation10 + $0x90] sm:$0xff]
    %v4989 = vld [vmem:[#allocation10 + $0x98] sm:$0xff]
    %v4990 = vld [vmem:[#allocation10 + $0xa0] sm:$0xff]
    %v4991 = vld [vmem:[#allocation10 + $0xa8] sm:$0xff]
    %v4992 = vld [vmem:[#allocation10 + $0xb0] sm:$0xff]
    %v4993 = vld [vmem:[#allocation10 + $0xb8] sm:$0xff]
    %v4994 = vld [vmem:[#allocation10 + $0xc0] sm:$0xff]
    %v4995 = vld [vmem:[#allocation10 + $0xc8] sm:$0xff]
    %v4996 = vld [vmem:[#allocation10 + $0xd0] sm:$0xff]
    %v4997 = vld [vmem:[#allocation10 + $0xd8] sm:$0xff]
    %v4998 = vld [vmem:[#allocation10 + $0xe0] sm:$0xff]
    %v4999 = vld [vmem:[#allocation10 + $0xe8] sm:$0xff]
    %v5000 = vld [vmem:[#allocation10 + $0xf0] sm:$0xff]
    %v5001 = vld [vmem:[#allocation10 + $0xf8] sm:$0xff]
    %v5002 = vld [vmem:[#allocation10 + $0x100] sm:$0xff]
    %v5003 = vld [vmem:[#allocation10 + $0x108] sm:$0xff]
    %v5004 = vld [vmem:[#allocation10 + $0x110] sm:$0xff]
    %v5005 = vld [vmem:[#allocation10 + $0x118] sm:$0xff]
    %v5006 = vld [vmem:[#allocation10 + $0x120] sm:$0xff]
    %v5007 = vld [vmem:[#allocation10 + $0x128] sm:$0xff]
    %v5008 = vld [vmem:[#allocation10 + $0x130] sm:$0xff]
    %v5009 = vld [vmem:[#allocation10 + $0x138] sm:$0xff]
    %v5010 = vld [vmem:[#allocation10 + $0x140] sm:$0xff]
    %v5011 = vld [vmem:[#allocation10 + $0x148] sm:$0xff]
    %v5012 = vld [vmem:[#allocation10 + $0x150] sm:$0xff]
    %v5013 = vld [vmem:[#allocation10 + $0x158] sm:$0xff]
    %v5014 = vld [vmem:[#allocation10 + $0x160] sm:$0xff]
    %v5015 = vld [vmem:[#allocation10 + $0x168] sm:$0xff]
    %v5016 = vld [vmem:[#allocation10 + $0x170] sm:$0xff]
    %v5017 = vld [vmem:[#allocation10 + $0x178] sm:$0xff]
    %v5018 = vld [vmem:[#allocation10 + $0x180] sm:$0xff]
    %v5019 = vld [vmem:[#allocation10 + $0x188] sm:$0xff]
    %v5020 = vld [vmem:[#allocation10 + $0x190] sm:$0xff]
    %v5021 = vld [vmem:[#allocation10 + $0x198] sm:$0xff]
    %v5022 = vld [vmem:[#allocation10 + $0x1a0] sm:$0xff]
    %v5023 = vld [vmem:[#allocation10 + $0x1a8] sm:$0xff]
    %v5024 = vld [vmem:[#allocation10 + $0x1b0] sm:$0xff]
    %v5025 = vld [vmem:[#allocation10 + $0x1b8] sm:$0xff]
    %v5026 = vld [vmem:[#allocation10 + $0x1c0] sm:$0xff]
    %v5027 = vld [vmem:[#allocation10 + $0x1c8] sm:$0xff]
    %v5028 = vld [vmem:[#allocation10 + $0x1d0] sm:$0xff]
    %v5029 = vld [vmem:[#allocation10 + $0x1d8] sm:$0xff]
    %v5030 = vld [vmem:[#allocation10 + $0x1e0] sm:$0xff]
    %v5031 = vld [vmem:[#allocation10 + $0x1e8] sm:$0xff]
    %v5032 = vld [vmem:[#allocation10 + $0x1f0] sm:$0xff]
    %v5033 = vld [vmem:[#allocation10 + $0x1f8] sm:$0xff]
    %v5034 = vld [vmem:[#allocation10 + $0x200] sm:$0xff]
    %v5035 = vld [vmem:[#allocation10 + $0x208] sm:$0xff]
    %v5036 = vld [vmem:[#allocation10 + $0x210] sm:$0xff]
    %v5037 = vld [vmem:[#allocation10 + $0x218] sm:$0xff]
    %v5038 = vld [vmem:[#allocation10 + $0x220] sm:$0xff]
    %v5039 = vld [vmem:[#allocation10 + $0x228] sm:$0xff]
    %v5040 = vld [vmem:[#allocation10 + $0x230] sm:$0xff]
    %v5041 = vld [vmem:[#allocation10 + $0x238] sm:$0xff]
    %v5042 = vld [vmem:[#allocation10 + $0x240] sm:$0xff]
    %v5043 = vld [vmem:[#allocation10 + $0x248] sm:$0xff]
    %v5044 = vld [vmem:[#allocation10 + $0x250] sm:$0xff]
    %v5045 = vld [vmem:[#allocation10 + $0x258] sm:$0xff]
    %v5046 = vld [vmem:[#allocation10 + $0x260] sm:$0xff]
    %v5047 = vld [vmem:[#allocation10 + $0x268] sm:$0xff]
    %v5048 = vld [vmem:[#allocation10 + $0x270] sm:$0xff]
    %v5049 = vld [vmem:[#allocation10 + $0x278] sm:$0xff]
    %v5050 = vld [vmem:[#allocation10 + $0x280] sm:$0xff]
    %v5051 = vld [vmem:[#allocation10 + $0x288] sm:$0xff]
    %v5052 = vld [vmem:[#allocation10 + $0x290] sm:$0xff]
    %v5053 = vld [vmem:[#allocation10 + $0x298] sm:$0xff]
    %v5054 = vld [vmem:[#allocation10 + $0x2a0] sm:$0xff]
    %v5055 = vld [vmem:[#allocation10 + $0x2a8] sm:$0xff]
    %v5056 = vld [vmem:[#allocation10 + $0x2b0] sm:$0xff]
    %v5057 = vld [vmem:[#allocation10 + $0x2b8] sm:$0xff]
    %v5058 = vld [vmem:[#allocation10 + $0x2c0] sm:$0xff]
    %v5059 = vld [vmem:[#allocation10 + $0x2c8] sm:$0xff]
    %v5060 = vld [vmem:[#allocation10 + $0x2d0] sm:$0xff]
    %v5061 = vld [vmem:[#allocation10 + $0x2d8] sm:$0xff]
    %v5062 = vld [vmem:[#allocation10 + $0x2e0] sm:$0xff]
    %v5063 = vld [vmem:[#allocation10 + $0x2e8] sm:$0xff]
    %v5064 = vld [vmem:[#allocation10 + $0x2f0] sm:$0xff]
    %v5065 = vld [vmem:[#allocation10 + $0x2f8] sm:$0xff]
    %v5066 = vld [vmem:[#allocation10 + $0x300] sm:$0xff]
    %v5067 = vld [vmem:[#allocation10 + $0x308] sm:$0xff]
    %v5068 = vld [vmem:[#allocation10 + $0x310] sm:$0xff]
    %v5069 = vld [vmem:[#allocation10 + $0x318] sm:$0xff]
    %v5070 = vld [vmem:[#allocation10 + $0x320] sm:$0xff]
    %v5071 = vld [vmem:[#allocation10 + $0x328] sm:$0xff]
    %v5072 = vld [vmem:[#allocation10 + $0x330] sm:$0xff]
    %v5073 = vld [vmem:[#allocation10 + $0x338] sm:$0xff]
    %v5074 = vld [vmem:[#allocation10 + $0x340] sm:$0xff]
    %v5075 = vld [vmem:[#allocation10 + $0x348] sm:$0xff]
    %v5076 = vld [vmem:[#allocation10 + $0x350] sm:$0xff]
    %v5077 = vld [vmem:[#allocation10 + $0x358] sm:$0xff]
    %v5078 = vld [vmem:[#allocation10 + $0x360] sm:$0xff]
    %v5079 = vld [vmem:[#allocation10 + $0x368] sm:$0xff]
    %v5080 = vld [vmem:[#allocation10 + $0x370] sm:$0xff]
    %v5081 = vld [vmem:[#allocation10 + $0x378] sm:$0xff]
    %v5082 = vld [vmem:[#allocation10 + $0x380] sm:$0xff]
    %v5083 = vld [vmem:[#allocation10 + $0x388] sm:$0xff]
    %v5084 = vld [vmem:[#allocation10 + $0x390] sm:$0xff]
    %v5085 = vld [vmem:[#allocation10 + $0x398] sm:$0xff]
    %v5086 = vld [vmem:[#allocation10 + $0x3a0] sm:$0xff]
    %v5087 = vld [vmem:[#allocation10 + $0x3a8] sm:$0xff]
    %v5088 = vld [vmem:[#allocation10 + $0x3b0] sm:$0xff]
    %v5089 = vld [vmem:[#allocation10 + $0x3b8] sm:$0xff]
    %v5090 = vld [vmem:[#allocation10 + $0x3c0] sm:$0xff]
    %v5091 = vld [vmem:[#allocation10 + $0x3c8] sm:$0xff]
    %v5092 = vld [vmem:[#allocation10 + $0x3d0] sm:$0xff]
    %v5093 = vld [vmem:[#allocation10 + $0x3d8] sm:$0xff]
    %v5094 = vld [vmem:[#allocation10 + $0x3e0] sm:$0xff]
    %v5095 = vld [vmem:[#allocation10 + $0x3e8] sm:$0xff]
    %v5096 = vld [vmem:[#allocation10 + $0x3f0] sm:$0xff]
    %v5097 = vld [vmem:[#allocation10 + $0x3f8] sm:$0xff]
    %v5099 = vlaneseq
    %v5100 = vshrl.u32 %v5099, 7
    %v5101 = vsub.s32 0, %v5100
    %v5102 = vrot.slane %v4969, %v5101
    %v5103 = vlaneseq
    %v5104 = vshrl.u32 %v5103, 7
    %v5105 = vsub.s32 1, %v5104
    %v5106 = vrot.slane %v4969, %v5105
    %v5237 = vunpack.c.l.b16 %v4970
    %v5238 = vunpack.c.h.b16 %v4970
    %v5239 = vunpack.c.l.b16 %v4971
    %v5240 = vunpack.c.h.b16 %v4971
    %v5241 = vunpack.c.l.b16 %v4972
    %v5242 = vunpack.c.h.b16 %v4972
    %v5243 = vunpack.c.l.b16 %v4973
    %v5244 = vunpack.c.h.b16 %v4973
    %v5245 = vunpack.c.l.b16 %v4974
    %v5246 = vunpack.c.h.b16 %v4974
    %v5247 = vunpack.c.l.b16 %v4975
    %v5248 = vunpack.c.h.b16 %v4975
    %v5249 = vunpack.c.l.b16 %v4976
    %v5250 = vunpack.c.h.b16 %v4976
    %v5251 = vunpack.c.l.b16 %v4977
    %v5252 = vunpack.c.h.b16 %v4977
    %v5253 = vunpack.c.l.b16 %v4978
    %v5254 = vunpack.c.h.b16 %v4978
    %v5255 = vunpack.c.l.b16 %v4979
    %v5256 = vunpack.c.h.b16 %v4979
    %v5257 = vunpack.c.l.b16 %v4980
    %v5258 = vunpack.c.h.b16 %v4980
    %v5259 = vunpack.c.l.b16 %v4981
    %v5260 = vunpack.c.h.b16 %v4981
    %v5261 = vunpack.c.l.b16 %v4982
    %v5262 = vunpack.c.h.b16 %v4982
    %v5263 = vunpack.c.l.b16 %v4983
    %v5264 = vunpack.c.h.b16 %v4983
    %v5265 = vunpack.c.l.b16 %v4984
    %v5266 = vunpack.c.h.b16 %v4984
    %v5267 = vunpack.c.l.b16 %v4985
    %v5268 = vunpack.c.h.b16 %v4985
    %v5269 = vunpack.c.l.b16 %v4986
    %v5270 = vunpack.c.h.b16 %v4986
    %v5271 = vunpack.c.l.b16 %v4987
    %v5272 = vunpack.c.h.b16 %v4987
    %v5273 = vunpack.c.l.b16 %v4988
    %v5274 = vunpack.c.h.b16 %v4988
    %v5275 = vunpack.c.l.b16 %v4989
    %v5276 = vunpack.c.h.b16 %v4989
    %v5277 = vunpack.c.l.b16 %v4990
    %v5278 = vunpack.c.h.b16 %v4990
    %v5279 = vunpack.c.l.b16 %v4991
    %v5280 = vunpack.c.h.b16 %v4991
    %v5281 = vunpack.c.l.b16 %v4992
    %v5282 = vunpack.c.h.b16 %v4992
    %v5283 = vunpack.c.l.b16 %v4993
    %v5284 = vunpack.c.h.b16 %v4993
    %v5285 = vunpack.c.l.b16 %v4994
    %v5286 = vunpack.c.h.b16 %v4994
    %v5287 = vunpack.c.l.b16 %v4995
    %v5288 = vunpack.c.h.b16 %v4995
    %v5289 = vunpack.c.l.b16 %v4996
    %v5290 = vunpack.c.h.b16 %v4996
    %v5291 = vunpack.c.l.b16 %v4997
    %v5292 = vunpack.c.h.b16 %v4997
    %v5293 = vunpack.c.l.b16 %v4998
    %v5294 = vunpack.c.h.b16 %v4998
    %v5295 = vunpack.c.l.b16 %v4999
    %v5296 = vunpack.c.h.b16 %v4999
    %v5297 = vunpack.c.l.b16 %v5000
    %v5298 = vunpack.c.h.b16 %v5000
    %v5299 = vunpack.c.l.b16 %v5001
    %v5300 = vunpack.c.h.b16 %v5001
    %v5301 = vunpack.c.l.b16 %v5002
    %v5302 = vunpack.c.h.b16 %v5002
    %v5303 = vunpack.c.l.b16 %v5003
    %v5304 = vunpack.c.h.b16 %v5003
    %v5305 = vunpack.c.l.b16 %v5004
    %v5306 = vunpack.c.h.b16 %v5004
    %v5307 = vunpack.c.l.b16 %v5005
    %v5308 = vunpack.c.h.b16 %v5005
    %v5309 = vunpack.c.l.b16 %v5006
    %v5310 = vunpack.c.h.b16 %v5006
    %v5311 = vunpack.c.l.b16 %v5007
    %v5312 = vunpack.c.h.b16 %v5007
    %v5313 = vunpack.c.l.b16 %v5008
    %v5314 = vunpack.c.h.b16 %v5008
    %v5315 = vunpack.c.l.b16 %v5009
    %v5316 = vunpack.c.h.b16 %v5009
    %v5317 = vunpack.c.l.b16 %v5010
    %v5318 = vunpack.c.h.b16 %v5010
    %v5319 = vunpack.c.l.b16 %v5011
    %v5320 = vunpack.c.h.b16 %v5011
    %v5321 = vunpack.c.l.b16 %v5012
    %v5322 = vunpack.c.h.b16 %v5012
    %v5323 = vunpack.c.l.b16 %v5013
    %v5324 = vunpack.c.h.b16 %v5013
    %v5325 = vunpack.c.l.b16 %v5014
    %v5326 = vunpack.c.h.b16 %v5014
    %v5327 = vunpack.c.l.b16 %v5015
    %v5328 = vunpack.c.h.b16 %v5015
    %v5329 = vunpack.c.l.b16 %v5016
    %v5330 = vunpack.c.h.b16 %v5016
    %v5331 = vunpack.c.l.b16 %v5017
    %v5332 = vunpack.c.h.b16 %v5017
    %v5333 = vunpack.c.l.b16 %v5018
    %v5334 = vunpack.c.h.b16 %v5018
    %v5335 = vunpack.c.l.b16 %v5019
    %v5336 = vunpack.c.h.b16 %v5019
    %v5337 = vunpack.c.l.b16 %v5020
    %v5338 = vunpack.c.h.b16 %v5020
    %v5339 = vunpack.c.l.b16 %v5021
    %v5340 = vunpack.c.h.b16 %v5021
    %v5341 = vunpack.c.l.b16 %v5022
    %v5342 = vunpack.c.h.b16 %v5022
    %v5343 = vunpack.c.l.b16 %v5023
    %v5344 = vunpack.c.h.b16 %v5023
    %v5345 = vunpack.c.l.b16 %v5024
    %v5346 = vunpack.c.h.b16 %v5024
    %v5347 = vunpack.c.l.b16 %v5025
    %v5348 = vunpack.c.h.b16 %v5025
    %v5349 = vunpack.c.l.b16 %v5026
    %v5350 = vunpack.c.h.b16 %v5026
    %v5351 = vunpack.c.l.b16 %v5027
    %v5352 = vunpack.c.h.b16 %v5027
    %v5353 = vunpack.c.l.b16 %v5028
    %v5354 = vunpack.c.h.b16 %v5028
    %v5355 = vunpack.c.l.b16 %v5029
    %v5356 = vunpack.c.h.b16 %v5029
    %v5357 = vunpack.c.l.b16 %v5030
    %v5358 = vunpack.c.h.b16 %v5030
    %v5359 = vunpack.c.l.b16 %v5031
    %v5360 = vunpack.c.h.b16 %v5031
    %v5361 = vunpack.c.l.b16 %v5032
    %v5362 = vunpack.c.h.b16 %v5032
    %v5363 = vunpack.c.l.b16 %v5033
    %v5364 = vunpack.c.h.b16 %v5033
    %v5365 = vunpack.c.l.b16 %v5034
    %v5366 = vunpack.c.h.b16 %v5034
    %v5367 = vunpack.c.l.b16 %v5035
    %v5368 = vunpack.c.h.b16 %v5035
    %v5369 = vunpack.c.l.b16 %v5036
    %v5370 = vunpack.c.h.b16 %v5036
    %v5371 = vunpack.c.l.b16 %v5037
    %v5372 = vunpack.c.h.b16 %v5037
    %v5373 = vunpack.c.l.b16 %v5038
    %v5374 = vunpack.c.h.b16 %v5038
    %v5375 = vunpack.c.l.b16 %v5039
    %v5376 = vunpack.c.h.b16 %v5039
    %v5377 = vunpack.c.l.b16 %v5040
    %v5378 = vunpack.c.h.b16 %v5040
    %v5379 = vunpack.c.l.b16 %v5041
    %v5380 = vunpack.c.h.b16 %v5041
    %v5381 = vunpack.c.l.b16 %v5042
    %v5382 = vunpack.c.h.b16 %v5042
    %v5383 = vunpack.c.l.b16 %v5043
    %v5384 = vunpack.c.h.b16 %v5043
    %v5385 = vunpack.c.l.b16 %v5044
    %v5386 = vunpack.c.h.b16 %v5044
    %v5387 = vunpack.c.l.b16 %v5045
    %v5388 = vunpack.c.h.b16 %v5045
    %v5389 = vunpack.c.l.b16 %v5046
    %v5390 = vunpack.c.h.b16 %v5046
    %v5391 = vunpack.c.l.b16 %v5047
    %v5392 = vunpack.c.h.b16 %v5047
    %v5393 = vunpack.c.l.b16 %v5048
    %v5394 = vunpack.c.h.b16 %v5048
    %v5395 = vunpack.c.l.b16 %v5049
    %v5396 = vunpack.c.h.b16 %v5049
    %v5397 = vunpack.c.l.b16 %v5050
    %v5398 = vunpack.c.h.b16 %v5050
    %v5399 = vunpack.c.l.b16 %v5051
    %v5400 = vunpack.c.h.b16 %v5051
    %v5401 = vunpack.c.l.b16 %v5052
    %v5402 = vunpack.c.h.b16 %v5052
    %v5403 = vunpack.c.l.b16 %v5053
    %v5404 = vunpack.c.h.b16 %v5053
    %v5405 = vunpack.c.l.b16 %v5054
    %v5406 = vunpack.c.h.b16 %v5054
    %v5407 = vunpack.c.l.b16 %v5055
    %v5408 = vunpack.c.h.b16 %v5055
    %v5409 = vunpack.c.l.b16 %v5056
    %v5410 = vunpack.c.h.b16 %v5056
    %v5411 = vunpack.c.l.b16 %v5057
    %v5412 = vunpack.c.h.b16 %v5057
    %v5413 = vunpack.c.l.b16 %v5058
    %v5414 = vunpack.c.h.b16 %v5058
    %v5415 = vunpack.c.l.b16 %v5059
    %v5416 = vunpack.c.h.b16 %v5059
    %v5417 = vunpack.c.l.b16 %v5060
    %v5418 = vunpack.c.h.b16 %v5060
    %v5419 = vunpack.c.l.b16 %v5061
    %v5420 = vunpack.c.h.b16 %v5061
    %v5421 = vunpack.c.l.b16 %v5062
    %v5422 = vunpack.c.h.b16 %v5062
    %v5423 = vunpack.c.l.b16 %v5063
    %v5424 = vunpack.c.h.b16 %v5063
    %v5425 = vunpack.c.l.b16 %v5064
    %v5426 = vunpack.c.h.b16 %v5064
    %v5427 = vunpack.c.l.b16 %v5065
    %v5428 = vunpack.c.h.b16 %v5065
    %v5429 = vunpack.c.l.b16 %v5066
    %v5430 = vunpack.c.h.b16 %v5066
    %v5431 = vunpack.c.l.b16 %v5067
    %v5432 = vunpack.c.h.b16 %v5067
    %v5433 = vunpack.c.l.b16 %v5068
    %v5434 = vunpack.c.h.b16 %v5068
    %v5435 = vunpack.c.l.b16 %v5069
    %v5436 = vunpack.c.h.b16 %v5069
    %v5437 = vunpack.c.l.b16 %v5070
    %v5438 = vunpack.c.h.b16 %v5070
    %v5439 = vunpack.c.l.b16 %v5071
    %v5440 = vunpack.c.h.b16 %v5071
    %v5441 = vunpack.c.l.b16 %v5072
    %v5442 = vunpack.c.h.b16 %v5072
    %v5443 = vunpack.c.l.b16 %v5073
    %v5444 = vunpack.c.h.b16 %v5073
    %v5445 = vunpack.c.l.b16 %v5074
    %v5446 = vunpack.c.h.b16 %v5074
    %v5447 = vunpack.c.l.b16 %v5075
    %v5448 = vunpack.c.h.b16 %v5075
    %v5449 = vunpack.c.l.b16 %v5076
    %v5450 = vunpack.c.h.b16 %v5076
    %v5451 = vunpack.c.l.b16 %v5077
    %v5452 = vunpack.c.h.b16 %v5077
    %v5453 = vunpack.c.l.b16 %v5078
    %v5454 = vunpack.c.h.b16 %v5078
    %v5455 = vunpack.c.l.b16 %v5079
    %v5456 = vunpack.c.h.b16 %v5079
    %v5457 = vunpack.c.l.b16 %v5080
    %v5458 = vunpack.c.h.b16 %v5080
    %v5459 = vunpack.c.l.b16 %v5081
    %v5460 = vunpack.c.h.b16 %v5081
    %v5461 = vunpack.c.l.b16 %v5082
    %v5462 = vunpack.c.h.b16 %v5082
    %v5463 = vunpack.c.l.b16 %v5083
    %v5464 = vunpack.c.h.b16 %v5083
    %v5465 = vunpack.c.l.b16 %v5084
    %v5466 = vunpack.c.h.b16 %v5084
    %v5467 = vunpack.c.l.b16 %v5085
    %v5468 = vunpack.c.h.b16 %v5085
    %v5469 = vunpack.c.l.b16 %v5086
    %v5470 = vunpack.c.h.b16 %v5086
    %v5471 = vunpack.c.l.b16 %v5087
    %v5472 = vunpack.c.h.b16 %v5087
    %v5473 = vunpack.c.l.b16 %v5088
    %v5474 = vunpack.c.h.b16 %v5088
    %v5475 = vunpack.c.l.b16 %v5089
    %v5476 = vunpack.c.h.b16 %v5089
    %v5477 = vunpack.c.l.b16 %v5090
    %v5478 = vunpack.c.h.b16 %v5090
    %v5479 = vunpack.c.l.b16 %v5091
    %v5480 = vunpack.c.h.b16 %v5091
    %v5481 = vunpack.c.l.b16 %v5092
    %v5482 = vunpack.c.h.b16 %v5092
    %v5483 = vunpack.c.l.b16 %v5093
    %v5484 = vunpack.c.h.b16 %v5093
    %v5485 = vunpack.c.l.b16 %v5094
    %v5486 = vunpack.c.h.b16 %v5094
    %v5487 = vunpack.c.l.b16 %v5095
    %v5488 = vunpack.c.h.b16 %v5095
    %v5489 = vunpack.c.l.b16 %v5096
    %v5490 = vunpack.c.h.b16 %v5096
    %v5491 = vunpack.c.l.b16 %v5097
    %v5492 = vunpack.c.h.b16 %v5097
    %v5493 = vpack.c.b16 %v5239, %v5237
    %v5494 = vpack.c.b16 %v5240, %v5238
    %v5495 = vpack.c.b16 %v5243, %v5241
    %v5496 = vpack.c.b16 %v5244, %v5242
    %v5497 = vpack.c.b16 %v5247, %v5245
    %v5498 = vpack.c.b16 %v5248, %v5246
    %v5499 = vpack.c.b16 %v5251, %v5249
    %v5500 = vpack.c.b16 %v5252, %v5250
    %v5501 = vpack.c.b16 %v5255, %v5253
    %v5502 = vpack.c.b16 %v5256, %v5254
    %v5503 = vpack.c.b16 %v5259, %v5257
    %v5504 = vpack.c.b16 %v5260, %v5258
    %v5505 = vpack.c.b16 %v5263, %v5261
    %v5506 = vpack.c.b16 %v5264, %v5262
    %v5507 = vpack.c.b16 %v5267, %v5265
    %v5508 = vpack.c.b16 %v5268, %v5266
    %v5509 = vpack.c.b16 %v5271, %v5269
    %v5510 = vpack.c.b16 %v5272, %v5270
    %v5511 = vpack.c.b16 %v5275, %v5273
    %v5512 = vpack.c.b16 %v5276, %v5274
    %v5513 = vpack.c.b16 %v5279, %v5277
    %v5514 = vpack.c.b16 %v5280, %v5278
    %v5515 = vpack.c.b16 %v5283, %v5281
    %v5516 = vpack.c.b16 %v5284, %v5282
    %v5517 = vpack.c.b16 %v5287, %v5285
    %v5518 = vpack.c.b16 %v5288, %v5286
    %v5519 = vpack.c.b16 %v5291, %v5289
    %v5520 = vpack.c.b16 %v5292, %v5290
    %v5521 = vpack.c.b16 %v5295, %v5293
    %v5522 = vpack.c.b16 %v5296, %v5294
    %v5523 = vpack.c.b16 %v5299, %v5297
    %v5524 = vpack.c.b16 %v5300, %v5298
    %v5525 = vpack.c.b16 %v5303, %v5301
    %v5526 = vpack.c.b16 %v5304, %v5302
    %v5527 = vpack.c.b16 %v5307, %v5305
    %v5528 = vpack.c.b16 %v5308, %v5306
    %v5529 = vpack.c.b16 %v5311, %v5309
    %v5530 = vpack.c.b16 %v5312, %v5310
    %v5531 = vpack.c.b16 %v5315, %v5313
    %v5532 = vpack.c.b16 %v5316, %v5314
    %v5533 = vpack.c.b16 %v5319, %v5317
    %v5534 = vpack.c.b16 %v5320, %v5318
    %v5535 = vpack.c.b16 %v5323, %v5321
    %v5536 = vpack.c.b16 %v5324, %v5322
    %v5537 = vpack.c.b16 %v5327, %v5325
    %v5538 = vpack.c.b16 %v5328, %v5326
    %v5539 = vpack.c.b16 %v5331, %v5329
    %v5540 = vpack.c.b16 %v5332, %v5330
    %v5541 = vpack.c.b16 %v5335, %v5333
    %v5542 = vpack.c.b16 %v5336, %v5334
    %v5543 = vpack.c.b16 %v5339, %v5337
    %v5544 = vpack.c.b16 %v5340, %v5338
    %v5545 = vpack.c.b16 %v5343, %v5341
    %v5546 = vpack.c.b16 %v5344, %v5342
    %v5547 = vpack.c.b16 %v5347, %v5345
    %v5548 = vpack.c.b16 %v5348, %v5346
    %v5549 = vpack.c.b16 %v5351, %v5349
    %v5550 = vpack.c.b16 %v5352, %v5350
    %v5551 = vpack.c.b16 %v5355, %v5353
    %v5552 = vpack.c.b16 %v5356, %v5354
    %v5553 = vpack.c.b16 %v5359, %v5357
    %v5554 = vpack.c.b16 %v5360, %v5358
    %v5555 = vpack.c.b16 %v5363, %v5361
    %v5556 = vpack.c.b16 %v5364, %v5362
    %v5557 = vpack.c.b16 %v5367, %v5365
    %v5558 = vpack.c.b16 %v5368, %v5366
    %v5559 = vpack.c.b16 %v5371, %v5369
    %v5560 = vpack.c.b16 %v5372, %v5370
    %v5561 = vpack.c.b16 %v5375, %v5373
    %v5562 = vpack.c.b16 %v5376, %v5374
    %v5563 = vpack.c.b16 %v5379, %v5377
    %v5564 = vpack.c.b16 %v5380, %v5378
    %v5565 = vpack.c.b16 %v5383, %v5381
    %v5566 = vpack.c.b16 %v5384, %v5382
    %v5567 = vpack.c.b16 %v5387, %v5385
    %v5568 = vpack.c.b16 %v5388, %v5386
    %v5569 = vpack.c.b16 %v5391, %v5389
    %v5570 = vpack.c.b16 %v5392, %v5390
    %v5571 = vpack.c.b16 %v5395, %v5393
    %v5572 = vpack.c.b16 %v5396, %v5394
    %v5573 = vpack.c.b16 %v5399, %v5397
    %v5574 = vpack.c.b16 %v5400, %v5398
    %v5575 = vpack.c.b16 %v5403, %v5401
    %v5576 = vpack.c.b16 %v5404, %v5402
    %v5577 = vpack.c.b16 %v5407, %v5405
    %v5578 = vpack.c.b16 %v5408, %v5406
    %v5579 = vpack.c.b16 %v5411, %v5409
    %v5580 = vpack.c.b16 %v5412, %v5410
    %v5581 = vpack.c.b16 %v5415, %v5413
    %v5582 = vpack.c.b16 %v5416, %v5414
    %v5583 = vpack.c.b16 %v5419, %v5417
    %v5584 = vpack.c.b16 %v5420, %v5418
    %v5585 = vpack.c.b16 %v5423, %v5421
    %v5586 = vpack.c.b16 %v5424, %v5422
    %v5587 = vpack.c.b16 %v5427, %v5425
    %v5588 = vpack.c.b16 %v5428, %v5426
    %v5589 = vpack.c.b16 %v5431, %v5429
    %v5590 = vpack.c.b16 %v5432, %v5430
    %v5591 = vpack.c.b16 %v5435, %v5433
    %v5592 = vpack.c.b16 %v5436, %v5434
    %v5593 = vpack.c.b16 %v5439, %v5437
    %v5594 = vpack.c.b16 %v5440, %v5438
    %v5595 = vpack.c.b16 %v5443, %v5441
    %v5596 = vpack.c.b16 %v5444, %v5442
    %v5597 = vpack.c.b16 %v5447, %v5445
    %v5598 = vpack.c.b16 %v5448, %v5446
    %v5599 = vpack.c.b16 %v5451, %v5449
    %v5600 = vpack.c.b16 %v5452, %v5450
    %v5601 = vpack.c.b16 %v5455, %v5453
    %v5602 = vpack.c.b16 %v5456, %v5454
    %v5603 = vpack.c.b16 %v5459, %v5457
    %v5604 = vpack.c.b16 %v5460, %v5458
    %v5605 = vpack.c.b16 %v5463, %v5461
    %v5606 = vpack.c.b16 %v5464, %v5462
    %v5607 = vpack.c.b16 %v5467, %v5465
    %v5608 = vpack.c.b16 %v5468, %v5466
    %v5609 = vpack.c.b16 %v5471, %v5469
    %v5610 = vpack.c.b16 %v5472, %v5470
    %v5611 = vpack.c.b16 %v5475, %v5473
    %v5612 = vpack.c.b16 %v5476, %v5474
    %v5613 = vpack.c.b16 %v5479, %v5477
    %v5614 = vpack.c.b16 %v5480, %v5478
    %v5615 = vpack.c.b16 %v5483, %v5481
    %v5616 = vpack.c.b16 %v5484, %v5482
    %v5617 = vpack.c.b16 %v5487, %v5485
    %v5618 = vpack.c.b16 %v5488, %v5486
    %v5619 = vpack.c.b16 %v5491, %v5489
    %v5620 = vpack.c.b16 %v5492, %v5490
    %5749 = vmatprep.subr.bf16.mxu0 %v5494
    %5750 = vmatpush1.bf16.msra.mxu0 %v5493
    %5751 = vmatprep.subr.bf16.mxu0 %v5496
    %5752 = vmatpush1.bf16.msra.mxu0 %v5495
    %5753 = vmatprep.subr.bf16.mxu0 %v5498
    %5754 = vmatpush1.bf16.msra.mxu0 %v5497
    %5755 = vmatprep.subr.bf16.mxu0 %v5500
    %5756 = vmatpush1.bf16.msra.mxu0 %v5499
    %5757 = vmatprep.subr.bf16.mxu0 %v5502
    %5758 = vmatpush1.bf16.msra.mxu0 %v5501
    %5759 = vmatprep.subr.bf16.mxu0 %v5504
    %5760 = vmatpush1.bf16.msra.mxu0 %v5503
    %5761 = vmatprep.subr.bf16.mxu0 %v5506
    %5762 = vmatpush1.bf16.msra.mxu0 %v5505
    %5763 = vmatprep.subr.bf16.mxu0 %v5508
    %5764 = vmatpush1.bf16.msra.mxu0 %v5507
    %5765 = vmatprep.subr.bf16.mxu0 %v5510
    %5766 = vmatpush1.bf16.msra.mxu0 %v5509
    %5767 = vmatprep.subr.bf16.mxu0 %v5512
    %5768 = vmatpush1.bf16.msra.mxu0 %v5511
    %5769 = vmatprep.subr.bf16.mxu0 %v5514
    %5770 = vmatpush1.bf16.msra.mxu0 %v5513
    %5771 = vmatprep.subr.bf16.mxu0 %v5516
    %5772 = vmatpush1.bf16.msra.mxu0 %v5515
    %5773 = vmatprep.subr.bf16.mxu0 %v5518
    %5774 = vmatpush1.bf16.msra.mxu0 %v5517
    %5775 = vmatprep.subr.bf16.mxu0 %v5520
    %5776 = vmatpush1.bf16.msra.mxu0 %v5519
    %5777 = vmatprep.subr.bf16.mxu0 %v5522
    %5778 = vmatpush1.bf16.msra.mxu0 %v5521
    %5779 = vmatprep.subr.bf16.mxu0 %v5524
    %5780 = vmatpush1.bf16.msra.mxu0 %v5523
    %5781 = vmatprep.mubr.bf16.mxu0 %v4962
    %5782 = vmatmul.mubr.bf16.gmra.mrb[0].mxu0 %v4961
    %v5783 = vpop.f32.mrb[0].mxu0
    %v5784 = vadd.f32 %v5102, %v5783
    %v5785 = vpop.f32.mrb[0].mxu0
    %v5786 = vadd.f32 %v5106, %v5785
    %v5787 = vpop.f32.mrb[0].mxu0
    %v5788 = vpop.f32.mrb[0].mxu0
    %5789 = vdwg.mxu0
    %5790 = vmatprep.subr.bf16.mxu0 %v5526
    %5791 = vmatpush1.bf16.msra.mxu0 %v5525
    %5792 = vmatprep.subr.bf16.mxu0 %v5528
    %5793 = vmatpush1.bf16.msra.mxu0 %v5527
    %5794 = vmatprep.subr.bf16.mxu0 %v5530
    %5795 = vmatpush1.bf16.msra.mxu0 %v5529
    %5796 = vmatprep.subr.bf16.mxu0 %v5532
    %5797 = vmatpush1.bf16.msra.mxu0 %v5531
    %5798 = vmatprep.subr.bf16.mxu0 %v5534
    %5799 = vmatpush1.bf16.msra.mxu0 %v5533
    %5800 = vmatprep.subr.bf16.mxu0 %v5536
    %5801 = vmatpush1.bf16.msra.mxu0 %v5535
    %5802 = vmatprep.subr.bf16.mxu0 %v5538
    %5803 = vmatpush1.bf16.msra.mxu0 %v5537
    %5804 = vmatprep.subr.bf16.mxu0 %v5540
    %5805 = vmatpush1.bf16.msra.mxu0 %v5539
    %5806 = vmatprep.subr.bf16.mxu0 %v5542
    %5807 = vmatpush1.bf16.msra.mxu0 %v5541
    %5808 = vmatprep.subr.bf16.mxu0 %v5544
    %5809 = vmatpush1.bf16.msra.mxu0 %v5543
    %5810 = vmatprep.subr.bf16.mxu0 %v5546
    %5811 = vmatpush1.bf16.msra.mxu0 %v5545
    %5812 = vmatprep.subr.bf16.mxu0 %v5548
    %5813 = vmatpush1.bf16.msra.mxu0 %v5547
    %5814 = vmatprep.subr.bf16.mxu0 %v5550
    %5815 = vmatpush1.bf16.msra.mxu0 %v5549
    %5816 = vmatprep.subr.bf16.mxu0 %v5552
    %5817 = vmatpush1.bf16.msra.mxu0 %v5551
    %5818 = vmatprep.subr.bf16.mxu0 %v5554
    %5819 = vmatpush1.bf16.msra.mxu0 %v5553
    %5820 = vmatprep.subr.bf16.mxu0 %v5556
    %5821 = vmatpush1.bf16.msra.mxu0 %v5555
    %5822 = vmatprep.mubr.bf16.mxu0 %v4964
    %5823 = vmatmul.mubr.bf16.gmra.mrb[0].mxu0 %v4963
    %v5824 = vpop.f32.mrb[0].mxu0
    %v5825 = vadd.f32 %v5784, %v5824
    %v5826 = vpop.f32.mrb[0].mxu0
    %v5827 = vadd.f32 %v5786, %v5826
    %v5828 = vpop.f32.mrb[0].mxu0
    %v5829 = vpop.f32.mrb[0].mxu0
    %5830 = vdwg.mxu0
    %5831 = vmatprep.subr.bf16.mxu0 %v5558
    %5832 = vmatpush1.bf16.msra.mxu0 %v5557
    %5833 = vmatprep.subr.bf16.mxu0 %v5560
    %5834 = vmatpush1.bf16.msra.mxu0 %v5559
    %5835 = vmatprep.subr.bf16.mxu0 %v5562
    %5836 = vmatpush1.bf16.msra.mxu0 %v5561
    %5837 = vmatprep.subr.bf16.mxu0 %v5564
    %5838 = vmatpush1.bf16.msra.mxu0 %v5563
    %5839 = vmatprep.subr.bf16.mxu0 %v5566
    %5840 = vmatpush1.bf16.msra.mxu0 %v5565
    %5841 = vmatprep.subr.bf16.mxu0 %v5568
    %5842 = vmatpush1.bf16.msra.mxu0 %v5567
    %5843 = vmatprep.subr.bf16.mxu0 %v5570
    %5844 = vmatpush1.bf16.msra.mxu0 %v5569
    %5845 = vmatprep.subr.bf16.mxu0 %v5572
    %5846 = vmatpush1.bf16.msra.mxu0 %v5571
    %5847 = vmatprep.subr.bf16.mxu0 %v5574
    %5848 = vmatpush1.bf16.msra.mxu0 %v5573
    %5849 = vmatprep.subr.bf16.mxu0 %v5576
    %5850 = vmatpush1.bf16.msra.mxu0 %v5575
    %5851 = vmatprep.subr.bf16.mxu0 %v5578
    %5852 = vmatpush1.bf16.msra.mxu0 %v5577
    %5853 = vmatprep.subr.bf16.mxu0 %v5580
    %5854 = vmatpush1.bf16.msra.mxu0 %v5579
    %5855 = vmatprep.subr.bf16.mxu0 %v5582
    %5856 = vmatpush1.bf16.msra.mxu0 %v5581
    %5857 = vmatprep.subr.bf16.mxu0 %v5584
    %5858 = vmatpush1.bf16.msra.mxu0 %v5583
    %5859 = vmatprep.subr.bf16.mxu0 %v5586
    %5860 = vmatpush1.bf16.msra.mxu0 %v5585
    %5861 = vmatprep.subr.bf16.mxu0 %v5588
    %5862 = vmatpush1.bf16.msra.mxu0 %v5587
    %5863 = vmatprep.mubr.bf16.mxu0 %v4966
    %5864 = vmatmul.mubr.bf16.gmra.mrb[0].mxu0 %v4965
    %v5865 = vpop.f32.mrb[0].mxu0
    %v5866 = vadd.f32 %v5825, %v5865
    %v5867 = vpop.f32.mrb[0].mxu0
    %v5868 = vadd.f32 %v5827, %v5867
    %v5869 = vpop.f32.mrb[0].mxu0
    %v5870 = vpop.f32.mrb[0].mxu0
    %5871 = vdwg.mxu0
    %5872 = vmatprep.subr.bf16.mxu0 %v5590
    %5873 = vmatpush1.bf16.msra.mxu0 %v5589
    %5874 = vmatprep.subr.bf16.mxu0 %v5592
    %5875 = vmatpush1.bf16.msra.mxu0 %v5591
    %5876 = vmatprep.subr.bf16.mxu0 %v5594
    %5877 = vmatpush1.bf16.msra.mxu0 %v5593
    %5878 = vmatprep.subr.bf16.mxu0 %v5596
    %5879 = vmatpush1.bf16.msra.mxu0 %v5595
    %5880 = vmatprep.subr.bf16.mxu0 %v5598
    %5881 = vmatpush1.bf16.msra.mxu0 %v5597
    %5882 = vmatprep.subr.bf16.mxu0 %v5600
    %5883 = vmatpush1.bf16.msra.mxu0 %v5599
    %5884 = vmatprep.subr.bf16.mxu0 %v5602
    %5885 = vmatpush1.bf16.msra.mxu0 %v5601
    %5886 = vmatprep.subr.bf16.mxu0 %v5604
    %5887 = vmatpush1.bf16.msra.mxu0 %v5603
    %5888 = vmatprep.subr.bf16.mxu0 %v5606
    %5889 = vmatpush1.bf16.msra.mxu0 %v5605
    %5890 = vmatprep.subr.bf16.mxu0 %v5608
    %5891 = vmatpush1.bf16.msra.mxu0 %v5607
    %5892 = vmatprep.subr.bf16.mxu0 %v5610
    %5893 = vmatpush1.bf16.msra.mxu0 %v5609
    %5894 = vmatprep.subr.bf16.mxu0 %v5612
    %5895 = vmatpush1.bf16.msra.mxu0 %v5611
    %5896 = vmatprep.subr.bf16.mxu0 %v5614
    %5897 = vmatpush1.bf16.msra.mxu0 %v5613
    %5898 = vmatprep.subr.bf16.mxu0 %v5616
    %5899 = vmatpush1.bf16.msra.mxu0 %v5615
    %5900 = vmatprep.subr.bf16.mxu0 %v5618
    %5901 = vmatpush1.bf16.msra.mxu0 %v5617
    %5902 = vmatprep.subr.bf16.mxu0 %v5620
    %5903 = vmatpush1.bf16.msra.mxu0 %v5619
    %5904 = vmatprep.mubr.bf16.mxu0 %v4968
    %5905 = vmatmul.mubr.bf16.gmra.mrb[0].mxu0 %v4967
    %v5906 = vpop.f32.mrb[0].mxu0
    %v5907 = vadd.f32 %v5866, %v5906
    %v5908 = vpop.f32.mrb[0].mxu0
    %v5909 = vadd.f32 %v5868, %v5908
    %v5910 = vpop.f32.mrb[0].mxu0
    %v5911 = vpop.f32.mrb[0].mxu0
    %5912 = vdwg.mxu0
    %v5913 = vmax.f32 %v5907, 0.0
    %v5914 = vmax.f32 %v5909, 0.0
    %v5915 = vpack.c.bf16 %v5913, %v5913
    %v5916 = vpack.c.bf16 %v5914, %v5914
    %v5917 = vld [vmem:[#allocation11 + $0x14] sm:$0x1]
    %v5918 = vld [vmem:[%s5] sm:$0xf]
    %v5919 = vld [vmem:[%s5 + $0x4] sm:$0xf]
    %v5920 = vld [vmem:[%s5 + $0x8] sm:$0xf]
    %v5921 = vld [vmem:[%s5 + $0xc] sm:$0xf]
    %v5922 = vld [vmem:[%s5 + $0x10] sm:$0xf]
    %v5923 = vld [vmem:[%s5 + $0x14] sm:$0xf]
    %v5924 = vld [vmem:[%s5 + $0x18] sm:$0xf]
    %v5925 = vld [vmem:[%s5 + $0x1c] sm:$0xf]
    %v5926 = vld [vmem:[%s5 + $0x20] sm:$0xf]
    %v5927 = vld [vmem:[%s5 + $0x24] sm:$0xf]
    %v5928 = vld [vmem:[%s5 + $0x28] sm:$0xf]
    %v5929 = vld [vmem:[%s5 + $0x2c] sm:$0xf]
    %v5930 = vld [vmem:[%s5 + $0x30] sm:$0xf]
    %v5931 = vld [vmem:[%s5 + $0x34] sm:$0xf]
    %v5932 = vld [vmem:[%s5 + $0x38] sm:$0xf]
    %v5933 = vld [vmem:[%s5 + $0x3c] sm:$0xf]
    %v5934 = vld [vmem:[%s5 + $0x40] sm:$0xf]
    %v5935 = vld [vmem:[%s5 + $0x44] sm:$0xf]
    %v5936 = vld [vmem:[%s5 + $0x48] sm:$0xf]
    %v5937 = vld [vmem:[%s5 + $0x4c] sm:$0xf]
    %v5938 = vld [vmem:[%s5 + $0x50] sm:$0xf]
    %v5939 = vld [vmem:[%s5 + $0x54] sm:$0xf]
    %v5940 = vld [vmem:[%s5 + $0x58] sm:$0xf]
    %v5941 = vld [vmem:[%s5 + $0x5c] sm:$0xf]
    %v5942 = vld [vmem:[%s5 + $0x60] sm:$0xf]
    %v5943 = vld [vmem:[%s5 + $0x64] sm:$0xf]
    %v5944 = vld [vmem:[%s5 + $0x68] sm:$0xf]
    %v5945 = vld [vmem:[%s5 + $0x6c] sm:$0xf]
    %v5946 = vld [vmem:[%s5 + $0x70] sm:$0xf]
    %v5947 = vld [vmem:[%s5 + $0x74] sm:$0xf]
    %v5948 = vld [vmem:[%s5 + $0x78] sm:$0xf]
    %v5949 = vld [vmem:[%s5 + $0x7c] sm:$0xf]
    %v5951 = vlaneseq
    %v5952 = vshrl.u32 %v5951, 7
    %v5953 = vsub.s32 0, %v5952
    %v5954 = vrot.slane %v5917, %v5953
    %v5988 = vunpack.c.l.b16 %v5918
    %v5989 = vunpack.c.l.b16 %v5919
    %v5990 = vunpack.c.l.b16 %v5920
    %v5991 = vunpack.c.l.b16 %v5921
    %v5992 = vunpack.c.l.b16 %v5922
    %v5993 = vunpack.c.l.b16 %v5923
    %v5994 = vunpack.c.l.b16 %v5924
    %v5995 = vunpack.c.l.b16 %v5925
    %v5996 = vunpack.c.l.b16 %v5926
    %v5997 = vunpack.c.l.b16 %v5927
    %v5998 = vunpack.c.l.b16 %v5928
    %v5999 = vunpack.c.l.b16 %v5929
    %v6000 = vunpack.c.l.b16 %v5930
    %v6001 = vunpack.c.l.b16 %v5931
    %v6002 = vunpack.c.l.b16 %v5932
    %v6003 = vunpack.c.l.b16 %v5933
    %v6004 = vunpack.c.l.b16 %v5934
    %v6005 = vunpack.c.l.b16 %v5935
    %v6006 = vunpack.c.l.b16 %v5936
    %v6007 = vunpack.c.l.b16 %v5937
    %v6008 = vunpack.c.l.b16 %v5938
    %v6009 = vunpack.c.l.b16 %v5939
    %v6010 = vunpack.c.l.b16 %v5940
    %v6011 = vunpack.c.l.b16 %v5941
    %v6012 = vunpack.c.l.b16 %v5942
    %v6013 = vunpack.c.l.b16 %v5943
    %v6014 = vunpack.c.l.b16 %v5944
    %v6015 = vunpack.c.l.b16 %v5945
    %v6016 = vunpack.c.l.b16 %v5946
    %v6017 = vunpack.c.l.b16 %v5947
    %v6018 = vunpack.c.l.b16 %v5948
    %v6019 = vunpack.c.l.b16 %v5949
    %v6020 = vpack.c.b16 %v5989, %v5988
    %v6021 = vpack.c.b16 %v5991, %v5990
    %v6022 = vpack.c.b16 %v5993, %v5992
    %v6023 = vpack.c.b16 %v5995, %v5994
    %v6024 = vpack.c.b16 %v5997, %v5996
    %v6025 = vpack.c.b16 %v5999, %v5998
    %v6026 = vpack.c.b16 %v6001, %v6000
    %v6027 = vpack.c.b16 %v6003, %v6002
    %v6028 = vpack.c.b16 %v6005, %v6004
    %v6029 = vpack.c.b16 %v6007, %v6006
    %v6030 = vpack.c.b16 %v6009, %v6008
    %v6031 = vpack.c.b16 %v6011, %v6010
    %v6032 = vpack.c.b16 %v6013, %v6012
    %v6033 = vpack.c.b16 %v6015, %v6014
    %v6034 = vpack.c.b16 %v6017, %v6016
    %v6035 = vpack.c.b16 %v6019, %v6018
    %6052 = vmatprep.subr.bf16.mxu0 0
    %6053 = vmatpush1.bf16.msra.mxu0 %v6020
    %6054 = vmatprep.subr.bf16.mxu0 0
    %6055 = vmatpush1.bf16.msra.mxu0 %v6021
    %6056 = vmatprep.subr.bf16.mxu0 0
    %6057 = vmatpush1.bf16.msra.mxu0 %v6022
    %6058 = vmatprep.subr.bf16.mxu0 0
    %6059 = vmatpush1.bf16.msra.mxu0 %v6023
    %6060 = vmatprep.subr.bf16.mxu0 0
    %6061 = vmatpush1.bf16.msra.mxu0 %v6024
    %6062 = vmatprep.subr.bf16.mxu0 0
    %6063 = vmatpush1.bf16.msra.mxu0 %v6025
    %6064 = vmatprep.subr.bf16.mxu0 0
    %6065 = vmatpush1.bf16.msra.mxu0 %v6026
    %6066 = vmatprep.subr.bf16.mxu0 0
    %6067 = vmatpush1.bf16.msra.mxu0 %v6027
    %6068 = vmatprep.subr.bf16.mxu0 0
    %6069 = vmatpush1.bf16.msra.mxu0 %v6028
    %6070 = vmatprep.subr.bf16.mxu0 0
    %6071 = vmatpush1.bf16.msra.mxu0 %v6029
    %6072 = vmatprep.subr.bf16.mxu0 0
    %6073 = vmatpush1.bf16.msra.mxu0 %v6030
    %6074 = vmatprep.subr.bf16.mxu0 0
    %6075 = vmatpush1.bf16.msra.mxu0 %v6031
    %6076 = vmatprep.subr.bf16.mxu0 0
    %6077 = vmatpush1.bf16.msra.mxu0 %v6032
    %6078 = vmatprep.subr.bf16.mxu0 0
    %6079 = vmatpush1.bf16.msra.mxu0 %v6033
    %6080 = vmatprep.subr.bf16.mxu0 0
    %6081 = vmatpush1.bf16.msra.mxu0 %v6034
    %6082 = vmatprep.subr.bf16.mxu0 0
    %6083 = vmatpush1.bf16.msra.mxu0 %v6035
    %6084 = vmatprep.mubr.bf16.mxu0 %v5916
    %6085 = vmatmul.mubr.bf16.gmra.mrb[0].mxu0 %v5915
    %v6086 = vpop.f32.mrb[0].mxu0
    %v6087 = vadd.f32 %v5954, %v6086
    %v6088 = vpop.f32.mrb[0].mxu0
    %v6089 = vpop.f32.mrb[0].mxu0
    %v6090 = vpop.f32.mrb[0].mxu0
    %6091 = vdwg.mxu0
    %vm6092 = vcmask 64512
    %v6093 = vsel %vm6092, %v6087, -inf
    %v6094 = vrot.slane %v6093, 4
    %v6095 = vmax.f32 %v6093, %v6094
    %v6096 = vrot.slane %v6095, 2
    %v6097 = vmax.f32 %v6095, %v6096
    %v6098 = vrot.slane %v6097, 1
    %v6099 = vmax.f32 %v6097, %v6098
    %v6100 = vsub.f32 %v6087, %v6099
    %v6101 = vmul.f32 %v6100, 1.442695
    %v6102 = vpow.pop %v6101
    %v6103 = vsel %vm6092, %v6102, 0.0
    %v6104 = vrot.slane %v6103, 4
    %v6105 = vadd.f32 %v6103, %v6104
    %v6106 = vrot.slane %v6105, 2
    %v6107 = vadd.f32 %v6105, %v6106
    %v6108 = vrot.slane %v6107, 1
    %v6109 = vadd.f32 %v6107, %v6108
    %v6110 = vrcp.pop %v6109
    %v6111 = vmul.f32 %v6102, %v6110
    %6112 = vst.msk [vmem:[#allocation13] sm:$0xff] %vm6092, %v6111
    // Predicated region
    $region54: #{tpu_custom_call.1} parent=1 // pred_check
      _
    $region55: #{tpu_custom_call.1} parent=1 // pred_check_branch
      %6114 = sbr.rel (0) target = $region57
    $region56: #{tpu_custom_call.1} parent=1 // pred_region
      %s6116 = ssub.s32 128, 128
      %6117 = vsyncadd [#allocation4], %s6116
      %s6119 = sshll.u32 [#allocation13], 4
      %s6120 = int_to_ptr.vmem [resolvable:$true] %s6119
      %6122 = dma.vmem_to_hbm [thread:$0]  %s6120, 128, %s7, [#allocation4]
    $region57: #{tpu_custom_call.1} parent=1 // pred_fallthru
      _
    // Predicated region
    $region58: #{tpu_custom_call.1} parent=1 // pred_check
      _
    $region59: #{tpu_custom_call.1} parent=1 // pred_check_branch
      %6124 = sbr.rel (0) target = $region61
    $region60: #{tpu_custom_call.1} parent=1 // pred_region
      %6125 = dma.done [#allocation4], 128
    $region61: #{tpu_custom_call.1} parent=1 // pred_fallthru
      _
    %6126 = vsyncpa [#allocation3], 1
    %6127 = vsyncpa [#allocation6], 1
    %6128 = vsyncpa [#allocation9], 1
    %6129 = vsyncpa [#allocation12], 1
    %6130 = vsyncpa [#allocation4], 1

</llo_original>
